<compile_context>
chip_gen: v6e
topology: v6e:2x2x1
jax: 0.10.0
libtpu: 0.0.40
codegen_flags: <defaults>
</compile_context>

<pallas_src>
import numpy as np
import jax
import jax.numpy as jnp
from jax import lax
from jax.experimental import pallas as pl
from jax.experimental.pallas import tpu as pltpu


# ----------------------------- tiny numpy constants -----------------------------

def _boundary_masks(h, w):
    """(9, 1, h*w) 0/1 validity masks for the 3x3 taps (dy, dx) under zero padding=1."""
    m = np.zeros((9, 1, h * w), np.float32)
    k = 0
    for dy in (-1, 0, 1):
        for dx in (-1, 0, 1):
            for y in range(h):
                for x in range(w):
                    if 0 <= y + dy < h and 0 <= x + dx < w:
                        m[k, 0, y * w + x] = 1.0
            k += 1
    return m


def _pool_matrix(h, w):
    """(h*w, 4*(h//2)*(w//2)) 0/1 gather: column block i=2r+s holds 2x2-window element
    (r, s) of every pooled pixel; MaxPool2d(2) = max over the 4 column blocks."""
    h2, w2 = h // 2, w // 2
    hw_lo = h2 * w2
    p = np.zeros((h * w, 4 * hw_lo), np.float32)
    for r in range(2):
        for s in range(2):
            i = 2 * r + s
            for y2 in range(h2):
                for x2 in range(w2):
                    p[(2 * y2 + r) * w + (2 * x2 + s), i * hw_lo + y2 * w2 + x2] = 1.0
    return p


def _up_scatter_matrix(h, w):
    """(4*h*w, (2h)*(2w)) 0/1 scatter for ConvTranspose2d(k=2, s=2): row block i=2r+s,
    row q=(y,x) hits hi-res pixel (2y+r, 2x+s) exactly once (non-overlapping stride=kernel)."""
    hw_lo = h * w
    ww = 2 * w
    u = np.zeros((4 * hw_lo, 4 * hw_lo), np.float32)
    for r in range(2):
        for s in range(2):
            i = 2 * r + s
            for y in range(h):
                for x in range(w):
                    u[i * hw_lo + y * w + x, (2 * y + r) * ww + (2 * x + s)] = 1.0
    return u


# ------------------------------ in-kernel building blocks ------------------------------

def _conv3x3_im2col(xpad, col, parts, mask_ref, w_ref, b_ref, H, W, pad0, relu=True):
    """3x3 conv (padding=1) + folded-BN bias (+ReLU) on a channels-first (C, H*W) layout.

    parts: list of (Ci, H*W) f32 values whose channel concat is the conv input (so the
    skip connection is consumed without ever materializing the concat).  The 9 shifted
    copies come from static unaligned lane-offset reads of the zero-padded VMEM buffer
    `xpad` (equivalent to the roll-based shifts: pure load/VPU work, no MXU), masked by
    the precomputed boundary masks, and consumed by ONE im2col dot -- no HWxHW matmuls.
    """
    HW = H * W
    cin = sum(int(p.shape[0]) for p in parts)
    xpad[0:cin, :] = jnp.zeros((cin, xpad.shape[1]), jnp.float32)
    r = 0
    for part in parts:
        c = int(part.shape[0])
        xpad[r:r + c, pl.ds(pad0, HW)] = part
        r += c
    k = 0
    for dy in (-1, 0, 1):
        for dx in (-1, 0, 1):
            shifted = xpad[0:cin, pl.ds(pad0 + dy * W + dx, HW)]          # (cin, HW)
            col[k * cin:(k + 1) * cin, 0:HW] = shifted * mask_ref[k]       # mask: (1, HW)
            k += 1
    acc = jnp.dot(w_ref[...], col[0:9 * cin, 0:HW],
                  preferred_element_type=jnp.float32) + b_ref[...]
    return jnp.maximum(acc, 0.0) if relu else acc


def _maxpool2x2(stage, x, pool_ref, hw_lo):
    """2x2/2 max-pool on (C, H*W): one gather dot then max over the 4 column blocks."""
    c = int(x.shape[0])
    stage[0:c, 0:4 * hw_lo] = jnp.dot(x, pool_ref[...], preferred_element_type=jnp.float32)
    m0 = jnp.maximum(stage[0:c, 0:hw_lo], stage[0:c, hw_lo:2 * hw_lo])
    m1 = jnp.maximum(stage[0:c, 2 * hw_lo:3 * hw_lo], stage[0:c, 3 * hw_lo:4 * hw_lo])
    return jnp.maximum(m0, m1)


def _conv_transpose2x2(stage, x, wts_ref, bt_ref, u_ref, cout, hw_lo):
    """ConvTranspose2d(k=2, s=2): stacked weight dot (4*Cout, Cin)@(Cin, hw_lo), repack the
    4 row blocks as column blocks of a (Cout, 4*hw_lo) stage, then one scatter dot."""
    y = jnp.dot(wts_ref[...], x, preferred_element_type=jnp.float32)      # (4*cout, hw_lo)
    for i in range(4):
        stage[0:cout, i * hw_lo:(i + 1) * hw_lo] = y[i * cout:(i + 1) * cout, :]
    return jnp.dot(stage[0:cout, 0:4 * hw_lo], u_ref[...],
                   preferred_element_type=jnp.float32) + bt_ref[...]


# ------------------------------ the fused UNet kernel ------------------------------

def _make_unet_kernel(n_scales, hs, ws, dch, pad0):
    def kernel(*refs):
        refs = list(refs)
        xpad, col, stage = refs[-3], refs[-2], refs[-1]                    # VMEM scratch
        o_ref = refs[-4]
        it = iter(refs[:-4])
        x_ref = next(it)
        masks = [next(it) for _ in range(n_scales + 1)]                    # full-res ... coarsest
        pools = [next(it) for _ in range(n_scales)]
        upmats = [next(it) for _ in range(n_scales)]
        w_inc, b_inc = next(it), next(it)
        down_p = [(next(it), next(it)) for _ in range(n_scales)]
        up_p = [(next(it), next(it), next(it), next(it)) for _ in range(n_scales)]
        wo, bo = next(it), next(it)

        x = x_ref[...].astype(jnp.float32)                                 # (cin_pad, H*W)
        skips = [_conv3x3_im2col(xpad, col, [x], masks[0], w_inc, b_inc,
                                 hs[0], ws[0], pad0)]
        for i in range(n_scales):                                          # ParametricDown
            w, b = down_p[i]
            pooled = _maxpool2x2(stage, skips[-1], pools[i], hs[i + 1] * ws[i + 1])
            skips.append(_conv3x3_im2col(xpad, col, [pooled], masks[i + 1], w, b,
                                         hs[i + 1], ws[i + 1], pad0))
        u = skips.pop()
        for i in range(n_scales):                                          # ParametricUp (bilinear=False)
            lvl = n_scales - 1 - i
            wts, bt, wm, bm = up_p[i]
            upsampled = _conv_transpose2x2(stage, u, wts, bt, upmats[i],
                                           cout=dch[lvl], hw_lo=hs[lvl + 1] * ws[lvl + 1])
            skip = skips.pop()
            # torch.cat([skip, upsampled], dim=1) is consumed without materializing the
            # concat: both halves are staged into the im2col buffer and hit by the
            # un-split merge-conv weight.
            # TODO(synk): CoordinateMappingProvider top/left skip-vs-upsample padding --
            # identically zero for power-of-two H, W with padding=1, so not emitted here.
            u = _conv3x3_im2col(xpad, col, [skip, upsampled], masks[lvl], wm, bm,
                                hs[lvl], ws[lvl], pad0)
        logits = jnp.dot(wo[...], u, preferred_element_type=jnp.float32) + bo[...]
        o_ref[...] = logits.astype(o_ref.dtype)                            # (ncls_pad, H*W)
    return kernel


# --------------------------------- parameters ---------------------------------

def init_unet_params(key, n_channels=3, n_classes=2, ifc=8, n_scales=2,
                     down_channels=(16, 32), up_channels=(16, 8)):
    dch = [ifc] + list(down_channels)                  # [8, 16, 32]
    uch = [dch[-1]] + list(up_channels)                # [32, 16, 8]
    eps = 1e-5                                         # BatchNorm2d default, eval mode
    keys = iter(jax.random.split(key, 64))

    def conv_bn(cin, cout):                            # Conv2d(k=3, pad=1, bias=False)+BN+ReLU
        k1, k2, k3, k4, k5 = jax.random.split(next(keys), 5)
        w = jax.random.normal(k1, (cout, cin, 3, 3), jnp.float32) / np.sqrt(9.0 * cin)
        gamma = 1.0 + 0.1 * jax.random.normal(k2, (cout,), jnp.float32)
        beta = 0.1 * jax.random.normal(k3, (cout,), jnp.float32)
        mean = 0.1 * jax.random.normal(k4, (cout,), jnp.float32)
        var = 1.0 + 0.5 * jax.random.uniform(k5, (cout,), jnp.float32)
        scale = gamma / jnp.sqrt(var + eps)
        return {"w": w, "scale": scale, "bias": beta - mean * scale}

    params = {"inc": conv_bn(n_channels, ifc), "down": [], "up": []}
    for i in range(n_scales):
        params["down"].append(conv_bn(dch[i], dch[i + 1]))
    for i in range(n_scales):
        hor = dch[n_scales - 1 - i]
        kt, kb = jax.random.split(next(keys))
        params["up"].append({
            # PyTorch ConvTranspose2d weight layout: (Cin, Cout, kH, kW), bias=True
            "wt": jax.random.normal(kt, (uch[i], hor, 2, 2), jnp.float32) / np.sqrt(4.0 * uch[i]),
            "bt": 0.1 * jax.random.normal(kb, (hor,), jnp.float32),
            "conv": conv_bn(2 * hor, uch[i + 1]),
        })
    ko1, ko2 = jax.random.split(next(keys))
    params["outc"] = {   # OutConv: Conv2d(k=1, bias=True), no BN / ReLU
        "w": jax.random.normal(ko1, (n_classes, uch[-1]), jnp.float32) / np.sqrt(float(uch[-1])),
        "b": 0.1 * jax.random.normal(ko2, (n_classes,), jnp.float32),
    }
    return params


def _fold_conv(p, cin_pad=None):
    """Fold the eval-mode BN scale into the conv weight, flatten to im2col layout (Cout, 9*Cin)."""
    w = p["w"] * p["scale"][:, None, None, None]
    cout, cin = w.shape[0], w.shape[1]
    if cin_pad is not None and cin_pad > cin:
        w = jnp.pad(w, ((0, 0), (0, cin_pad - cin), (0, 0), (0, 0)))
        cin = cin_pad
    w_flat = jnp.transpose(w, (0, 2, 3, 1)).reshape(cout, 9 * cin)        # col = k*cin + ci
    return [w_flat, p["bias"].reshape(cout, 1)]


def _stack_convt(wt):
    """PyTorch ConvTranspose2d weight (Cin, Cout, 2, 2) -> (4*Cout, Cin), row block i=2r+s."""
    cin, cout = wt.shape[0], wt.shape[1]
    return jnp.transpose(wt, (2, 3, 1, 0)).reshape(4 * cout, cin)


# ----------------------------------- forward -----------------------------------

def parametric_unet_forward(params, x_nchw):
    n, cin, h, w = x_nchw.shape
    n_scales = len(params["down"])
    ifc = params["inc"]["w"].shape[0]
    dch = [ifc] + [d["w"].shape[0] for d in params["down"]]
    n_classes = params["outc"]["w"].shape[0]

    def _rup(v, m):
        return -(-v // m) * m

    cin_pad = _rup(max(cin, 8), 8)               # 8-sublane-aligned HBM-facing input block
    ncls_pad = _rup(max(n_classes, 8), 8)        # 8-sublane-aligned output block
    hs = [h // (2 ** i) for i in range(n_scales + 1)]
    ws = [w // (2 ** i) for i in range(n_scales + 1)]
    pad0 = _rup(max(ws[0] + 1, 128), 128)        # lane offset of real data in the shift buffer

    masks = [jnp.asarray(_boundary_masks(hs[i], ws[i])) for i in range(n_scales + 1)]
    pools = [jnp.asarray(_pool_matrix(hs[i], ws[i])) for i in range(n_scales)]
    upmats = [jnp.asarray(_up_scatter_matrix(hs[n_scales - i], ws[n_scales - i]))
              for i in range(n_scales)]

    flat = _fold_conv(params["inc"], cin_pad=cin_pad)
    for d in params["down"]:
        flat += _fold_conv(d)
    for u in params["up"]:
        flat += [_stack_convt(u["wt"]), u["bt"].reshape(-1, 1)]
        flat += _fold_conv(u["conv"])
    wo = jnp.pad(params["outc"]["w"], ((0, ncls_pad - n_classes), (0, 0)))
    bo = jnp.pad(params["outc"]["b"], (0, ncls_pad - n_classes)).reshape(ncls_pad, 1)
    flat += [wo, bo]

    x = jnp.pad(x_nchw, ((0, 0), (0, cin_pad - cin), (0, 0), (0, 0)))
    x = x.reshape(n, cin_pad, h * w)             # channels-first, flattened HW on the lane axis
    inputs = [x] + masks + pools + upmats + flat

    def _const_spec(a):
        return pl.BlockSpec(a.shape, lambda i, _nd=a.ndim: (0,) * _nd)

    in_specs = [pl.BlockSpec((None, cin_pad, h * w), lambda i: (i, 0, 0))]
    in_specs += [_const_spec(a) for a in inputs[1:]]

    c_max = max([cin_pad] + [dch[i] for i in range(n_scales)]
                + [2 * dch[n_scales - 1 - i] for i in range(n_scales)] + [dch[-1]])
    hw_max = hs[0] * ws[0]
    scratch_shapes = [
        pltpu.VMEM((c_max, hw_max + 2 * pad0), jnp.float32),   # zero-padded shift buffer
        pltpu.VMEM((9 * c_max, hw_max), jnp.float32),          # im2col taps
        pltpu.VMEM((c_max, hw_max), jnp.float32),              # pool / conv-transpose repack stage
    ]

    out = pl.pallas_call(
        _make_unet_kernel(n_scales, hs, ws, dch, pad0),
        out_shape=jax.ShapeDtypeStruct((n, ncls_pad, h * w), x_nchw.dtype),
        grid=(n,),
        in_specs=in_specs,
        out_specs=pl.BlockSpec((None, ncls_pad, h * w), lambda i: (i, 0, 0)),
        scratch_shapes=scratch_shapes,
        compiler_params=pltpu.CompilerParams(dimension_semantics=("parallel",)),
    )(*inputs)
    return out[:, :n_classes, :].reshape(n, n_classes, h, w)   # already NCHW


# ------------------------------ pure-JAX reference ------------------------------

def unet_reference(params, x):
    hp = lax.Precision.HIGHEST

    def conv_bn_relu(v, p):
        y = lax.conv_general_dilated(v, p["w"], (1, 1), ((1, 1), (1, 1)),
                                     dimension_numbers=("NCHW", "OIHW", "NCHW"),
                                     precision=hp)
        return jnp.maximum(y * p["scale"][None, :, None, None]
                           + p["bias"][None, :, None, None], 0.0)

    def maxpool(v):
        nb, c, hh, ww = v.shape
        return v.reshape(nb, c, hh // 2, 2, ww // 2, 2).max(axis=(3, 5))

    def conv_t2x2(v, wt, bt):              # ConvTranspose2d(k=2, s=2), weight (Cin, Cout, 2, 2)
        t = jnp.einsum("niyx,iors->noyrxs", v, wt, precision=hp)
        nb, co, hh, _, ww, _ = t.shape
        return t.reshape(nb, co, 2 * hh, 2 * ww) + bt[None, :, None, None]

    skips = [conv_bn_relu(x, params["inc"])]
    for d in params["down"]:
        skips.append(conv_bn_relu(maxpool(skips[-1]), d))
    u = skips.pop()
    for up in params["up"]:
        x1 = conv_t2x2(u, up["wt"], up["bt"])
        x2 = skips.pop()
        u = conv_bn_relu(jnp.concatenate([x2, x1], axis=1), up["conv"])
    return (jnp.einsum("oc,nchw->nohw", params["outc"]["w"], u, precision=hp)
            + params["outc"]["b"][None, :, None, None])


# ------------------------------------- main -------------------------------------

if __name__ == "__main__":
    key = jax.random.PRNGKey(0)
    pkey, xkey = jax.random.split(key)
    params = init_unet_params(pkey)
    # NCHW input like the PyTorch module: batch=2, n_channels=3, 16x16 spatial
    x = jax.random.normal(xkey, (2, 3, 16, 16), jnp.float32)

    out = jax.jit(parametric_unet_forward)(params, x)
    jax.block_until_ready(out)
    assert out.shape == (2, 2, 16, 16), out.shape
    assert out.dtype == jnp.float32

    ref = unet_reference(params, x)
    err = float(jnp.max(jnp.abs(out - ref)))
    tol = 5e-2 * max(1.0, float(jnp.max(jnp.abs(ref))))
    assert err <= tol, (err, tol)
    print("KERNEL_OK")
</pallas_src>

<mosaic_0001>
module attributes {stable_mosaic.version = 11 : i64} {
  func.func @kernel(%arg0: i32, %arg1: memref<1x8x256xf32, #tpu.memory_space<vmem>>, %arg2: memref<9x1x256xf32, #tpu.memory_space<vmem>>, %arg3: memref<9x1x64xf32, #tpu.memory_space<vmem>>, %arg4: memref<9x1x16xf32, #tpu.memory_space<vmem>>, %arg5: memref<256x256xf32, #tpu.memory_space<vmem>>, %arg6: memref<64x64xf32, #tpu.memory_space<vmem>>, %arg7: memref<64x64xf32, #tpu.memory_space<vmem>>, %arg8: memref<256x256xf32, #tpu.memory_space<vmem>>, %arg9: memref<8x72xf32, #tpu.memory_space<vmem>>, %arg10: memref<8x1xf32, #tpu.memory_space<vmem>>, %arg11: memref<16x72xf32, #tpu.memory_space<vmem>>, %arg12: memref<16x1xf32, #tpu.memory_space<vmem>>, %arg13: memref<32x144xf32, #tpu.memory_space<vmem>>, %arg14: memref<32x1xf32, #tpu.memory_space<vmem>>, %arg15: memref<64x32xf32, #tpu.memory_space<vmem>>, %arg16: memref<16x1xf32, #tpu.memory_space<vmem>>, %arg17: memref<16x288xf32, #tpu.memory_space<vmem>>, %arg18: memref<16x1xf32, #tpu.memory_space<vmem>>, %arg19: memref<32x16xf32, #tpu.memory_space<vmem>>, %arg20: memref<8x1xf32, #tpu.memory_space<vmem>>, %arg21: memref<8x144xf32, #tpu.memory_space<vmem>>, %arg22: memref<8x1xf32, #tpu.memory_space<vmem>>, %arg23: memref<8x8xf32, #tpu.memory_space<vmem>>, %arg24: memref<8x1xf32, #tpu.memory_space<vmem>>, %arg25: memref<1x8x256xf32, #tpu.memory_space<vmem>>, %arg26: memref<32x512xf32, #tpu.memory_space<vmem>>, %arg27: memref<288x256xf32, #tpu.memory_space<vmem>>, %arg28: memref<32x256xf32, #tpu.memory_space<vmem>>) attributes {dimension_semantics = [#tpu.dimension_semantics<parallel>], iteration_bounds = array<i64: 2>, scalar_prefetch = 0 : i64, scratch_operands = 3 : i64, tpu.core_type = #tpu.core_type<tc>, window_params = [{transform_indices = @transform_0, window_bounds = array<i64: 1, 8, 256>}, {pipeline_mode = #tpu.pipeline_mode<synchronous>, transform_indices = @transform_1, window_bounds = array<i64: 9, 1, 256>}, {pipeline_mode = #tpu.pipeline_mode<synchronous>, transform_indices = @transform_2, window_bounds = array<i64: 9, 1, 64>}, {pipeline_mode = #tpu.pipeline_mode<synchronous>, transform_indices = @transform_3, window_bounds = array<i64: 9, 1, 16>}, {pipeline_mode = #tpu.pipeline_mode<synchronous>, transform_indices = @transform_4, window_bounds = array<i64: 256, 256>}, {pipeline_mode = #tpu.pipeline_mode<synchronous>, transform_indices = @transform_5, window_bounds = array<i64: 64, 64>}, {pipeline_mode = #tpu.pipeline_mode<synchronous>, transform_indices = @transform_6, window_bounds = array<i64: 64, 64>}, {pipeline_mode = #tpu.pipeline_mode<synchronous>, transform_indices = @transform_7, window_bounds = array<i64: 256, 256>}, {pipeline_mode = #tpu.pipeline_mode<synchronous>, transform_indices = @transform_8, window_bounds = array<i64: 8, 72>}, {pipeline_mode = #tpu.pipeline_mode<synchronous>, transform_indices = @transform_9, window_bounds = array<i64: 8, 1>}, {pipeline_mode = #tpu.pipeline_mode<synchronous>, transform_indices = @transform_10, window_bounds = array<i64: 16, 72>}, {pipeline_mode = #tpu.pipeline_mode<synchronous>, transform_indices = @transform_11, window_bounds = array<i64: 16, 1>}, {pipeline_mode = #tpu.pipeline_mode<synchronous>, transform_indices = @transform_12, window_bounds = array<i64: 32, 144>}, {pipeline_mode = #tpu.pipeline_mode<synchronous>, transform_indices = @transform_13, window_bounds = array<i64: 32, 1>}, {pipeline_mode = #tpu.pipeline_mode<synchronous>, transform_indices = @transform_14, window_bounds = array<i64: 64, 32>}, {pipeline_mode = #tpu.pipeline_mode<synchronous>, transform_indices = @transform_15, window_bounds = array<i64: 16, 1>}, {pipeline_mode = #tpu.pipeline_mode<synchronous>, transform_indices = @transform_16, window_bounds = array<i64: 16, 288>}, {pipeline_mode = #tpu.pipeline_mode<synchronous>, transform_indices = @transform_17, window_bounds = array<i64: 16, 1>}, {pipeline_mode = #tpu.pipeline_mode<synchronous>, transform_indices = @transform_18, window_bounds = array<i64: 32, 16>}, {pipeline_mode = #tpu.pipeline_mode<synchronous>, transform_indices = @transform_19, window_bounds = array<i64: 8, 1>}, {pipeline_mode = #tpu.pipeline_mode<synchronous>, transform_indices = @transform_20, window_bounds = array<i64: 8, 144>}, {pipeline_mode = #tpu.pipeline_mode<synchronous>, transform_indices = @transform_21, window_bounds = array<i64: 8, 1>}, {pipeline_mode = #tpu.pipeline_mode<synchronous>, transform_indices = @transform_22, window_bounds = array<i64: 8, 8>}, {pipeline_mode = #tpu.pipeline_mode<synchronous>, transform_indices = @transform_23, window_bounds = array<i64: 8, 1>}, {transform_indices = @transform_24, window_bounds = array<i64: 1, 8, 256>}]} {
    %c0 = arith.constant 0 : index
    %c0_0 = arith.constant 0 : index
    %c0_1 = arith.constant 0 : index
    %0 = vector.load %arg1[%c0, %c0_0, %c0_1] : memref<1x8x256xf32, #tpu.memory_space<vmem>>, vector<1x8x256xf32>
    %1 = vector.shape_cast %0 : vector<1x8x256xf32> to vector<8x256xf32>
    %cst = arith.constant 0.000000e+00 : f32
    %2 = vector.broadcast %cst : f32 to vector<8x512xf32>
    %c0_2 = arith.constant 0 : index
    %c0_3 = arith.constant 0 : index
    %3 = vector.load %arg26[%c0_2, %c0_3] : memref<32x512xf32, #tpu.memory_space<vmem>>, vector<8x512xf32>
    tpu.vector_store %arg26[%c0_2, %c0_3], %2 {strides = array<i32>} : memref<32x512xf32, #tpu.memory_space<vmem>>, vector<8x512xf32>,
    %c0_4 = arith.constant 0 : index
    %c128 = arith.constant 128 : index
    %4 = vector.load %arg26[%c0_4, %c128] : memref<32x512xf32, #tpu.memory_space<vmem>>, vector<8x256xf32>
    tpu.vector_store %arg26[%c0_4, %c128], %1 {strides = array<i32>} : memref<32x512xf32, #tpu.memory_space<vmem>>, vector<8x256xf32>,
    %c0_5 = arith.constant 0 : index
    %c111 = arith.constant 111 : index
    %5 = vector.load %arg26[%c0_5, %c111] : memref<32x512xf32, #tpu.memory_space<vmem>>, vector<8x256xf32>
    %c0_6 = arith.constant 0 : index
    %c0_7 = arith.constant 0 : index
    %c0_8 = arith.constant 0 : index
    %6 = vector.load %arg2[%c0_6, %c0_7, %c0_8] : memref<9x1x256xf32, #tpu.memory_space<vmem>>, vector<1x1x256xf32>
    %7 = vector.shape_cast %6 : vector<1x1x256xf32> to vector<1x256xf32>
    %8 = vector.broadcast %7 : vector<1x256xf32> to vector<8x256xf32>
    %9 = arith.mulf %5, %8 : vector<8x256xf32>
    %c0_9 = arith.constant 0 : index
    %c0_10 = arith.constant 0 : index
    %10 = vector.load %arg27[%c0_9, %c0_10] : memref<288x256xf32, #tpu.memory_space<vmem>>, vector<8x256xf32>
    tpu.vector_store %arg27[%c0_9, %c0_10], %9 {strides = array<i32>} : memref<288x256xf32, #tpu.memory_space<vmem>>, vector<8x256xf32>,
    %c0_11 = arith.constant 0 : index
    %c112 = arith.constant 112 : index
    %11 = vector.load %arg26[%c0_11, %c112] : memref<32x512xf32, #tpu.memory_space<vmem>>, vector<8x256xf32>
    %c1 = arith.constant 1 : index
    %c0_12 = arith.constant 0 : index
    %c0_13 = arith.constant 0 : index
    %12 = vector.load %arg2[%c1, %c0_12, %c0_13] : memref<9x1x256xf32, #tpu.memory_space<vmem>>, vector<1x1x256xf32>
    %13 = vector.shape_cast %12 : vector<1x1x256xf32> to vector<1x256xf32>
    %14 = vector.broadcast %13 : vector<1x256xf32> to vector<8x256xf32>
    %15 = arith.mulf %11, %14 : vector<8x256xf32>
    %c8 = arith.constant 8 : index
    %c0_14 = arith.constant 0 : index
    %16 = vector.load %arg27[%c8, %c0_14] : memref<288x256xf32, #tpu.memory_space<vmem>>, vector<8x256xf32>
    tpu.vector_store %arg27[%c8, %c0_14], %15 {strides = array<i32>} : memref<288x256xf32, #tpu.memory_space<vmem>>, vector<8x256xf32>,
    %c0_15 = arith.constant 0 : index
    %c113 = arith.constant 113 : index
    %17 = vector.load %arg26[%c0_15, %c113] : memref<32x512xf32, #tpu.memory_space<vmem>>, vector<8x256xf32>
    %c2 = arith.constant 2 : index
    %c0_16 = arith.constant 0 : index
    %c0_17 = arith.constant 0 : index
    %18 = vector.load %arg2[%c2, %c0_16, %c0_17] : memref<9x1x256xf32, #tpu.memory_space<vmem>>, vector<1x1x256xf32>
    %19 = vector.shape_cast %18 : vector<1x1x256xf32> to vector<1x256xf32>
    %20 = vector.broadcast %19 : vector<1x256xf32> to vector<8x256xf32>
    %21 = arith.mulf %17, %20 : vector<8x256xf32>
    %c16 = arith.constant 16 : index
    %c0_18 = arith.constant 0 : index
    %22 = vector.load %arg27[%c16, %c0_18] : memref<288x256xf32, #tpu.memory_space<vmem>>, vector<8x256xf32>
    tpu.vector_store %arg27[%c16, %c0_18], %21 {strides = array<i32>} : memref<288x256xf32, #tpu.memory_space<vmem>>, vector<8x256xf32>,
    %c0_19 = arith.constant 0 : index
    %c127 = arith.constant 127 : index
    %23 = vector.load %arg26[%c0_19, %c127] : memref<32x512xf32, #tpu.memory_space<vmem>>, vector<8x256xf32>
    %c3 = arith.constant 3 : index
    %c0_20 = arith.constant 0 : index
    %c0_21 = arith.constant 0 : index
    %24 = vector.load %arg2[%c3, %c0_20, %c0_21] : memref<9x1x256xf32, #tpu.memory_space<vmem>>, vector<1x1x256xf32>
    %25 = vector.shape_cast %24 : vector<1x1x256xf32> to vector<1x256xf32>
    %26 = vector.broadcast %25 : vector<1x256xf32> to vector<8x256xf32>
    %27 = arith.mulf %23, %26 : vector<8x256xf32>
    %c24 = arith.constant 24 : index
    %c0_22 = arith.constant 0 : index
    %28 = vector.load %arg27[%c24, %c0_22] : memref<288x256xf32, #tpu.memory_space<vmem>>, vector<8x256xf32>
    tpu.vector_store %arg27[%c24, %c0_22], %27 {strides = array<i32>} : memref<288x256xf32, #tpu.memory_space<vmem>>, vector<8x256xf32>,
    %c0_23 = arith.constant 0 : index
    %c128_24 = arith.constant 128 : index
    %29 = vector.load %arg26[%c0_23, %c128_24] : memref<32x512xf32, #tpu.memory_space<vmem>>, vector<8x256xf32>
    %c4 = arith.constant 4 : index
    %c0_25 = arith.constant 0 : index
    %c0_26 = arith.constant 0 : index
    %30 = vector.load %arg2[%c4, %c0_25, %c0_26] : memref<9x1x256xf32, #tpu.memory_space<vmem>>, vector<1x1x256xf32>
    %31 = vector.shape_cast %30 : vector<1x1x256xf32> to vector<1x256xf32>
    %32 = vector.broadcast %31 : vector<1x256xf32> to vector<8x256xf32>
    %33 = arith.mulf %29, %32 : vector<8x256xf32>
    %c32 = arith.constant 32 : index
    %c0_27 = arith.constant 0 : index
    %34 = vector.load %arg27[%c32, %c0_27] : memref<288x256xf32, #tpu.memory_space<vmem>>, vector<8x256xf32>
    tpu.vector_store %arg27[%c32, %c0_27], %33 {strides = array<i32>} : memref<288x256xf32, #tpu.memory_space<vmem>>, vector<8x256xf32>,
    %c0_28 = arith.constant 0 : index
    %c129 = arith.constant 129 : index
    %35 = vector.load %arg26[%c0_28, %c129] : memref<32x512xf32, #tpu.memory_space<vmem>>, vector<8x256xf32>
    %c5 = arith.constant 5 : index
    %c0_29 = arith.constant 0 : index
    %c0_30 = arith.constant 0 : index
    %36 = vector.load %arg2[%c5, %c0_29, %c0_30] : memref<9x1x256xf32, #tpu.memory_space<vmem>>, vector<1x1x256xf32>
    %37 = vector.shape_cast %36 : vector<1x1x256xf32> to vector<1x256xf32>
    %38 = vector.broadcast %37 : vector<1x256xf32> to vector<8x256xf32>
    %39 = arith.mulf %35, %38 : vector<8x256xf32>
    %c40 = arith.constant 40 : index
    %c0_31 = arith.constant 0 : index
    %40 = vector.load %arg27[%c40, %c0_31] : memref<288x256xf32, #tpu.memory_space<vmem>>, vector<8x256xf32>
    tpu.vector_store %arg27[%c40, %c0_31], %39 {strides = array<i32>} : memref<288x256xf32, #tpu.memory_space<vmem>>, vector<8x256xf32>,
    %c0_32 = arith.constant 0 : index
    %c143 = arith.constant 143 : index
    %41 = vector.load %arg26[%c0_32, %c143] : memref<32x512xf32, #tpu.memory_space<vmem>>, vector<8x256xf32>
    %c6 = arith.constant 6 : index
    %c0_33 = arith.constant 0 : index
    %c0_34 = arith.constant 0 : index
    %42 = vector.load %arg2[%c6, %c0_33, %c0_34] : memref<9x1x256xf32, #tpu.memory_space<vmem>>, vector<1x1x256xf32>
    %43 = vector.shape_cast %42 : vector<1x1x256xf32> to vector<1x256xf32>
    %44 = vector.broadcast %43 : vector<1x256xf32> to vector<8x256xf32>
    %45 = arith.mulf %41, %44 : vector<8x256xf32>
    %c48 = arith.constant 48 : index
    %c0_35 = arith.constant 0 : index
    %46 = vector.load %arg27[%c48, %c0_35] : memref<288x256xf32, #tpu.memory_space<vmem>>, vector<8x256xf32>
    tpu.vector_store %arg27[%c48, %c0_35], %45 {strides = array<i32>} : memref<288x256xf32, #tpu.memory_space<vmem>>, vector<8x256xf32>,
    %c0_36 = arith.constant 0 : index
    %c144 = arith.constant 144 : index
    %47 = vector.load %arg26[%c0_36, %c144] : memref<32x512xf32, #tpu.memory_space<vmem>>, vector<8x256xf32>
    %c7 = arith.constant 7 : index
    %c0_37 = arith.constant 0 : index
    %c0_38 = arith.constant 0 : index
    %48 = vector.load %arg2[%c7, %c0_37, %c0_38] : memref<9x1x256xf32, #tpu.memory_space<vmem>>, vector<1x1x256xf32>
    %49 = vector.shape_cast %48 : vector<1x1x256xf32> to vector<1x256xf32>
    %50 = vector.broadcast %49 : vector<1x256xf32> to vector<8x256xf32>
    %51 = arith.mulf %47, %50 : vector<8x256xf32>
    %c56 = arith.constant 56 : index
    %c0_39 = arith.constant 0 : index
    %52 = vector.load %arg27[%c56, %c0_39] : memref<288x256xf32, #tpu.memory_space<vmem>>, vector<8x256xf32>
    tpu.vector_store %arg27[%c56, %c0_39], %51 {strides = array<i32>} : memref<288x256xf32, #tpu.memory_space<vmem>>, vector<8x256xf32>,
    %c0_40 = arith.constant 0 : index
    %c145 = arith.constant 145 : index
    %53 = vector.load %arg26[%c0_40, %c145] : memref<32x512xf32, #tpu.memory_space<vmem>>, vector<8x256xf32>
    %c8_41 = arith.constant 8 : index
    %c0_42 = arith.constant 0 : index
    %c0_43 = arith.constant 0 : index
    %54 = vector.load %arg2[%c8_41, %c0_42, %c0_43] : memref<9x1x256xf32, #tpu.memory_space<vmem>>, vector<1x1x256xf32>
    %55 = vector.shape_cast %54 : vector<1x1x256xf32> to vector<1x256xf32>
    %56 = vector.broadcast %55 : vector<1x256xf32> to vector<8x256xf32>
    %57 = arith.mulf %53, %56 : vector<8x256xf32>
    %c64 = arith.constant 64 : index
    %c0_44 = arith.constant 0 : index
    %58 = vector.load %arg27[%c64, %c0_44] : memref<288x256xf32, #tpu.memory_space<vmem>>, vector<8x256xf32>
    tpu.vector_store %arg27[%c64, %c0_44], %57 {strides = array<i32>} : memref<288x256xf32, #tpu.memory_space<vmem>>, vector<8x256xf32>,
    %c0_45 = arith.constant 0 : index
    %c0_46 = arith.constant 0 : index
    %59 = vector.load %arg9[%c0_45, %c0_46] : memref<8x72xf32, #tpu.memory_space<vmem>>, vector<8x72xf32>
    %c0_47 = arith.constant 0 : index
    %c0_48 = arith.constant 0 : index
    %60 = vector.load %arg27[%c0_47, %c0_48] : memref<288x256xf32, #tpu.memory_space<vmem>>, vector<72x256xf32>
    %cst_49 = arith.constant dense<0.000000e+00> : vector<8x256xf32>
    %61 = tpu.matmul %59, %60, %cst_49 {dimension_numbers = #tpu.dot_dimension_numbers<[1], [0], [0], [1], [0, 0, 1, 1], [], []>} : vector<8x72xf32>, vector<72x256xf32>, vector<8x256xf32> -> vector<8x256xf32>
    %c0_50 = arith.constant 0 : index
    %c0_51 = arith.constant 0 : index
    %62 = vector.load %arg10[%c0_50, %c0_51] : memref<8x1xf32, #tpu.memory_space<vmem>>, vector<8x1xf32>
    %63 = vector.broadcast %62 : vector<8x1xf32> to vector<8x256xf32>
    %64 = arith.addf %61, %63 : vector<8x256xf32>
    %cst_52 = arith.constant 0.000000e+00 : f32
    %65 = vector.broadcast %cst_52 : f32 to vector<8x256xf32>
    %66 = arith.maximumf %64, %65 : vector<8x256xf32>
    %c0_53 = arith.constant 0 : index
    %c0_54 = arith.constant 0 : index
    %67 = vector.load %arg5[%c0_53, %c0_54] : memref<256x256xf32, #tpu.memory_space<vmem>>, vector<256x256xf32>
    %cst_55 = arith.constant dense<0.000000e+00> : vector<8x256xf32>
    %68 = tpu.matmul %66, %67, %cst_55 {dimension_numbers = #tpu.dot_dimension_numbers<[1], [0], [0], [1], [0, 0, 1, 1], [], []>} : vector<8x256xf32>, vector<256x256xf32>, vector<8x256xf32> -> vector<8x256xf32>
    %c0_56 = arith.constant 0 : index
    %c0_57 = arith.constant 0 : index
    %69 = vector.load %arg28[%c0_56, %c0_57] : memref<32x256xf32, #tpu.memory_space<vmem>>, vector<8x256xf32>
    tpu.vector_store %arg28[%c0_56, %c0_57], %68 {strides = array<i32>} : memref<32x256xf32, #tpu.memory_space<vmem>>, vector<8x256xf32>,
    %c0_58 = arith.constant 0 : index
    %c0_59 = arith.constant 0 : index
    %70 = vector.load %arg28[%c0_58, %c0_59] : memref<32x256xf32, #tpu.memory_space<vmem>>, vector<8x64xf32>
    %c0_60 = arith.constant 0 : index
    %c64_61 = arith.constant 64 : index
    %71 = vector.load %arg28[%c0_60, %c64_61] : memref<32x256xf32, #tpu.memory_space<vmem>>, vector<8x64xf32>
    %72 = arith.maximumf %70, %71 : vector<8x64xf32>
    %c0_62 = arith.constant 0 : index
    %c128_63 = arith.constant 128 : index
    %73 = vector.load %arg28[%c0_62, %c128_63] : memref<32x256xf32, #tpu.memory_space<vmem>>, vector<8x64xf32>
    %c0_64 = arith.constant 0 : index
    %c192 = arith.constant 192 : index
    %74 = vector.load %arg28[%c0_64, %c192] : memref<32x256xf32, #tpu.memory_space<vmem>>, vector<8x64xf32>
    %75 = arith.maximumf %73, %74 : vector<8x64xf32>
    %76 = arith.maximumf %72, %75 : vector<8x64xf32>
    %cst_65 = arith.constant 0.000000e+00 : f32
    %77 = vector.broadcast %cst_65 : f32 to vector<8x512xf32>
    %c0_66 = arith.constant 0 : index
    %c0_67 = arith.constant 0 : index
    %78 = vector.load %arg26[%c0_66, %c0_67] : memref<32x512xf32, #tpu.memory_space<vmem>>, vector<8x512xf32>
    tpu.vector_store %arg26[%c0_66, %c0_67], %77 {strides = array<i32>} : memref<32x512xf32, #tpu.memory_space<vmem>>, vector<8x512xf32>,
    %c0_68 = arith.constant 0 : index
    %c128_69 = arith.constant 128 : index
    %79 = vector.load %arg26[%c0_68, %c128_69] : memref<32x512xf32, #tpu.memory_space<vmem>>, vector<8x64xf32>
    tpu.vector_store %arg26[%c0_68, %c128_69], %76 {strides = array<i32>} : memref<32x512xf32, #tpu.memory_space<vmem>>, vector<8x64xf32>,
    %c0_70 = arith.constant 0 : index
    %c119 = arith.constant 119 : index
    %80 = vector.load %arg26[%c0_70, %c119] : memref<32x512xf32, #tpu.memory_space<vmem>>, vector<8x64xf32>
    %c0_71 = arith.constant 0 : index
    %c0_72 = arith.constant 0 : index
    %c0_73 = arith.constant 0 : index
    %81 = vector.load %arg3[%c0_71, %c0_72, %c0_73] : memref<9x1x64xf32, #tpu.memory_space<vmem>>, vector<1x1x64xf32>
    %82 = vector.shape_cast %81 : vector<1x1x64xf32> to vector<1x64xf32>
    %83 = vector.broadcast %82 : vector<1x64xf32> to vector<8x64xf32>
    %84 = arith.mulf %80, %83 : vector<8x64xf32>
    %c0_74 = arith.constant 0 : index
    %c0_75 = arith.constant 0 : index
    %85 = vector.load %arg27[%c0_74, %c0_75] : memref<288x256xf32, #tpu.memory_space<vmem>>, vector<8x64xf32>
    tpu.vector_store %arg27[%c0_74, %c0_75], %84 {strides = array<i32>} : memref<288x256xf32, #tpu.memory_space<vmem>>, vector<8x64xf32>,
    %c0_76 = arith.constant 0 : index
    %c120 = arith.constant 120 : index
    %86 = vector.load %arg26[%c0_76, %c120] : memref<32x512xf32, #tpu.memory_space<vmem>>, vector<8x64xf32>
    %c1_77 = arith.constant 1 : index
    %c0_78 = arith.constant 0 : index
    %c0_79 = arith.constant 0 : index
    %87 = vector.load %arg3[%c1_77, %c0_78, %c0_79] : memref<9x1x64xf32, #tpu.memory_space<vmem>>, vector<1x1x64xf32>
    %88 = vector.shape_cast %87 : vector<1x1x64xf32> to vector<1x64xf32>
    %89 = vector.broadcast %88 : vector<1x64xf32> to vector<8x64xf32>
    %90 = arith.mulf %86, %89 : vector<8x64xf32>
    %c8_80 = arith.constant 8 : index
    %c0_81 = arith.constant 0 : index
    %91 = vector.load %arg27[%c8_80, %c0_81] : memref<288x256xf32, #tpu.memory_space<vmem>>, vector<8x64xf32>
    tpu.vector_store %arg27[%c8_80, %c0_81], %90 {strides = array<i32>} : memref<288x256xf32, #tpu.memory_space<vmem>>, vector<8x64xf32>,
    %c0_82 = arith.constant 0 : index
    %c121 = arith.constant 121 : index
    %92 = vector.load %arg26[%c0_82, %c121] : memref<32x512xf32, #tpu.memory_space<vmem>>, vector<8x64xf32>
    %c2_83 = arith.constant 2 : index
    %c0_84 = arith.constant 0 : index
    %c0_85 = arith.constant 0 : index
    %93 = vector.load %arg3[%c2_83, %c0_84, %c0_85] : memref<9x1x64xf32, #tpu.memory_space<vmem>>, vector<1x1x64xf32>
    %94 = vector.shape_cast %93 : vector<1x1x64xf32> to vector<1x64xf32>
    %95 = vector.broadcast %94 : vector<1x64xf32> to vector<8x64xf32>
    %96 = arith.mulf %92, %95 : vector<8x64xf32>
    %c16_86 = arith.constant 16 : index
    %c0_87 = arith.constant 0 : index
    %97 = vector.load %arg27[%c16_86, %c0_87] : memref<288x256xf32, #tpu.memory_space<vmem>>, vector<8x64xf32>
    tpu.vector_store %arg27[%c16_86, %c0_87], %96 {strides = array<i32>} : memref<288x256xf32, #tpu.memory_space<vmem>>, vector<8x64xf32>,
    %c0_88 = arith.constant 0 : index
    %c127_89 = arith.constant 127 : index
    %98 = vector.load %arg26[%c0_88, %c127_89] : memref<32x512xf32, #tpu.memory_space<vmem>>, vector<8x64xf32>
    %c3_90 = arith.constant 3 : index
    %c0_91 = arith.constant 0 : index
    %c0_92 = arith.constant 0 : index
    %99 = vector.load %arg3[%c3_90, %c0_91, %c0_92] : memref<9x1x64xf32, #tpu.memory_space<vmem>>, vector<1x1x64xf32>
    %100 = vector.shape_cast %99 : vector<1x1x64xf32> to vector<1x64xf32>
    %101 = vector.broadcast %100 : vector<1x64xf32> to vector<8x64xf32>
    %102 = arith.mulf %98, %101 : vector<8x64xf32>
    %c24_93 = arith.constant 24 : index
    %c0_94 = arith.constant 0 : index
    %103 = vector.load %arg27[%c24_93, %c0_94] : memref<288x256xf32, #tpu.memory_space<vmem>>, vector<8x64xf32>
    tpu.vector_store %arg27[%c24_93, %c0_94], %102 {strides = array<i32>} : memref<288x256xf32, #tpu.memory_space<vmem>>, vector<8x64xf32>,
    %c0_95 = arith.constant 0 : index
    %c128_96 = arith.constant 128 : index
    %104 = vector.load %arg26[%c0_95, %c128_96] : memref<32x512xf32, #tpu.memory_space<vmem>>, vector<8x64xf32>
    %c4_97 = arith.constant 4 : index
    %c0_98 = arith.constant 0 : index
    %c0_99 = arith.constant 0 : index
    %105 = vector.load %arg3[%c4_97, %c0_98, %c0_99] : memref<9x1x64xf32, #tpu.memory_space<vmem>>, vector<1x1x64xf32>
    %106 = vector.shape_cast %105 : vector<1x1x64xf32> to vector<1x64xf32>
    %107 = vector.broadcast %106 : vector<1x64xf32> to vector<8x64xf32>
    %108 = arith.mulf %104, %107 : vector<8x64xf32>
    %c32_100 = arith.constant 32 : index
    %c0_101 = arith.constant 0 : index
    %109 = vector.load %arg27[%c32_100, %c0_101] : memref<288x256xf32, #tpu.memory_space<vmem>>, vector<8x64xf32>
    tpu.vector_store %arg27[%c32_100, %c0_101], %108 {strides = array<i32>} : memref<288x256xf32, #tpu.memory_space<vmem>>, vector<8x64xf32>,
    %c0_102 = arith.constant 0 : index
    %c129_103 = arith.constant 129 : index
    %110 = vector.load %arg26[%c0_102, %c129_103] : memref<32x512xf32, #tpu.memory_space<vmem>>, vector<8x64xf32>
    %c5_104 = arith.constant 5 : index
    %c0_105 = arith.constant 0 : index
    %c0_106 = arith.constant 0 : index
    %111 = vector.load %arg3[%c5_104, %c0_105, %c0_106] : memref<9x1x64xf32, #tpu.memory_space<vmem>>, vector<1x1x64xf32>
    %112 = vector.shape_cast %111 : vector<1x1x64xf32> to vector<1x64xf32>
    %113 = vector.broadcast %112 : vector<1x64xf32> to vector<8x64xf32>
    %114 = arith.mulf %110, %113 : vector<8x64xf32>
    %c40_107 = arith.constant 40 : index
    %c0_108 = arith.constant 0 : index
    %115 = vector.load %arg27[%c40_107, %c0_108] : memref<288x256xf32, #tpu.memory_space<vmem>>, vector<8x64xf32>
    tpu.vector_store %arg27[%c40_107, %c0_108], %114 {strides = array<i32>} : memref<288x256xf32, #tpu.memory_space<vmem>>, vector<8x64xf32>,
    %c0_109 = arith.constant 0 : index
    %c135 = arith.constant 135 : index
    %116 = vector.load %arg26[%c0_109, %c135] : memref<32x512xf32, #tpu.memory_space<vmem>>, vector<8x64xf32>
    %c6_110 = arith.constant 6 : index
    %c0_111 = arith.constant 0 : index
    %c0_112 = arith.constant 0 : index
    %117 = vector.load %arg3[%c6_110, %c0_111, %c0_112] : memref<9x1x64xf32, #tpu.memory_space<vmem>>, vector<1x1x64xf32>
    %118 = vector.shape_cast %117 : vector<1x1x64xf32> to vector<1x64xf32>
    %119 = vector.broadcast %118 : vector<1x64xf32> to vector<8x64xf32>
    %120 = arith.mulf %116, %119 : vector<8x64xf32>
    %c48_113 = arith.constant 48 : index
    %c0_114 = arith.constant 0 : index
    %121 = vector.load %arg27[%c48_113, %c0_114] : memref<288x256xf32, #tpu.memory_space<vmem>>, vector<8x64xf32>
    tpu.vector_store %arg27[%c48_113, %c0_114], %120 {strides = array<i32>} : memref<288x256xf32, #tpu.memory_space<vmem>>, vector<8x64xf32>,
    %c0_115 = arith.constant 0 : index
    %c136 = arith.constant 136 : index
    %122 = vector.load %arg26[%c0_115, %c136] : memref<32x512xf32, #tpu.memory_space<vmem>>, vector<8x64xf32>
    %c7_116 = arith.constant 7 : index
    %c0_117 = arith.constant 0 : index
    %c0_118 = arith.constant 0 : index
    %123 = vector.load %arg3[%c7_116, %c0_117, %c0_118] : memref<9x1x64xf32, #tpu.memory_space<vmem>>, vector<1x1x64xf32>
    %124 = vector.shape_cast %123 : vector<1x1x64xf32> to vector<1x64xf32>
    %125 = vector.broadcast %124 : vector<1x64xf32> to vector<8x64xf32>
    %126 = arith.mulf %122, %125 : vector<8x64xf32>
    %c56_119 = arith.constant 56 : index
    %c0_120 = arith.constant 0 : index
    %127 = vector.load %arg27[%c56_119, %c0_120] : memref<288x256xf32, #tpu.memory_space<vmem>>, vector<8x64xf32>
    tpu.vector_store %arg27[%c56_119, %c0_120], %126 {strides = array<i32>} : memref<288x256xf32, #tpu.memory_space<vmem>>, vector<8x64xf32>,
    %c0_121 = arith.constant 0 : index
    %c137 = arith.constant 137 : index
    %128 = vector.load %arg26[%c0_121, %c137] : memref<32x512xf32, #tpu.memory_space<vmem>>, vector<8x64xf32>
    %c8_122 = arith.constant 8 : index
    %c0_123 = arith.constant 0 : index
    %c0_124 = arith.constant 0 : index
    %129 = vector.load %arg3[%c8_122, %c0_123, %c0_124] : memref<9x1x64xf32, #tpu.memory_space<vmem>>, vector<1x1x64xf32>
    %130 = vector.shape_cast %129 : vector<1x1x64xf32> to vector<1x64xf32>
    %131 = vector.broadcast %130 : vector<1x64xf32> to vector<8x64xf32>
    %132 = arith.mulf %128, %131 : vector<8x64xf32>
    %c64_125 = arith.constant 64 : index
    %c0_126 = arith.constant 0 : index
    %133 = vector.load %arg27[%c64_125, %c0_126] : memref<288x256xf32, #tpu.memory_space<vmem>>, vector<8x64xf32>
    tpu.vector_store %arg27[%c64_125, %c0_126], %132 {strides = array<i32>} : memref<288x256xf32, #tpu.memory_space<vmem>>, vector<8x64xf32>,
    %c0_127 = arith.constant 0 : index
    %c0_128 = arith.constant 0 : index
    %134 = vector.load %arg11[%c0_127, %c0_128] : memref<16x72xf32, #tpu.memory_space<vmem>>, vector<16x72xf32>
    %c0_129 = arith.constant 0 : index
    %c0_130 = arith.constant 0 : index
    %135 = vector.load %arg27[%c0_129, %c0_130] : memref<288x256xf32, #tpu.memory_space<vmem>>, vector<72x64xf32>
    %cst_131 = arith.constant dense<0.000000e+00> : vector<16x64xf32>
    %136 = tpu.matmul %134, %135, %cst_131 {dimension_numbers = #tpu.dot_dimension_numbers<[1], [0], [0], [1], [0, 0, 1, 1], [], []>} : vector<16x72xf32>, vector<72x64xf32>, vector<16x64xf32> -> vector<16x64xf32>
    %c0_132 = arith.constant 0 : index
    %c0_133 = arith.constant 0 : index
    %137 = vector.load %arg12[%c0_132, %c0_133] : memref<16x1xf32, #tpu.memory_space<vmem>>, vector<16x1xf32>
    %138 = vector.broadcast %137 : vector<16x1xf32> to vector<16x64xf32>
    %139 = arith.addf %136, %138 : vector<16x64xf32>
    %cst_134 = arith.constant 0.000000e+00 : f32
    %140 = vector.broadcast %cst_134 : f32 to vector<16x64xf32>
    %141 = arith.maximumf %139, %140 : vector<16x64xf32>
    %c0_135 = arith.constant 0 : index
    %c0_136 = arith.constant 0 : index
    %142 = vector.load %arg6[%c0_135, %c0_136] : memref<64x64xf32, #tpu.memory_space<vmem>>, vector<64x64xf32>
    %cst_137 = arith.constant dense<0.000000e+00> : vector<16x64xf32>
    %143 = tpu.matmul %141, %142, %cst_137 {dimension_numbers = #tpu.dot_dimension_numbers<[1], [0], [0], [1], [0, 0, 1, 1], [], []>} : vector<16x64xf32>, vector<64x64xf32>, vector<16x64xf32> -> vector<16x64xf32>
    %c0_138 = arith.constant 0 : index
    %c0_139 = arith.constant 0 : index
    %144 = vector.load %arg28[%c0_138, %c0_139] : memref<32x256xf32, #tpu.memory_space<vmem>>, vector<16x64xf32>
    tpu.vector_store %arg28[%c0_138, %c0_139], %143 {strides = array<i32>} : memref<32x256xf32, #tpu.memory_space<vmem>>, vector<16x64xf32>,
    %c0_140 = arith.constant 0 : index
    %c0_141 = arith.constant 0 : index
    %145 = vector.load %arg28[%c0_140, %c0_141] : memref<32x256xf32, #tpu.memory_space<vmem>>, vector<16x16xf32>
    %c0_142 = arith.constant 0 : index
    %c16_143 = arith.constant 16 : index
    %146 = vector.load %arg28[%c0_142, %c16_143] : memref<32x256xf32, #tpu.memory_space<vmem>>, vector<16x16xf32>
    %147 = arith.maximumf %145, %146 : vector<16x16xf32>
    %c0_144 = arith.constant 0 : index
    %c32_145 = arith.constant 32 : index
    %148 = vector.load %arg28[%c0_144, %c32_145] : memref<32x256xf32, #tpu.memory_space<vmem>>, vector<16x16xf32>
    %c0_146 = arith.constant 0 : index
    %c48_147 = arith.constant 48 : index
    %149 = vector.load %arg28[%c0_146, %c48_147] : memref<32x256xf32, #tpu.memory_space<vmem>>, vector<16x16xf32>
    %150 = arith.maximumf %148, %149 : vector<16x16xf32>
    %151 = arith.maximumf %147, %150 : vector<16x16xf32>
    %cst_148 = arith.constant 0.000000e+00 : f32
    %152 = vector.broadcast %cst_148 : f32 to vector<16x512xf32>
    %c0_149 = arith.constant 0 : index
    %c0_150 = arith.constant 0 : index
    %153 = vector.load %arg26[%c0_149, %c0_150] : memref<32x512xf32, #tpu.memory_space<vmem>>, vector<16x512xf32>
    tpu.vector_store %arg26[%c0_149, %c0_150], %152 {strides = array<i32>} : memref<32x512xf32, #tpu.memory_space<vmem>>, vector<16x512xf32>,
    %c0_151 = arith.constant 0 : index
    %c128_152 = arith.constant 128 : index
    %154 = vector.load %arg26[%c0_151, %c128_152] : memref<32x512xf32, #tpu.memory_space<vmem>>, vector<16x16xf32>
    tpu.vector_store %arg26[%c0_151, %c128_152], %151 {strides = array<i32>} : memref<32x512xf32, #tpu.memory_space<vmem>>, vector<16x16xf32>,
    %c0_153 = arith.constant 0 : index
    %c123 = arith.constant 123 : index
    %155 = vector.load %arg26[%c0_153, %c123] : memref<32x512xf32, #tpu.memory_space<vmem>>, vector<16x16xf32>
    %c0_154 = arith.constant 0 : index
    %c0_155 = arith.constant 0 : index
    %c0_156 = arith.constant 0 : index
    %156 = vector.load %arg4[%c0_154, %c0_155, %c0_156] : memref<9x1x16xf32, #tpu.memory_space<vmem>>, vector<1x1x16xf32>
    %157 = vector.shape_cast %156 : vector<1x1x16xf32> to vector<1x16xf32>
    %158 = vector.broadcast %157 : vector<1x16xf32> to vector<16x16xf32>
    %159 = arith.mulf %155, %158 : vector<16x16xf32>
    %c0_157 = arith.constant 0 : index
    %c0_158 = arith.constant 0 : index
    %160 = vector.load %arg27[%c0_157, %c0_158] : memref<288x256xf32, #tpu.memory_space<vmem>>, vector<16x16xf32>
    tpu.vector_store %arg27[%c0_157, %c0_158], %159 {strides = array<i32>} : memref<288x256xf32, #tpu.memory_space<vmem>>, vector<16x16xf32>,
    %c0_159 = arith.constant 0 : index
    %c124 = arith.constant 124 : index
    %161 = vector.load %arg26[%c0_159, %c124] : memref<32x512xf32, #tpu.memory_space<vmem>>, vector<16x16xf32>
    %c1_160 = arith.constant 1 : index
    %c0_161 = arith.constant 0 : index
    %c0_162 = arith.constant 0 : index
    %162 = vector.load %arg4[%c1_160, %c0_161, %c0_162] : memref<9x1x16xf32, #tpu.memory_space<vmem>>, vector<1x1x16xf32>
    %163 = vector.shape_cast %162 : vector<1x1x16xf32> to vector<1x16xf32>
    %164 = vector.broadcast %163 : vector<1x16xf32> to vector<16x16xf32>
    %165 = arith.mulf %161, %164 : vector<16x16xf32>
    %c16_163 = arith.constant 16 : index
    %c0_164 = arith.constant 0 : index
    %166 = vector.load %arg27[%c16_163, %c0_164] : memref<288x256xf32, #tpu.memory_space<vmem>>, vector<16x16xf32>
    tpu.vector_store %arg27[%c16_163, %c0_164], %165 {strides = array<i32>} : memref<288x256xf32, #tpu.memory_space<vmem>>, vector<16x16xf32>,
    %c0_165 = arith.constant 0 : index
    %c125 = arith.constant 125 : index
    %167 = vector.load %arg26[%c0_165, %c125] : memref<32x512xf32, #tpu.memory_space<vmem>>, vector<16x16xf32>
    %c2_166 = arith.constant 2 : index
    %c0_167 = arith.constant 0 : index
    %c0_168 = arith.constant 0 : index
    %168 = vector.load %arg4[%c2_166, %c0_167, %c0_168] : memref<9x1x16xf32, #tpu.memory_space<vmem>>, vector<1x1x16xf32>
    %169 = vector.shape_cast %168 : vector<1x1x16xf32> to vector<1x16xf32>
    %170 = vector.broadcast %169 : vector<1x16xf32> to vector<16x16xf32>
    %171 = arith.mulf %167, %170 : vector<16x16xf32>
    %c32_169 = arith.constant 32 : index
    %c0_170 = arith.constant 0 : index
    %172 = vector.load %arg27[%c32_169, %c0_170] : memref<288x256xf32, #tpu.memory_space<vmem>>, vector<16x16xf32>
    tpu.vector_store %arg27[%c32_169, %c0_170], %171 {strides = array<i32>} : memref<288x256xf32, #tpu.memory_space<vmem>>, vector<16x16xf32>,
    %c0_171 = arith.constant 0 : index
    %c127_172 = arith.constant 127 : index
    %173 = vector.load %arg26[%c0_171, %c127_172] : memref<32x512xf32, #tpu.memory_space<vmem>>, vector<16x16xf32>
    %c3_173 = arith.constant 3 : index
    %c0_174 = arith.constant 0 : index
    %c0_175 = arith.constant 0 : index
    %174 = vector.load %arg4[%c3_173, %c0_174, %c0_175] : memref<9x1x16xf32, #tpu.memory_space<vmem>>, vector<1x1x16xf32>
    %175 = vector.shape_cast %174 : vector<1x1x16xf32> to vector<1x16xf32>
    %176 = vector.broadcast %175 : vector<1x16xf32> to vector<16x16xf32>
    %177 = arith.mulf %173, %176 : vector<16x16xf32>
    %c48_176 = arith.constant 48 : index
    %c0_177 = arith.constant 0 : index
    %178 = vector.load %arg27[%c48_176, %c0_177] : memref<288x256xf32, #tpu.memory_space<vmem>>, vector<16x16xf32>
    tpu.vector_store %arg27[%c48_176, %c0_177], %177 {strides = array<i32>} : memref<288x256xf32, #tpu.memory_space<vmem>>, vector<16x16xf32>,
    %c0_178 = arith.constant 0 : index
    %c128_179 = arith.constant 128 : index
    %179 = vector.load %arg26[%c0_178, %c128_179] : memref<32x512xf32, #tpu.memory_space<vmem>>, vector<16x16xf32>
    %c4_180 = arith.constant 4 : index
    %c0_181 = arith.constant 0 : index
    %c0_182 = arith.constant 0 : index
    %180 = vector.load %arg4[%c4_180, %c0_181, %c0_182] : memref<9x1x16xf32, #tpu.memory_space<vmem>>, vector<1x1x16xf32>
    %181 = vector.shape_cast %180 : vector<1x1x16xf32> to vector<1x16xf32>
    %182 = vector.broadcast %181 : vector<1x16xf32> to vector<16x16xf32>
    %183 = arith.mulf %179, %182 : vector<16x16xf32>
    %c64_183 = arith.constant 64 : index
    %c0_184 = arith.constant 0 : index
    %184 = vector.load %arg27[%c64_183, %c0_184] : memref<288x256xf32, #tpu.memory_space<vmem>>, vector<16x16xf32>
    tpu.vector_store %arg27[%c64_183, %c0_184], %183 {strides = array<i32>} : memref<288x256xf32, #tpu.memory_space<vmem>>, vector<16x16xf32>,
    %c0_185 = arith.constant 0 : index
    %c129_186 = arith.constant 129 : index
    %185 = vector.load %arg26[%c0_185, %c129_186] : memref<32x512xf32, #tpu.memory_space<vmem>>, vector<16x16xf32>
    %c5_187 = arith.constant 5 : index
    %c0_188 = arith.constant 0 : index
    %c0_189 = arith.constant 0 : index
    %186 = vector.load %arg4[%c5_187, %c0_188, %c0_189] : memref<9x1x16xf32, #tpu.memory_space<vmem>>, vector<1x1x16xf32>
    %187 = vector.shape_cast %186 : vector<1x1x16xf32> to vector<1x16xf32>
    %188 = vector.broadcast %187 : vector<1x16xf32> to vector<16x16xf32>
    %189 = arith.mulf %185, %188 : vector<16x16xf32>
    %c80 = arith.constant 80 : index
    %c0_190 = arith.constant 0 : index
    %190 = vector.load %arg27[%c80, %c0_190] : memref<288x256xf32, #tpu.memory_space<vmem>>, vector<16x16xf32>
    tpu.vector_store %arg27[%c80, %c0_190], %189 {strides = array<i32>} : memref<288x256xf32, #tpu.memory_space<vmem>>, vector<16x16xf32>,
    %c0_191 = arith.constant 0 : index
    %c131 = arith.constant 131 : index
    %191 = vector.load %arg26[%c0_191, %c131] : memref<32x512xf32, #tpu.memory_space<vmem>>, vector<16x16xf32>
    %c6_192 = arith.constant 6 : index
    %c0_193 = arith.constant 0 : index
    %c0_194 = arith.constant 0 : index
    %192 = vector.load %arg4[%c6_192, %c0_193, %c0_194] : memref<9x1x16xf32, #tpu.memory_space<vmem>>, vector<1x1x16xf32>
    %193 = vector.shape_cast %192 : vector<1x1x16xf32> to vector<1x16xf32>
    %194 = vector.broadcast %193 : vector<1x16xf32> to vector<16x16xf32>
    %195 = arith.mulf %191, %194 : vector<16x16xf32>
    %c96 = arith.constant 96 : index
    %c0_195 = arith.constant 0 : index
    %196 = vector.load %arg27[%c96, %c0_195] : memref<288x256xf32, #tpu.memory_space<vmem>>, vector<16x16xf32>
    tpu.vector_store %arg27[%c96, %c0_195], %195 {strides = array<i32>} : memref<288x256xf32, #tpu.memory_space<vmem>>, vector<16x16xf32>,
    %c0_196 = arith.constant 0 : index
    %c132 = arith.constant 132 : index
    %197 = vector.load %arg26[%c0_196, %c132] : memref<32x512xf32, #tpu.memory_space<vmem>>, vector<16x16xf32>
    %c7_197 = arith.constant 7 : index
    %c0_198 = arith.constant 0 : index
    %c0_199 = arith.constant 0 : index
    %198 = vector.load %arg4[%c7_197, %c0_198, %c0_199] : memref<9x1x16xf32, #tpu.memory_space<vmem>>, vector<1x1x16xf32>
    %199 = vector.shape_cast %198 : vector<1x1x16xf32> to vector<1x16xf32>
    %200 = vector.broadcast %199 : vector<1x16xf32> to vector<16x16xf32>
    %201 = arith.mulf %197, %200 : vector<16x16xf32>
    %c112_200 = arith.constant 112 : index
    %c0_201 = arith.constant 0 : index
    %202 = vector.load %arg27[%c112_200, %c0_201] : memref<288x256xf32, #tpu.memory_space<vmem>>, vector<16x16xf32>
    tpu.vector_store %arg27[%c112_200, %c0_201], %201 {strides = array<i32>} : memref<288x256xf32, #tpu.memory_space<vmem>>, vector<16x16xf32>,
    %c0_202 = arith.constant 0 : index
    %c133 = arith.constant 133 : index
    %203 = vector.load %arg26[%c0_202, %c133] : memref<32x512xf32, #tpu.memory_space<vmem>>, vector<16x16xf32>
    %c8_203 = arith.constant 8 : index
    %c0_204 = arith.constant 0 : index
    %c0_205 = arith.constant 0 : index
    %204 = vector.load %arg4[%c8_203, %c0_204, %c0_205] : memref<9x1x16xf32, #tpu.memory_space<vmem>>, vector<1x1x16xf32>
    %205 = vector.shape_cast %204 : vector<1x1x16xf32> to vector<1x16xf32>
    %206 = vector.broadcast %205 : vector<1x16xf32> to vector<16x16xf32>
    %207 = arith.mulf %203, %206 : vector<16x16xf32>
    %c128_206 = arith.constant 128 : index
    %c0_207 = arith.constant 0 : index
    %208 = vector.load %arg27[%c128_206, %c0_207] : memref<288x256xf32, #tpu.memory_space<vmem>>, vector<16x16xf32>
    tpu.vector_store %arg27[%c128_206, %c0_207], %207 {strides = array<i32>} : memref<288x256xf32, #tpu.memory_space<vmem>>, vector<16x16xf32>,
    %c0_208 = arith.constant 0 : index
    %c0_209 = arith.constant 0 : index
    %209 = vector.load %arg13[%c0_208, %c0_209] : memref<32x144xf32, #tpu.memory_space<vmem>>, vector<32x144xf32>
    %c0_210 = arith.constant 0 : index
    %c0_211 = arith.constant 0 : index
    %210 = vector.load %arg27[%c0_210, %c0_211] : memref<288x256xf32, #tpu.memory_space<vmem>>, vector<144x16xf32>
    %cst_212 = arith.constant dense<0.000000e+00> : vector<32x16xf32>
    %211 = tpu.matmul %209, %210, %cst_212 {dimension_numbers = #tpu.dot_dimension_numbers<[1], [0], [0], [1], [0, 0, 1, 1], [], []>} : vector<32x144xf32>, vector<144x16xf32>, vector<32x16xf32> -> vector<32x16xf32>
    %c0_213 = arith.constant 0 : index
    %c0_214 = arith.constant 0 : index
    %212 = vector.load %arg14[%c0_213, %c0_214] : memref<32x1xf32, #tpu.memory_space<vmem>>, vector<32x1xf32>
    %213 = vector.broadcast %212 : vector<32x1xf32> to vector<32x16xf32>
    %214 = arith.addf %211, %213 : vector<32x16xf32>
    %cst_215 = arith.constant 0.000000e+00 : f32
    %215 = vector.broadcast %cst_215 : f32 to vector<32x16xf32>
    %216 = arith.maximumf %214, %215 : vector<32x16xf32>
    %c0_216 = arith.constant 0 : index
    %c0_217 = arith.constant 0 : index
    %217 = vector.load %arg15[%c0_216, %c0_217] : memref<64x32xf32, #tpu.memory_space<vmem>>, vector<64x32xf32>
    %cst_218 = arith.constant dense<0.000000e+00> : vector<64x16xf32>
    %218 = tpu.matmul %217, %216, %cst_218 {dimension_numbers = #tpu.dot_dimension_numbers<[1], [0], [0], [1], [0, 0, 1, 1], [], []>} : vector<64x32xf32>, vector<32x16xf32>, vector<64x16xf32> -> vector<64x16xf32>
    %219 = vector.extract_strided_slice %218 {offsets = [0, 0], sizes = [16, 16], strides = [1, 1]} : vector<64x16xf32> to vector<16x16xf32>
    %c0_219 = arith.constant 0 : index
    %c0_220 = arith.constant 0 : index
    %220 = vector.load %arg28[%c0_219, %c0_220] : memref<32x256xf32, #tpu.memory_space<vmem>>, vector<16x16xf32>
    tpu.vector_store %arg28[%c0_219, %c0_220], %219 {strides = array<i32>} : memref<32x256xf32, #tpu.memory_space<vmem>>, vector<16x16xf32>,
    %221 = vector.extract_strided_slice %218 {offsets = [16, 0], sizes = [16, 16], strides = [1, 1]} : vector<64x16xf32> to vector<16x16xf32>
    %c0_221 = arith.constant 0 : index
    %c16_222 = arith.constant 16 : index
    %222 = vector.load %arg28[%c0_221, %c16_222] : memref<32x256xf32, #tpu.memory_space<vmem>>, vector<16x16xf32>
    tpu.vector_store %arg28[%c0_221, %c16_222], %221 {strides = array<i32>} : memref<32x256xf32, #tpu.memory_space<vmem>>, vector<16x16xf32>,
    %223 = vector.extract_strided_slice %218 {offsets = [32, 0], sizes = [16, 16], strides = [1, 1]} : vector<64x16xf32> to vector<16x16xf32>
    %c0_223 = arith.constant 0 : index
    %c32_224 = arith.constant 32 : index
    %224 = vector.load %arg28[%c0_223, %c32_224] : memref<32x256xf32, #tpu.memory_space<vmem>>, vector<16x16xf32>
    tpu.vector_store %arg28[%c0_223, %c32_224], %223 {strides = array<i32>} : memref<32x256xf32, #tpu.memory_space<vmem>>, vector<16x16xf32>,
    %225 = vector.extract_strided_slice %218 {offsets = [48, 0], sizes = [16, 16], strides = [1, 1]} : vector<64x16xf32> to vector<16x16xf32>
    %c0_225 = arith.constant 0 : index
    %c48_226 = arith.constant 48 : index
    %226 = vector.load %arg28[%c0_225, %c48_226] : memref<32x256xf32, #tpu.memory_space<vmem>>, vector<16x16xf32>
    tpu.vector_store %arg28[%c0_225, %c48_226], %225 {strides = array<i32>} : memref<32x256xf32, #tpu.memory_space<vmem>>, vector<16x16xf32>,
    %c0_227 = arith.constant 0 : index
    %c0_228 = arith.constant 0 : index
    %227 = vector.load %arg28[%c0_227, %c0_228] : memref<32x256xf32, #tpu.memory_space<vmem>>, vector<16x64xf32>
    %c0_229 = arith.constant 0 : index
    %c0_230 = arith.constant 0 : index
    %228 = vector.load %arg7[%c0_229, %c0_230] : memref<64x64xf32, #tpu.memory_space<vmem>>, vector<64x64xf32>
    %cst_231 = arith.constant dense<0.000000e+00> : vector<16x64xf32>
    %229 = tpu.matmul %227, %228, %cst_231 {dimension_numbers = #tpu.dot_dimension_numbers<[1], [0], [0], [1], [0, 0, 1, 1], [], []>} : vector<16x64xf32>, vector<64x64xf32>, vector<16x64xf32> -> vector<16x64xf32>
    %c0_232 = arith.constant 0 : index
    %c0_233 = arith.constant 0 : index
    %230 = vector.load %arg16[%c0_232, %c0_233] : memref<16x1xf32, #tpu.memory_space<vmem>>, vector<16x1xf32>
    %231 = vector.broadcast %230 : vector<16x1xf32> to vector<16x64xf32>
    %232 = arith.addf %229, %231 : vector<16x64xf32>
    %cst_234 = arith.constant 0.000000e+00 : f32
    %233 = vector.broadcast %cst_234 : f32 to vector<32x512xf32>
    %c0_235 = arith.constant 0 : index
    %c0_236 = arith.constant 0 : index
    %234 = vector.load %arg26[%c0_235, %c0_236] : memref<32x512xf32, #tpu.memory_space<vmem>>, vector<32x512xf32>
    tpu.vector_store %arg26[%c0_235, %c0_236], %233 {strides = array<i32>} : memref<32x512xf32, #tpu.memory_space<vmem>>, vector<32x512xf32>,
    %c0_237 = arith.constant 0 : index
    %c128_238 = arith.constant 128 : index
    %235 = vector.load %arg26[%c0_237, %c128_238] : memref<32x512xf32, #tpu.memory_space<vmem>>, vector<16x64xf32>
    tpu.vector_store %arg26[%c0_237, %c128_238], %141 {strides = array<i32>} : memref<32x512xf32, #tpu.memory_space<vmem>>, vector<16x64xf32>,
    %c16_239 = arith.constant 16 : index
    %c128_240 = arith.constant 128 : index
    %236 = vector.load %arg26[%c16_239, %c128_240] : memref<32x512xf32, #tpu.memory_space<vmem>>, vector<16x64xf32>
    tpu.vector_store %arg26[%c16_239, %c128_240], %232 {strides = array<i32>} : memref<32x512xf32, #tpu.memory_space<vmem>>, vector<16x64xf32>,
    %c0_241 = arith.constant 0 : index
    %c119_242 = arith.constant 119 : index
    %237 = vector.load %arg26[%c0_241, %c119_242] : memref<32x512xf32, #tpu.memory_space<vmem>>, vector<32x64xf32>
    %c0_243 = arith.constant 0 : index
    %c0_244 = arith.constant 0 : index
    %c0_245 = arith.constant 0 : index
    %238 = vector.load %arg3[%c0_243, %c0_244, %c0_245] : memref<9x1x64xf32, #tpu.memory_space<vmem>>, vector<1x1x64xf32>
    %239 = vector.shape_cast %238 : vector<1x1x64xf32> to vector<1x64xf32>
    %240 = vector.broadcast %239 : vector<1x64xf32> to vector<32x64xf32>
    %241 = arith.mulf %237, %240 : vector<32x64xf32>
    %c0_246 = arith.constant 0 : index
    %c0_247 = arith.constant 0 : index
    %242 = vector.load %arg27[%c0_246, %c0_247] : memref<288x256xf32, #tpu.memory_space<vmem>>, vector<32x64xf32>
    tpu.vector_store %arg27[%c0_246, %c0_247], %241 {strides = array<i32>} : memref<288x256xf32, #tpu.memory_space<vmem>>, vector<32x64xf32>,
    %c0_248 = arith.constant 0 : index
    %c120_249 = arith.constant 120 : index
    %243 = vector.load %arg26[%c0_248, %c120_249] : memref<32x512xf32, #tpu.memory_space<vmem>>, vector<32x64xf32>
    %c1_250 = arith.constant 1 : index
    %c0_251 = arith.constant 0 : index
    %c0_252 = arith.constant 0 : index
    %244 = vector.load %arg3[%c1_250, %c0_251, %c0_252] : memref<9x1x64xf32, #tpu.memory_space<vmem>>, vector<1x1x64xf32>
    %245 = vector.shape_cast %244 : vector<1x1x64xf32> to vector<1x64xf32>
    %246 = vector.broadcast %245 : vector<1x64xf32> to vector<32x64xf32>
    %247 = arith.mulf %243, %246 : vector<32x64xf32>
    %c32_253 = arith.constant 32 : index
    %c0_254 = arith.constant 0 : index
    %248 = vector.load %arg27[%c32_253, %c0_254] : memref<288x256xf32, #tpu.memory_space<vmem>>, vector<32x64xf32>
    tpu.vector_store %arg27[%c32_253, %c0_254], %247 {strides = array<i32>} : memref<288x256xf32, #tpu.memory_space<vmem>>, vector<32x64xf32>,
    %c0_255 = arith.constant 0 : index
    %c121_256 = arith.constant 121 : index
    %249 = vector.load %arg26[%c0_255, %c121_256] : memref<32x512xf32, #tpu.memory_space<vmem>>, vector<32x64xf32>
    %c2_257 = arith.constant 2 : index
    %c0_258 = arith.constant 0 : index
    %c0_259 = arith.constant 0 : index
    %250 = vector.load %arg3[%c2_257, %c0_258, %c0_259] : memref<9x1x64xf32, #tpu.memory_space<vmem>>, vector<1x1x64xf32>
    %251 = vector.shape_cast %250 : vector<1x1x64xf32> to vector<1x64xf32>
    %252 = vector.broadcast %251 : vector<1x64xf32> to vector<32x64xf32>
    %253 = arith.mulf %249, %252 : vector<32x64xf32>
    %c64_260 = arith.constant 64 : index
    %c0_261 = arith.constant 0 : index
    %254 = vector.load %arg27[%c64_260, %c0_261] : memref<288x256xf32, #tpu.memory_space<vmem>>, vector<32x64xf32>
    tpu.vector_store %arg27[%c64_260, %c0_261], %253 {strides = array<i32>} : memref<288x256xf32, #tpu.memory_space<vmem>>, vector<32x64xf32>,
    %c0_262 = arith.constant 0 : index
    %c127_263 = arith.constant 127 : index
    %255 = vector.load %arg26[%c0_262, %c127_263] : memref<32x512xf32, #tpu.memory_space<vmem>>, vector<32x64xf32>
    %c3_264 = arith.constant 3 : index
    %c0_265 = arith.constant 0 : index
    %c0_266 = arith.constant 0 : index
    %256 = vector.load %arg3[%c3_264, %c0_265, %c0_266] : memref<9x1x64xf32, #tpu.memory_space<vmem>>, vector<1x1x64xf32>
    %257 = vector.shape_cast %256 : vector<1x1x64xf32> to vector<1x64xf32>
    %258 = vector.broadcast %257 : vector<1x64xf32> to vector<32x64xf32>
    %259 = arith.mulf %255, %258 : vector<32x64xf32>
    %c96_267 = arith.constant 96 : index
    %c0_268 = arith.constant 0 : index
    %260 = vector.load %arg27[%c96_267, %c0_268] : memref<288x256xf32, #tpu.memory_space<vmem>>, vector<32x64xf32>
    tpu.vector_store %arg27[%c96_267, %c0_268], %259 {strides = array<i32>} : memref<288x256xf32, #tpu.memory_space<vmem>>, vector<32x64xf32>,
    %c0_269 = arith.constant 0 : index
    %c128_270 = arith.constant 128 : index
    %261 = vector.load %arg26[%c0_269, %c128_270] : memref<32x512xf32, #tpu.memory_space<vmem>>, vector<32x64xf32>
    %c4_271 = arith.constant 4 : index
    %c0_272 = arith.constant 0 : index
    %c0_273 = arith.constant 0 : index
    %262 = vector.load %arg3[%c4_271, %c0_272, %c0_273] : memref<9x1x64xf32, #tpu.memory_space<vmem>>, vector<1x1x64xf32>
    %263 = vector.shape_cast %262 : vector<1x1x64xf32> to vector<1x64xf32>
    %264 = vector.broadcast %263 : vector<1x64xf32> to vector<32x64xf32>
    %265 = arith.mulf %261, %264 : vector<32x64xf32>
    %c128_274 = arith.constant 128 : index
    %c0_275 = arith.constant 0 : index
    %266 = vector.load %arg27[%c128_274, %c0_275] : memref<288x256xf32, #tpu.memory_space<vmem>>, vector<32x64xf32>
    tpu.vector_store %arg27[%c128_274, %c0_275], %265 {strides = array<i32>} : memref<288x256xf32, #tpu.memory_space<vmem>>, vector<32x64xf32>,
    %c0_276 = arith.constant 0 : index
    %c129_277 = arith.constant 129 : index
    %267 = vector.load %arg26[%c0_276, %c129_277] : memref<32x512xf32, #tpu.memory_space<vmem>>, vector<32x64xf32>
    %c5_278 = arith.constant 5 : index
    %c0_279 = arith.constant 0 : index
    %c0_280 = arith.constant 0 : index
    %268 = vector.load %arg3[%c5_278, %c0_279, %c0_280] : memref<9x1x64xf32, #tpu.memory_space<vmem>>, vector<1x1x64xf32>
    %269 = vector.shape_cast %268 : vector<1x1x64xf32> to vector<1x64xf32>
    %270 = vector.broadcast %269 : vector<1x64xf32> to vector<32x64xf32>
    %271 = arith.mulf %267, %270 : vector<32x64xf32>
    %c160 = arith.constant 160 : index
    %c0_281 = arith.constant 0 : index
    %272 = vector.load %arg27[%c160, %c0_281] : memref<288x256xf32, #tpu.memory_space<vmem>>, vector<32x64xf32>
    tpu.vector_store %arg27[%c160, %c0_281], %271 {strides = array<i32>} : memref<288x256xf32, #tpu.memory_space<vmem>>, vector<32x64xf32>,
    %c0_282 = arith.constant 0 : index
    %c135_283 = arith.constant 135 : index
    %273 = vector.load %arg26[%c0_282, %c135_283] : memref<32x512xf32, #tpu.memory_space<vmem>>, vector<32x64xf32>
    %c6_284 = arith.constant 6 : index
    %c0_285 = arith.constant 0 : index
    %c0_286 = arith.constant 0 : index
    %274 = vector.load %arg3[%c6_284, %c0_285, %c0_286] : memref<9x1x64xf32, #tpu.memory_space<vmem>>, vector<1x1x64xf32>
    %275 = vector.shape_cast %274 : vector<1x1x64xf32> to vector<1x64xf32>
    %276 = vector.broadcast %275 : vector<1x64xf32> to vector<32x64xf32>
    %277 = arith.mulf %273, %276 : vector<32x64xf32>
    %c192_287 = arith.constant 192 : index
    %c0_288 = arith.constant 0 : index
    %278 = vector.load %arg27[%c192_287, %c0_288] : memref<288x256xf32, #tpu.memory_space<vmem>>, vector<32x64xf32>
    tpu.vector_store %arg27[%c192_287, %c0_288], %277 {strides = array<i32>} : memref<288x256xf32, #tpu.memory_space<vmem>>, vector<32x64xf32>,
    %c0_289 = arith.constant 0 : index
    %c136_290 = arith.constant 136 : index
    %279 = vector.load %arg26[%c0_289, %c136_290] : memref<32x512xf32, #tpu.memory_space<vmem>>, vector<32x64xf32>
    %c7_291 = arith.constant 7 : index
    %c0_292 = arith.constant 0 : index
    %c0_293 = arith.constant 0 : index
    %280 = vector.load %arg3[%c7_291, %c0_292, %c0_293] : memref<9x1x64xf32, #tpu.memory_space<vmem>>, vector<1x1x64xf32>
    %281 = vector.shape_cast %280 : vector<1x1x64xf32> to vector<1x64xf32>
    %282 = vector.broadcast %281 : vector<1x64xf32> to vector<32x64xf32>
    %283 = arith.mulf %279, %282 : vector<32x64xf32>
    %c224 = arith.constant 224 : index
    %c0_294 = arith.constant 0 : index
    %284 = vector.load %arg27[%c224, %c0_294] : memref<288x256xf32, #tpu.memory_space<vmem>>, vector<32x64xf32>
    tpu.vector_store %arg27[%c224, %c0_294], %283 {strides = array<i32>} : memref<288x256xf32, #tpu.memory_space<vmem>>, vector<32x64xf32>,
    %c0_295 = arith.constant 0 : index
    %c137_296 = arith.constant 137 : index
    %285 = vector.load %arg26[%c0_295, %c137_296] : memref<32x512xf32, #tpu.memory_space<vmem>>, vector<32x64xf32>
    %c8_297 = arith.constant 8 : index
    %c0_298 = arith.constant 0 : index
    %c0_299 = arith.constant 0 : index
    %286 = vector.load %arg3[%c8_297, %c0_298, %c0_299] : memref<9x1x64xf32, #tpu.memory_space<vmem>>, vector<1x1x64xf32>
    %287 = vector.shape_cast %286 : vector<1x1x64xf32> to vector<1x64xf32>
    %288 = vector.broadcast %287 : vector<1x64xf32> to vector<32x64xf32>
    %289 = arith.mulf %285, %288 : vector<32x64xf32>
    %c256 = arith.constant 256 : index
    %c0_300 = arith.constant 0 : index
    %290 = vector.load %arg27[%c256, %c0_300] : memref<288x256xf32, #tpu.memory_space<vmem>>, vector<32x64xf32>
    tpu.vector_store %arg27[%c256, %c0_300], %289 {strides = array<i32>} : memref<288x256xf32, #tpu.memory_space<vmem>>, vector<32x64xf32>,
    %c0_301 = arith.constant 0 : index
    %c0_302 = arith.constant 0 : index
    %291 = vector.load %arg17[%c0_301, %c0_302] : memref<16x288xf32, #tpu.memory_space<vmem>>, vector<16x288xf32>
    %c0_303 = arith.constant 0 : index
    %c0_304 = arith.constant 0 : index
    %292 = vector.load %arg27[%c0_303, %c0_304] : memref<288x256xf32, #tpu.memory_space<vmem>>, vector<288x64xf32>
    %cst_305 = arith.constant dense<0.000000e+00> : vector<16x64xf32>
    %293 = tpu.matmul %291, %292, %cst_305 {dimension_numbers = #tpu.dot_dimension_numbers<[1], [0], [0], [1], [0, 0, 1, 1], [], []>} : vector<16x288xf32>, vector<288x64xf32>, vector<16x64xf32> -> vector<16x64xf32>
    %c0_306 = arith.constant 0 : index
    %c0_307 = arith.constant 0 : index
    %294 = vector.load %arg18[%c0_306, %c0_307] : memref<16x1xf32, #tpu.memory_space<vmem>>, vector<16x1xf32>
    %295 = vector.broadcast %294 : vector<16x1xf32> to vector<16x64xf32>
    %296 = arith.addf %293, %295 : vector<16x64xf32>
    %cst_308 = arith.constant 0.000000e+00 : f32
    %297 = vector.broadcast %cst_308 : f32 to vector<16x64xf32>
    %298 = arith.maximumf %296, %297 : vector<16x64xf32>
    %c0_309 = arith.constant 0 : index
    %c0_310 = arith.constant 0 : index
    %299 = vector.load %arg19[%c0_309, %c0_310] : memref<32x16xf32, #tpu.memory_space<vmem>>, vector<32x16xf32>
    %cst_311 = arith.constant dense<0.000000e+00> : vector<32x64xf32>
    %300 = tpu.matmul %299, %298, %cst_311 {dimension_numbers = #tpu.dot_dimension_numbers<[1], [0], [0], [1], [0, 0, 1, 1], [], []>} : vector<32x16xf32>, vector<16x64xf32>, vector<32x64xf32> -> vector<32x64xf32>
    %301 = vector.extract_strided_slice %300 {offsets = [0, 0], sizes = [8, 64], strides = [1, 1]} : vector<32x64xf32> to vector<8x64xf32>
    %c0_312 = arith.constant 0 : index
    %c0_313 = arith.constant 0 : index
    %302 = vector.load %arg28[%c0_312, %c0_313] : memref<32x256xf32, #tpu.memory_space<vmem>>, vector<8x64xf32>
    tpu.vector_store %arg28[%c0_312, %c0_313], %301 {strides = array<i32>} : memref<32x256xf32, #tpu.memory_space<vmem>>, vector<8x64xf32>,
    %303 = vector.extract_strided_slice %300 {offsets = [8, 0], sizes = [8, 64], strides = [1, 1]} : vector<32x64xf32> to vector<8x64xf32>
    %c0_314 = arith.constant 0 : index
    %c64_315 = arith.constant 64 : index
    %304 = vector.load %arg28[%c0_314, %c64_315] : memref<32x256xf32, #tpu.memory_space<vmem>>, vector<8x64xf32>
    tpu.vector_store %arg28[%c0_314, %c64_315], %303 {strides = array<i32>} : memref<32x256xf32, #tpu.memory_space<vmem>>, vector<8x64xf32>,
    %305 = vector.extract_strided_slice %300 {offsets = [16, 0], sizes = [8, 64], strides = [1, 1]} : vector<32x64xf32> to vector<8x64xf32>
    %c0_316 = arith.constant 0 : index
    %c128_317 = arith.constant 128 : index
    %306 = vector.load %arg28[%c0_316, %c128_317] : memref<32x256xf32, #tpu.memory_space<vmem>>, vector<8x64xf32>
    tpu.vector_store %arg28[%c0_316, %c128_317], %305 {strides = array<i32>} : memref<32x256xf32, #tpu.memory_space<vmem>>, vector<8x64xf32>,
    %307 = vector.extract_strided_slice %300 {offsets = [24, 0], sizes = [8, 64], strides = [1, 1]} : vector<32x64xf32> to vector<8x64xf32>
    %c0_318 = arith.constant 0 : index
    %c192_319 = arith.constant 192 : index
    %308 = vector.load %arg28[%c0_318, %c192_319] : memref<32x256xf32, #tpu.memory_space<vmem>>, vector<8x64xf32>
    tpu.vector_store %arg28[%c0_318, %c192_319], %307 {strides = array<i32>} : memref<32x256xf32, #tpu.memory_space<vmem>>, vector<8x64xf32>,
    %c0_320 = arith.constant 0 : index
    %c0_321 = arith.constant 0 : index
    %309 = vector.load %arg28[%c0_320, %c0_321] : memref<32x256xf32, #tpu.memory_space<vmem>>, vector<8x256xf32>
    %c0_322 = arith.constant 0 : index
    %c0_323 = arith.constant 0 : index
    %310 = vector.load %arg8[%c0_322, %c0_323] : memref<256x256xf32, #tpu.memory_space<vmem>>, vector<256x256xf32>
    %cst_324 = arith.constant dense<0.000000e+00> : vector<8x256xf32>
    %311 = tpu.matmul %309, %310, %cst_324 {dimension_numbers = #tpu.dot_dimension_numbers<[1], [0], [0], [1], [0, 0, 1, 1], [], []>} : vector<8x256xf32>, vector<256x256xf32>, vector<8x256xf32> -> vector<8x256xf32>
    %c0_325 = arith.constant 0 : index
    %c0_326 = arith.constant 0 : index
    %312 = vector.load %arg20[%c0_325, %c0_326] : memref<8x1xf32, #tpu.memory_space<vmem>>, vector<8x1xf32>
    %313 = vector.broadcast %312 : vector<8x1xf32> to vector<8x256xf32>
    %314 = arith.addf %311, %313 : vector<8x256xf32>
    %cst_327 = arith.constant 0.000000e+00 : f32
    %315 = vector.broadcast %cst_327 : f32 to vector<16x512xf32>
    %c0_328 = arith.constant 0 : index
    %c0_329 = arith.constant 0 : index
    %316 = vector.load %arg26[%c0_328, %c0_329] : memref<32x512xf32, #tpu.memory_space<vmem>>, vector<16x512xf32>
    tpu.vector_store %arg26[%c0_328, %c0_329], %315 {strides = array<i32>} : memref<32x512xf32, #tpu.memory_space<vmem>>, vector<16x512xf32>,
    %c0_330 = arith.constant 0 : index
    %c128_331 = arith.constant 128 : index
    %317 = vector.load %arg26[%c0_330, %c128_331] : memref<32x512xf32, #tpu.memory_space<vmem>>, vector<8x256xf32>
    tpu.vector_store %arg26[%c0_330, %c128_331], %66 {strides = array<i32>} : memref<32x512xf32, #tpu.memory_space<vmem>>, vector<8x256xf32>,
    %c8_332 = arith.constant 8 : index
    %c128_333 = arith.constant 128 : index
    %318 = vector.load %arg26[%c8_332, %c128_333] : memref<32x512xf32, #tpu.memory_space<vmem>>, vector<8x256xf32>
    tpu.vector_store %arg26[%c8_332, %c128_333], %314 {strides = array<i32>} : memref<32x512xf32, #tpu.memory_space<vmem>>, vector<8x256xf32>,
    %c0_334 = arith.constant 0 : index
    %c111_335 = arith.constant 111 : index
    %319 = vector.load %arg26[%c0_334, %c111_335] : memref<32x512xf32, #tpu.memory_space<vmem>>, vector<16x256xf32>
    %c0_336 = arith.constant 0 : index
    %c0_337 = arith.constant 0 : index
    %c0_338 = arith.constant 0 : index
    %320 = vector.load %arg2[%c0_336, %c0_337, %c0_338] : memref<9x1x256xf32, #tpu.memory_space<vmem>>, vector<1x1x256xf32>
    %321 = vector.shape_cast %320 : vector<1x1x256xf32> to vector<1x256xf32>
    %322 = vector.broadcast %321 : vector<1x256xf32> to vector<16x256xf32>
    %323 = arith.mulf %319, %322 : vector<16x256xf32>
    %c0_339 = arith.constant 0 : index
    %c0_340 = arith.constant 0 : index
    %324 = vector.load %arg27[%c0_339, %c0_340] : memref<288x256xf32, #tpu.memory_space<vmem>>, vector<16x256xf32>
    tpu.vector_store %arg27[%c0_339, %c0_340], %323 {strides = array<i32>} : memref<288x256xf32, #tpu.memory_space<vmem>>, vector<16x256xf32>,
    %c0_341 = arith.constant 0 : index
    %c112_342 = arith.constant 112 : index
    %325 = vector.load %arg26[%c0_341, %c112_342] : memref<32x512xf32, #tpu.memory_space<vmem>>, vector<16x256xf32>
    %c1_343 = arith.constant 1 : index
    %c0_344 = arith.constant 0 : index
    %c0_345 = arith.constant 0 : index
    %326 = vector.load %arg2[%c1_343, %c0_344, %c0_345] : memref<9x1x256xf32, #tpu.memory_space<vmem>>, vector<1x1x256xf32>
    %327 = vector.shape_cast %326 : vector<1x1x256xf32> to vector<1x256xf32>
    %328 = vector.broadcast %327 : vector<1x256xf32> to vector<16x256xf32>
    %329 = arith.mulf %325, %328 : vector<16x256xf32>
    %c16_346 = arith.constant 16 : index
    %c0_347 = arith.constant 0 : index
    %330 = vector.load %arg27[%c16_346, %c0_347] : memref<288x256xf32, #tpu.memory_space<vmem>>, vector<16x256xf32>
    tpu.vector_store %arg27[%c16_346, %c0_347], %329 {strides = array<i32>} : memref<288x256xf32, #tpu.memory_space<vmem>>, vector<16x256xf32>,
    %c0_348 = arith.constant 0 : index
    %c113_349 = arith.constant 113 : index
    %331 = vector.load %arg26[%c0_348, %c113_349] : memref<32x512xf32, #tpu.memory_space<vmem>>, vector<16x256xf32>
    %c2_350 = arith.constant 2 : index
    %c0_351 = arith.constant 0 : index
    %c0_352 = arith.constant 0 : index
    %332 = vector.load %arg2[%c2_350, %c0_351, %c0_352] : memref<9x1x256xf32, #tpu.memory_space<vmem>>, vector<1x1x256xf32>
    %333 = vector.shape_cast %332 : vector<1x1x256xf32> to vector<1x256xf32>
    %334 = vector.broadcast %333 : vector<1x256xf32> to vector<16x256xf32>
    %335 = arith.mulf %331, %334 : vector<16x256xf32>
    %c32_353 = arith.constant 32 : index
    %c0_354 = arith.constant 0 : index
    %336 = vector.load %arg27[%c32_353, %c0_354] : memref<288x256xf32, #tpu.memory_space<vmem>>, vector<16x256xf32>
    tpu.vector_store %arg27[%c32_353, %c0_354], %335 {strides = array<i32>} : memref<288x256xf32, #tpu.memory_space<vmem>>, vector<16x256xf32>,
    %c0_355 = arith.constant 0 : index
    %c127_356 = arith.constant 127 : index
    %337 = vector.load %arg26[%c0_355, %c127_356] : memref<32x512xf32, #tpu.memory_space<vmem>>, vector<16x256xf32>
    %c3_357 = arith.constant 3 : index
    %c0_358 = arith.constant 0 : index
    %c0_359 = arith.constant 0 : index
    %338 = vector.load %arg2[%c3_357, %c0_358, %c0_359] : memref<9x1x256xf32, #tpu.memory_space<vmem>>, vector<1x1x256xf32>
    %339 = vector.shape_cast %338 : vector<1x1x256xf32> to vector<1x256xf32>
    %340 = vector.broadcast %339 : vector<1x256xf32> to vector<16x256xf32>
    %341 = arith.mulf %337, %340 : vector<16x256xf32>
    %c48_360 = arith.constant 48 : index
    %c0_361 = arith.constant 0 : index
    %342 = vector.load %arg27[%c48_360, %c0_361] : memref<288x256xf32, #tpu.memory_space<vmem>>, vector<16x256xf32>
    tpu.vector_store %arg27[%c48_360, %c0_361], %341 {strides = array<i32>} : memref<288x256xf32, #tpu.memory_space<vmem>>, vector<16x256xf32>,
    %c0_362 = arith.constant 0 : index
    %c128_363 = arith.constant 128 : index
    %343 = vector.load %arg26[%c0_362, %c128_363] : memref<32x512xf32, #tpu.memory_space<vmem>>, vector<16x256xf32>
    %c4_364 = arith.constant 4 : index
    %c0_365 = arith.constant 0 : index
    %c0_366 = arith.constant 0 : index
    %344 = vector.load %arg2[%c4_364, %c0_365, %c0_366] : memref<9x1x256xf32, #tpu.memory_space<vmem>>, vector<1x1x256xf32>
    %345 = vector.shape_cast %344 : vector<1x1x256xf32> to vector<1x256xf32>
    %346 = vector.broadcast %345 : vector<1x256xf32> to vector<16x256xf32>
    %347 = arith.mulf %343, %346 : vector<16x256xf32>
    %c64_367 = arith.constant 64 : index
    %c0_368 = arith.constant 0 : index
    %348 = vector.load %arg27[%c64_367, %c0_368] : memref<288x256xf32, #tpu.memory_space<vmem>>, vector<16x256xf32>
    tpu.vector_store %arg27[%c64_367, %c0_368], %347 {strides = array<i32>} : memref<288x256xf32, #tpu.memory_space<vmem>>, vector<16x256xf32>,
    %c0_369 = arith.constant 0 : index
    %c129_370 = arith.constant 129 : index
    %349 = vector.load %arg26[%c0_369, %c129_370] : memref<32x512xf32, #tpu.memory_space<vmem>>, vector<16x256xf32>
    %c5_371 = arith.constant 5 : index
    %c0_372 = arith.constant 0 : index
    %c0_373 = arith.constant 0 : index
    %350 = vector.load %arg2[%c5_371, %c0_372, %c0_373] : memref<9x1x256xf32, #tpu.memory_space<vmem>>, vector<1x1x256xf32>
    %351 = vector.shape_cast %350 : vector<1x1x256xf32> to vector<1x256xf32>
    %352 = vector.broadcast %351 : vector<1x256xf32> to vector<16x256xf32>
    %353 = arith.mulf %349, %352 : vector<16x256xf32>
    %c80_374 = arith.constant 80 : index
    %c0_375 = arith.constant 0 : index
    %354 = vector.load %arg27[%c80_374, %c0_375] : memref<288x256xf32, #tpu.memory_space<vmem>>, vector<16x256xf32>
    tpu.vector_store %arg27[%c80_374, %c0_375], %353 {strides = array<i32>} : memref<288x256xf32, #tpu.memory_space<vmem>>, vector<16x256xf32>,
    %c0_376 = arith.constant 0 : index
    %c143_377 = arith.constant 143 : index
    %355 = vector.load %arg26[%c0_376, %c143_377] : memref<32x512xf32, #tpu.memory_space<vmem>>, vector<16x256xf32>
    %c6_378 = arith.constant 6 : index
    %c0_379 = arith.constant 0 : index
    %c0_380 = arith.constant 0 : index
    %356 = vector.load %arg2[%c6_378, %c0_379, %c0_380] : memref<9x1x256xf32, #tpu.memory_space<vmem>>, vector<1x1x256xf32>
    %357 = vector.shape_cast %356 : vector<1x1x256xf32> to vector<1x256xf32>
    %358 = vector.broadcast %357 : vector<1x256xf32> to vector<16x256xf32>
    %359 = arith.mulf %355, %358 : vector<16x256xf32>
    %c96_381 = arith.constant 96 : index
    %c0_382 = arith.constant 0 : index
    %360 = vector.load %arg27[%c96_381, %c0_382] : memref<288x256xf32, #tpu.memory_space<vmem>>, vector<16x256xf32>
    tpu.vector_store %arg27[%c96_381, %c0_382], %359 {strides = array<i32>} : memref<288x256xf32, #tpu.memory_space<vmem>>, vector<16x256xf32>,
    %c0_383 = arith.constant 0 : index
    %c144_384 = arith.constant 144 : index
    %361 = vector.load %arg26[%c0_383, %c144_384] : memref<32x512xf32, #tpu.memory_space<vmem>>, vector<16x256xf32>
    %c7_385 = arith.constant 7 : index
    %c0_386 = arith.constant 0 : index
    %c0_387 = arith.constant 0 : index
    %362 = vector.load %arg2[%c7_385, %c0_386, %c0_387] : memref<9x1x256xf32, #tpu.memory_space<vmem>>, vector<1x1x256xf32>
    %363 = vector.shape_cast %362 : vector<1x1x256xf32> to vector<1x256xf32>
    %364 = vector.broadcast %363 : vector<1x256xf32> to vector<16x256xf32>
    %365 = arith.mulf %361, %364 : vector<16x256xf32>
    %c112_388 = arith.constant 112 : index
    %c0_389 = arith.constant 0 : index
    %366 = vector.load %arg27[%c112_388, %c0_389] : memref<288x256xf32, #tpu.memory_space<vmem>>, vector<16x256xf32>
    tpu.vector_store %arg27[%c112_388, %c0_389], %365 {strides = array<i32>} : memref<288x256xf32, #tpu.memory_space<vmem>>, vector<16x256xf32>,
    %c0_390 = arith.constant 0 : index
    %c145_391 = arith.constant 145 : index
    %367 = vector.load %arg26[%c0_390, %c145_391] : memref<32x512xf32, #tpu.memory_space<vmem>>, vector<16x256xf32>
    %c8_392 = arith.constant 8 : index
    %c0_393 = arith.constant 0 : index
    %c0_394 = arith.constant 0 : index
    %368 = vector.load %arg2[%c8_392, %c0_393, %c0_394] : memref<9x1x256xf32, #tpu.memory_space<vmem>>, vector<1x1x256xf32>
    %369 = vector.shape_cast %368 : vector<1x1x256xf32> to vector<1x256xf32>
    %370 = vector.broadcast %369 : vector<1x256xf32> to vector<16x256xf32>
    %371 = arith.mulf %367, %370 : vector<16x256xf32>
    %c128_395 = arith.constant 128 : index
    %c0_396 = arith.constant 0 : index
    %372 = vector.load %arg27[%c128_395, %c0_396] : memref<288x256xf32, #tpu.memory_space<vmem>>, vector<16x256xf32>
    tpu.vector_store %arg27[%c128_395, %c0_396], %371 {strides = array<i32>} : memref<288x256xf32, #tpu.memory_space<vmem>>, vector<16x256xf32>,
    %c0_397 = arith.constant 0 : index
    %c0_398 = arith.constant 0 : index
    %373 = vector.load %arg21[%c0_397, %c0_398] : memref<8x144xf32, #tpu.memory_space<vmem>>, vector<8x144xf32>
    %c0_399 = arith.constant 0 : index
    %c0_400 = arith.constant 0 : index
    %374 = vector.load %arg27[%c0_399, %c0_400] : memref<288x256xf32, #tpu.memory_space<vmem>>, vector<144x256xf32>
    %cst_401 = arith.constant dense<0.000000e+00> : vector<8x256xf32>
    %375 = tpu.matmul %373, %374, %cst_401 {dimension_numbers = #tpu.dot_dimension_numbers<[1], [0], [0], [1], [0, 0, 1, 1], [], []>} : vector<8x144xf32>, vector<144x256xf32>, vector<8x256xf32> -> vector<8x256xf32>
    %c0_402 = arith.constant 0 : index
    %c0_403 = arith.constant 0 : index
    %376 = vector.load %arg22[%c0_402, %c0_403] : memref<8x1xf32, #tpu.memory_space<vmem>>, vector<8x1xf32>
    %377 = vector.broadcast %376 : vector<8x1xf32> to vector<8x256xf32>
    %378 = arith.addf %375, %377 : vector<8x256xf32>
    %cst_404 = arith.constant 0.000000e+00 : f32
    %379 = vector.broadcast %cst_404 : f32 to vector<8x256xf32>
    %380 = arith.maximumf %378, %379 : vector<8x256xf32>
    %c0_405 = arith.constant 0 : index
    %c0_406 = arith.constant 0 : index
    %381 = vector.load %arg23[%c0_405, %c0_406] : memref<8x8xf32, #tpu.memory_space<vmem>>, vector<8x8xf32>
    %cst_407 = arith.constant dense<0.000000e+00> : vector<8x256xf32>
    %382 = tpu.matmul %381, %380, %cst_407 {dimension_numbers = #tpu.dot_dimension_numbers<[1], [0], [0], [1], [0, 0, 1, 1], [], []>} : vector<8x8xf32>, vector<8x256xf32>, vector<8x256xf32> -> vector<8x256xf32>
    %c0_408 = arith.constant 0 : index
    %c0_409 = arith.constant 0 : index
    %383 = vector.load %arg24[%c0_408, %c0_409] : memref<8x1xf32, #tpu.memory_space<vmem>>, vector<8x1xf32>
    %384 = vector.broadcast %383 : vector<8x1xf32> to vector<8x256xf32>
    %385 = arith.addf %382, %384 : vector<8x256xf32>
    %c0_410 = arith.constant 0 : index
    %c0_411 = arith.constant 0 : index
    %c0_412 = arith.constant 0 : index
    %386 = vector.load %arg25[%c0_410, %c0_411, %c0_412] : memref<1x8x256xf32, #tpu.memory_space<vmem>>, vector<1x8x256xf32>
    %387 = vector.shape_cast %386 : vector<1x8x256xf32> to vector<8x256xf32>
    %388 = vector.shape_cast %385 : vector<8x256xf32> to vector<1x8x256xf32>
    tpu.vector_store %arg25[%c0_410, %c0_411, %c0_412], %388 {strides = array<i32>} : memref<1x8x256xf32, #tpu.memory_space<vmem>>, vector<1x8x256xf32>,
    return
  }
  func.func @transform_0(%arg0: i32) -> (i32, i32, i32) {
    %c0_i32 = arith.constant 0 : i32
    %c0_i32_0 = arith.constant 0 : i32
    %c0_i32_1 = arith.constant 0 : i32
    return %arg0, %c0_i32, %c0_i32_0 : i32, i32, i32
  }
  func.func @transform_1(%arg0: i32) -> (i32, i32, i32) {
    %c0_i32 = arith.constant 0 : i32
    %c0_i32_0 = arith.constant 0 : i32
    %c0_i32_1 = arith.constant 0 : i32
    %c0_i32_2 = arith.constant 0 : i32
    return %c0_i32, %c0_i32_0, %c0_i32_1 : i32, i32, i32
  }
  func.func @transform_2(%arg0: i32) -> (i32, i32, i32) {
    %c0_i32 = arith.constant 0 : i32
    %c0_i32_0 = arith.constant 0 : i32
    %c0_i32_1 = arith.constant 0 : i32
    %c0_i32_2 = arith.constant 0 : i32
    return %c0_i32, %c0_i32_0, %c0_i32_1 : i32, i32, i32
  }
  func.func @transform_3(%arg0: i32) -> (i32, i32, i32) {
    %c0_i32 = arith.constant 0 : i32
    %c0_i32_0 = arith.constant 0 : i32
    %c0_i32_1 = arith.constant 0 : i32
    %c0_i32_2 = arith.constant 0 : i32
    return %c0_i32, %c0_i32_0, %c0_i32_1 : i32, i32, i32
  }
  func.func @transform_4(%arg0: i32) -> (i32, i32) {
    %c0_i32 = arith.constant 0 : i32
    %c0_i32_0 = arith.constant 0 : i32
    %c0_i32_1 = arith.constant 0 : i32
    return %c0_i32, %c0_i32_0 : i32, i32
  }
  func.func @transform_5(%arg0: i32) -> (i32, i32) {
    %c0_i32 = arith.constant 0 : i32
    %c0_i32_0 = arith.constant 0 : i32
    %c0_i32_1 = arith.constant 0 : i32
    return %c0_i32, %c0_i32_0 : i32, i32
  }
  func.func @transform_6(%arg0: i32) -> (i32, i32) {
    %c0_i32 = arith.constant 0 : i32
    %c0_i32_0 = arith.constant 0 : i32
    %c0_i32_1 = arith.constant 0 : i32
    return %c0_i32, %c0_i32_0 : i32, i32
  }
  func.func @transform_7(%arg0: i32) -> (i32, i32) {
    %c0_i32 = arith.constant 0 : i32
    %c0_i32_0 = arith.constant 0 : i32
    %c0_i32_1 = arith.constant 0 : i32
    return %c0_i32, %c0_i32_0 : i32, i32
  }
  func.func @transform_8(%arg0: i32) -> (i32, i32) {
    %c0_i32 = arith.constant 0 : i32
    %c0_i32_0 = arith.constant 0 : i32
    %c0_i32_1 = arith.constant 0 : i32
    return %c0_i32, %c0_i32_0 : i32, i32
  }
  func.func @transform_9(%arg0: i32) -> (i32, i32) {
    %c0_i32 = arith.constant 0 : i32
    %c0_i32_0 = arith.constant 0 : i32
    %c0_i32_1 = arith.constant 0 : i32
    return %c0_i32, %c0_i32_0 : i32, i32
  }
  func.func @transform_10(%arg0: i32) -> (i32, i32) {
    %c0_i32 = arith.constant 0 : i32
    %c0_i32_0 = arith.constant 0 : i32
    %c0_i32_1 = arith.constant 0 : i32
    return %c0_i32, %c0_i32_0 : i32, i32
  }
  func.func @transform_11(%arg0: i32) -> (i32, i32) {
    %c0_i32 = arith.constant 0 : i32
    %c0_i32_0 = arith.constant 0 : i32
    %c0_i32_1 = arith.constant 0 : i32
    return %c0_i32, %c0_i32_0 : i32, i32
  }
  func.func @transform_12(%arg0: i32) -> (i32, i32) {
    %c0_i32 = arith.constant 0 : i32
    %c0_i32_0 = arith.constant 0 : i32
    %c0_i32_1 = arith.constant 0 : i32
    return %c0_i32, %c0_i32_0 : i32, i32
  }
  func.func @transform_13(%arg0: i32) -> (i32, i32) {
    %c0_i32 = arith.constant 0 : i32
    %c0_i32_0 = arith.constant 0 : i32
    %c0_i32_1 = arith.constant 0 : i32
    return %c0_i32, %c0_i32_0 : i32, i32
  }
  func.func @transform_14(%arg0: i32) -> (i32, i32) {
    %c0_i32 = arith.constant 0 : i32
    %c0_i32_0 = arith.constant 0 : i32
    %c0_i32_1 = arith.constant 0 : i32
    return %c0_i32, %c0_i32_0 : i32, i32
  }
  func.func @transform_15(%arg0: i32) -> (i32, i32) {
    %c0_i32 = arith.constant 0 : i32
    %c0_i32_0 = arith.constant 0 : i32
    %c0_i32_1 = arith.constant 0 : i32
    return %c0_i32, %c0_i32_0 : i32, i32
  }
  func.func @transform_16(%arg0: i32) -> (i32, i32) {
    %c0_i32 = arith.constant 0 : i32
    %c0_i32_0 = arith.constant 0 : i32
    %c0_i32_1 = arith.constant 0 : i32
    return %c0_i32, %c0_i32_0 : i32, i32
  }
  func.func @transform_17(%arg0: i32) -> (i32, i32) {
    %c0_i32 = arith.constant 0 : i32
    %c0_i32_0 = arith.constant 0 : i32
    %c0_i32_1 = arith.constant 0 : i32
    return %c0_i32, %c0_i32_0 : i32, i32
  }
  func.func @transform_18(%arg0: i32) -> (i32, i32) {
    %c0_i32 = arith.constant 0 : i32
    %c0_i32_0 = arith.constant 0 : i32
    %c0_i32_1 = arith.constant 0 : i32
    return %c0_i32, %c0_i32_0 : i32, i32
  }
  func.func @transform_19(%arg0: i32) -> (i32, i32) {
    %c0_i32 = arith.constant 0 : i32
    %c0_i32_0 = arith.constant 0 : i32
    %c0_i32_1 = arith.constant 0 : i32
    return %c0_i32, %c0_i32_0 : i32, i32
  }
  func.func @transform_20(%arg0: i32) -> (i32, i32) {
    %c0_i32 = arith.constant 0 : i32
    %c0_i32_0 = arith.constant 0 : i32
    %c0_i32_1 = arith.constant 0 : i32
    return %c0_i32, %c0_i32_0 : i32, i32
  }
  func.func @transform_21(%arg0: i32) -> (i32, i32) {
    %c0_i32 = arith.constant 0 : i32
    %c0_i32_0 = arith.constant 0 : i32
    %c0_i32_1 = arith.constant 0 : i32
    return %c0_i32, %c0_i32_0 : i32, i32
  }
  func.func @transform_22(%arg0: i32) -> (i32, i32) {
    %c0_i32 = arith.constant 0 : i32
    %c0_i32_0 = arith.constant 0 : i32
    %c0_i32_1 = arith.constant 0 : i32
    return %c0_i32, %c0_i32_0 : i32, i32
  }
  func.func @transform_23(%arg0: i32) -> (i32, i32) {
    %c0_i32 = arith.constant 0 : i32
    %c0_i32_0 = arith.constant 0 : i32
    %c0_i32_1 = arith.constant 0 : i32
    return %c0_i32, %c0_i32_0 : i32, i32
  }
  func.func @transform_24(%arg0: i32) -> (i32, i32, i32) {
    %c0_i32 = arith.constant 0 : i32
    %c0_i32_0 = arith.constant 0 : i32
    %c0_i32_1 = arith.constant 0 : i32
    return %arg0, %c0_i32, %c0_i32_0 : i32, i32, i32
  }
}

</mosaic_0001>

<llo_original>
// kernel: parametric_unet_forward.1
$region0: #{parametric_unet_forward.1}
  #allocation0 [shape = 'u32[]', space=smem, size = 0x4, offset = 0x4, fixed_abs, tag = 'smem constant byte address 0x4 - core index']
  #allocation1 [shape = 'u32[144,128]{1,0:T(1,128)}', space=vmem, size = 0x12000, scoped, tag = 'internal scratch']
  #allocation2 [shape = 'f32[32,512]{1,0:T(8,128)}', space=vmem, size = 0x10000, scoped, tag = 'scratch operand']
  #allocation3 [shape = 'f32[288,256]{1,0:T(8,128)}', space=vmem, size = 0x48000, scoped, tag = 'scratch operand']
  #allocation4 [shape = 'f32[32,256]{1,0:T(8,128)}', space=vmem, size = 0x8000, scoped, tag = 'scratch operand']
  %s0 = inlined_call_operand.vmem [shape: f32[2,8,256], index: 0, kind: input, shape index: {}]
  %s1 = inlined_call_operand.vmem [shape: f32[9,1,256], index: 1, kind: input, shape index: {}]
  %s2 = inlined_call_operand.vmem [shape: f32[9,1,64], index: 2, kind: input, shape index: {}]
  %s3 = inlined_call_operand.vmem [shape: f32[9,1,16], index: 3, kind: input, shape index: {}]
  %s4 = inlined_call_operand.vmem [shape: f32[256,256], index: 4, kind: input, shape index: {}]
  %s5 = inlined_call_operand.vmem [shape: f32[64,64], index: 5, kind: input, shape index: {}]
  %s6 = inlined_call_operand.vmem [shape: f32[64,64], index: 6, kind: input, shape index: {}]
  %s7 = inlined_call_operand.vmem [shape: f32[256,256], index: 7, kind: input, shape index: {}]
  %s8 = inlined_call_operand.vmem [shape: f32[8,72], index: 8, kind: input, shape index: {}]
  %s9 = inlined_call_operand.vmem [shape: f32[8,1], index: 9, kind: input, shape index: {}]
  %s10 = inlined_call_operand.vmem [shape: f32[16,72], index: 10, kind: input, shape index: {}]
  %s11 = inlined_call_operand.vmem [shape: f32[16,1], index: 11, kind: input, shape index: {}]
  %s12 = inlined_call_operand.vmem [shape: f32[32,144], index: 12, kind: input, shape index: {}]
  %s13 = inlined_call_operand.vmem [shape: f32[32,1], index: 13, kind: input, shape index: {}]
  %s14 = inlined_call_operand.vmem [shape: f32[64,32], index: 14, kind: input, shape index: {}]
  %s15 = inlined_call_operand.vmem [shape: f32[16,1], index: 15, kind: input, shape index: {}]
  %s16 = inlined_call_operand.vmem [shape: f32[16,288], index: 16, kind: input, shape index: {}]
  %s17 = inlined_call_operand.vmem [shape: f32[16,1], index: 17, kind: input, shape index: {}]
  %s18 = inlined_call_operand.vmem [shape: f32[32,16], index: 18, kind: input, shape index: {}]
  %s19 = inlined_call_operand.vmem [shape: f32[8,1], index: 19, kind: input, shape index: {}]
  %s20 = inlined_call_operand.vmem [shape: f32[8,144], index: 20, kind: input, shape index: {}]
  %s21 = inlined_call_operand.vmem [shape: f32[8,1], index: 21, kind: input, shape index: {}]
  %s22 = inlined_call_operand.vmem [shape: f32[8,8], index: 22, kind: input, shape index: {}]
  %s23 = inlined_call_operand.vmem [shape: f32[8,1], index: 23, kind: input, shape index: {}]
  %s24 = inlined_call_operand.vmem [shape: f32[2,8,256], index: 24, kind: output, shape index: {}]
  %s25 = sld [smem:[#allocation0]]
  $region129: #{parametric_unet_forward.1} parent=0
    _
  %s27 = ssub.s32 1, %s25
  %s28 = scalar_select 0, %s27, %s25
  loop: start=0, step=1, limit=4
  $region2: #{parametric_unet_forward.1} parent=0 // loop_pre_header
    _
  $region3: #{parametric_unet_forward.1} parent=0 // loop_header
    %s30 = sphi 0, %s34
    %p31 = scmp.ge.s32.totalorder %s30, 4
    %s40 = sphi 0, %s42
    %s43 = sphi 0, %s40
    %s44 = sphi 0, %s43
    %s60 = sphi 0, %s44
    %s64 = sphi 0, %s64
    %s66 = sphi 0, %s64
    %s67 = sphi 0, %s66
    %s81 = sphi 0, %s67
    %s85 = sphi 0, %s85
    %s87 = sphi 0, %s85
    %s88 = sphi 0, %s87
    %s102 = sphi 0, %s88
    %s106 = sphi 0, %s106
    %s108 = sphi 0, %s106
    %s109 = sphi 0, %s108
    %s123 = sphi 0, %s109
    %s127 = sphi 0, %s127
    %s129 = sphi 0, %s127
    %s130 = sphi 0, %s129
    %s144 = sphi 0, %s130
    %s148 = sphi 0, %s148
    %s150 = sphi 0, %s148
    %s151 = sphi 0, %s150
    %s165 = sphi 0, %s151
    %s169 = sphi 0, %s169
    %s171 = sphi 0, %s169
    %s172 = sphi 0, %s171
    %s186 = sphi 0, %s172
    %s190 = sphi 0, %s190
    %s192 = sphi 0, %s190
    %s193 = sphi 0, %s192
    %s207 = sphi 0, %s193
    %s211 = sphi 0, %s211
    %s213 = sphi 0, %s211
    %s214 = sphi 0, %s213
    %s228 = sphi 0, %s214
    %s232 = sphi 0, %s232
    %s234 = sphi 0, %s232
    %s235 = sphi 0, %s234
    %s249 = sphi 0, %s235
    %s253 = sphi 0, %s253
    %s255 = sphi 0, %s253
    %s256 = sphi 0, %s255
    %s270 = sphi 0, %s256
    %s274 = sphi 0, %s274
    %s276 = sphi 0, %s274
    %s277 = sphi 0, %s276
    %s291 = sphi 0, %s277
    %s295 = sphi 0, %s295
    %s297 = sphi 0, %s295
    %s298 = sphi 0, %s297
    %s312 = sphi 0, %s298
    %s316 = sphi 0, %s316
    %s318 = sphi 0, %s316
    %s319 = sphi 0, %s318
    %s333 = sphi 0, %s319
    %s337 = sphi 0, %s337
    %s339 = sphi 0, %s337
    %s340 = sphi 0, %s339
    %s354 = sphi 0, %s340
    %s358 = sphi 0, %s358
    %s360 = sphi 0, %s358
    %s361 = sphi 0, %s360
    %s375 = sphi 0, %s361
    %s379 = sphi 0, %s379
    %s381 = sphi 0, %s379
    %s382 = sphi 0, %s381
    %s396 = sphi 0, %s382
    %s400 = sphi 0, %s400
    %s402 = sphi 0, %s400
    %s403 = sphi 0, %s402
    %s417 = sphi 0, %s403
    %s421 = sphi 0, %s421
    %s423 = sphi 0, %s421
    %s424 = sphi 0, %s423
    %s438 = sphi 0, %s424
    %s442 = sphi 0, %s442
    %s444 = sphi 0, %s442
    %s445 = sphi 0, %s444
    %s459 = sphi 0, %s445
    %s463 = sphi 0, %s463
    %s465 = sphi 0, %s463
    %s466 = sphi 0, %s465
    %s480 = sphi 0, %s466
    %s484 = sphi 0, %s484
    %s486 = sphi 0, %s484
    %s487 = sphi 0, %s486
    %s501 = sphi 0, %s487
    %s505 = sphi 0, %s505
    %s507 = sphi 0, %s505
    %s508 = sphi 0, %s507
    %s522 = sphi 0, %s508
    %s526 = sphi 0, %s526
    %s528 = sphi 0, %s526
    %s529 = sphi 0, %s528
    %s543 = sphi 0, %s529
    %s549 = sphi 0, %s551
    %s552 = sphi 0, %s549
    %s553 = sphi 0, %s552
    %s569 = sphi 0, %s553
  $region4: #{parametric_unet_forward.1} parent=0 // loop_header_branch
    %33 = sbr.rel (%p31) target = $region8
  $region5: #{parametric_unet_forward.1} parent=0 // loop_body
    %s35 = ssub.s32 %s30, 1
    %s36 = ssub.s32 %s30, 2
    %s37 = sadd.s32 %s30, 1
    %s38 = ssub.s32 %s30, %s37
    %p39 = scmp.eq.s32.totalorder %s38, 0
    %s41 = sadd.s32 %s40, 1
    %s42 = scalar_select %p39, %s40, %s41
    %p45 = pneg %p39
    %p46 = scmp.eq.s32.totalorder %s30, 1
    %p47 = por %p45, %p46
    %p48 = scmp.ne.s32.totalorder %s40, %s43
    %p49 = scmp.eq.s32.totalorder %s30, 0
    %p50 = por %p48, %p49
    %p51 = scmp.ne.s32.totalorder %s40, %s43
    %p52 = scmp.eq.s32.totalorder %s35, 1
    %p53 = por %p51, %p52
    %p54 = scmp.ne.s32.totalorder %s43, %s44
    %p55 = scmp.eq.s32.totalorder %s35, 0
    %p56 = por %p54, %p55
    %p57 = scmp.ne.s32.totalorder %s43, %s44
    %p58 = scmp.eq.s32.totalorder %s36, 1
    %p59 = por %p57, %p58
    %p61 = scmp.ne.s32.totalorder %s44, %s60
    %p62 = scmp.eq.s32.totalorder %s36, 0
    %p63 = por %p61, %p62
    %s65 = sadd.s32 %s64, 1
    %p68 = scmp.eq.s32.totalorder %s30, 1
    %p69 = scmp.ne.s32.totalorder %s64, %s66
    %p70 = scmp.eq.s32.totalorder %s30, 0
    %p71 = por %p69, %p70
    %p72 = scmp.ne.s32.totalorder %s64, %s66
    %p73 = scmp.eq.s32.totalorder %s35, 1
    %p74 = por %p72, %p73
    %p75 = scmp.ne.s32.totalorder %s66, %s67
    %p76 = scmp.eq.s32.totalorder %s35, 0
    %p77 = por %p75, %p76
    %p78 = scmp.ne.s32.totalorder %s66, %s67
    %p79 = scmp.eq.s32.totalorder %s36, 1
    %p80 = por %p78, %p79
    %p82 = scmp.ne.s32.totalorder %s67, %s81
    %p83 = scmp.eq.s32.totalorder %s36, 0
    %p84 = por %p82, %p83
    %s86 = sadd.s32 %s85, 1
    %p89 = scmp.eq.s32.totalorder %s30, 1
    %p90 = scmp.ne.s32.totalorder %s85, %s87
    %p91 = scmp.eq.s32.totalorder %s30, 0
    %p92 = por %p90, %p91
    %p93 = scmp.ne.s32.totalorder %s85, %s87
    %p94 = scmp.eq.s32.totalorder %s35, 1
    %p95 = por %p93, %p94
    %p96 = scmp.ne.s32.totalorder %s87, %s88
    %p97 = scmp.eq.s32.totalorder %s35, 0
    %p98 = por %p96, %p97
    %p99 = scmp.ne.s32.totalorder %s87, %s88
    %p100 = scmp.eq.s32.totalorder %s36, 1
    %p101 = por %p99, %p100
    %p103 = scmp.ne.s32.totalorder %s88, %s102
    %p104 = scmp.eq.s32.totalorder %s36, 0
    %p105 = por %p103, %p104
    %s107 = sadd.s32 %s106, 1
    %p110 = scmp.eq.s32.totalorder %s30, 1
    %p111 = scmp.ne.s32.totalorder %s106, %s108
    %p112 = scmp.eq.s32.totalorder %s30, 0
    %p113 = por %p111, %p112
    %p114 = scmp.ne.s32.totalorder %s106, %s108
    %p115 = scmp.eq.s32.totalorder %s35, 1
    %p116 = por %p114, %p115
    %p117 = scmp.ne.s32.totalorder %s108, %s109
    %p118 = scmp.eq.s32.totalorder %s35, 0
    %p119 = por %p117, %p118
    %p120 = scmp.ne.s32.totalorder %s108, %s109
    %p121 = scmp.eq.s32.totalorder %s36, 1
    %p122 = por %p120, %p121
    %p124 = scmp.ne.s32.totalorder %s109, %s123
    %p125 = scmp.eq.s32.totalorder %s36, 0
    %p126 = por %p124, %p125
    %s128 = sadd.s32 %s127, 1
    %p131 = scmp.eq.s32.totalorder %s30, 1
    %p132 = scmp.ne.s32.totalorder %s127, %s129
    %p133 = scmp.eq.s32.totalorder %s30, 0
    %p134 = por %p132, %p133
    %p135 = scmp.ne.s32.totalorder %s127, %s129
    %p136 = scmp.eq.s32.totalorder %s35, 1
    %p137 = por %p135, %p136
    %p138 = scmp.ne.s32.totalorder %s129, %s130
    %p139 = scmp.eq.s32.totalorder %s35, 0
    %p140 = por %p138, %p139
    %p141 = scmp.ne.s32.totalorder %s129, %s130
    %p142 = scmp.eq.s32.totalorder %s36, 1
    %p143 = por %p141, %p142
    %p145 = scmp.ne.s32.totalorder %s130, %s144
    %p146 = scmp.eq.s32.totalorder %s36, 0
    %p147 = por %p145, %p146
    %s149 = sadd.s32 %s148, 1
    %p152 = scmp.eq.s32.totalorder %s30, 1
    %p153 = scmp.ne.s32.totalorder %s148, %s150
    %p154 = scmp.eq.s32.totalorder %s30, 0
    %p155 = por %p153, %p154
    %p156 = scmp.ne.s32.totalorder %s148, %s150
    %p157 = scmp.eq.s32.totalorder %s35, 1
    %p158 = por %p156, %p157
    %p159 = scmp.ne.s32.totalorder %s150, %s151
    %p160 = scmp.eq.s32.totalorder %s35, 0
    %p161 = por %p159, %p160
    %p162 = scmp.ne.s32.totalorder %s150, %s151
    %p163 = scmp.eq.s32.totalorder %s36, 1
    %p164 = por %p162, %p163
    %p166 = scmp.ne.s32.totalorder %s151, %s165
    %p167 = scmp.eq.s32.totalorder %s36, 0
    %p168 = por %p166, %p167
    %s170 = sadd.s32 %s169, 1
    %p173 = scmp.eq.s32.totalorder %s30, 1
    %p174 = scmp.ne.s32.totalorder %s169, %s171
    %p175 = scmp.eq.s32.totalorder %s30, 0
    %p176 = por %p174, %p175
    %p177 = scmp.ne.s32.totalorder %s169, %s171
    %p178 = scmp.eq.s32.totalorder %s35, 1
    %p179 = por %p177, %p178
    %p180 = scmp.ne.s32.totalorder %s171, %s172
    %p181 = scmp.eq.s32.totalorder %s35, 0
    %p182 = por %p180, %p181
    %p183 = scmp.ne.s32.totalorder %s171, %s172
    %p184 = scmp.eq.s32.totalorder %s36, 1
    %p185 = por %p183, %p184
    %p187 = scmp.ne.s32.totalorder %s172, %s186
    %p188 = scmp.eq.s32.totalorder %s36, 0
    %p189 = por %p187, %p188
    %s191 = sadd.s32 %s190, 1
    %p194 = scmp.eq.s32.totalorder %s30, 1
    %p195 = scmp.ne.s32.totalorder %s190, %s192
    %p196 = scmp.eq.s32.totalorder %s30, 0
    %p197 = por %p195, %p196
    %p198 = scmp.ne.s32.totalorder %s190, %s192
    %p199 = scmp.eq.s32.totalorder %s35, 1
    %p200 = por %p198, %p199
    %p201 = scmp.ne.s32.totalorder %s192, %s193
    %p202 = scmp.eq.s32.totalorder %s35, 0
    %p203 = por %p201, %p202
    %p204 = scmp.ne.s32.totalorder %s192, %s193
    %p205 = scmp.eq.s32.totalorder %s36, 1
    %p206 = por %p204, %p205
    %p208 = scmp.ne.s32.totalorder %s193, %s207
    %p209 = scmp.eq.s32.totalorder %s36, 0
    %p210 = por %p208, %p209
    %s212 = sadd.s32 %s211, 1
    %p215 = scmp.eq.s32.totalorder %s30, 1
    %p216 = scmp.ne.s32.totalorder %s211, %s213
    %p217 = scmp.eq.s32.totalorder %s30, 0
    %p218 = por %p216, %p217
    %p219 = scmp.ne.s32.totalorder %s211, %s213
    %p220 = scmp.eq.s32.totalorder %s35, 1
    %p221 = por %p219, %p220
    %p222 = scmp.ne.s32.totalorder %s213, %s214
    %p223 = scmp.eq.s32.totalorder %s35, 0
    %p224 = por %p222, %p223
    %p225 = scmp.ne.s32.totalorder %s213, %s214
    %p226 = scmp.eq.s32.totalorder %s36, 1
    %p227 = por %p225, %p226
    %p229 = scmp.ne.s32.totalorder %s214, %s228
    %p230 = scmp.eq.s32.totalorder %s36, 0
    %p231 = por %p229, %p230
    %s233 = sadd.s32 %s232, 1
    %p236 = scmp.eq.s32.totalorder %s30, 1
    %p237 = scmp.ne.s32.totalorder %s232, %s234
    %p238 = scmp.eq.s32.totalorder %s30, 0
    %p239 = por %p237, %p238
    %p240 = scmp.ne.s32.totalorder %s232, %s234
    %p241 = scmp.eq.s32.totalorder %s35, 1
    %p242 = por %p240, %p241
    %p243 = scmp.ne.s32.totalorder %s234, %s235
    %p244 = scmp.eq.s32.totalorder %s35, 0
    %p245 = por %p243, %p244
    %p246 = scmp.ne.s32.totalorder %s234, %s235
    %p247 = scmp.eq.s32.totalorder %s36, 1
    %p248 = por %p246, %p247
    %p250 = scmp.ne.s32.totalorder %s235, %s249
    %p251 = scmp.eq.s32.totalorder %s36, 0
    %p252 = por %p250, %p251
    %s254 = sadd.s32 %s253, 1
    %p257 = scmp.eq.s32.totalorder %s30, 1
    %p258 = scmp.ne.s32.totalorder %s253, %s255
    %p259 = scmp.eq.s32.totalorder %s30, 0
    %p260 = por %p258, %p259
    %p261 = scmp.ne.s32.totalorder %s253, %s255
    %p262 = scmp.eq.s32.totalorder %s35, 1
    %p263 = por %p261, %p262
    %p264 = scmp.ne.s32.totalorder %s255, %s256
    %p265 = scmp.eq.s32.totalorder %s35, 0
    %p266 = por %p264, %p265
    %p267 = scmp.ne.s32.totalorder %s255, %s256
    %p268 = scmp.eq.s32.totalorder %s36, 1
    %p269 = por %p267, %p268
    %p271 = scmp.ne.s32.totalorder %s256, %s270
    %p272 = scmp.eq.s32.totalorder %s36, 0
    %p273 = por %p271, %p272
    %s275 = sadd.s32 %s274, 1
    %p278 = scmp.eq.s32.totalorder %s30, 1
    %p279 = scmp.ne.s32.totalorder %s274, %s276
    %p280 = scmp.eq.s32.totalorder %s30, 0
    %p281 = por %p279, %p280
    %p282 = scmp.ne.s32.totalorder %s274, %s276
    %p283 = scmp.eq.s32.totalorder %s35, 1
    %p284 = por %p282, %p283
    %p285 = scmp.ne.s32.totalorder %s276, %s277
    %p286 = scmp.eq.s32.totalorder %s35, 0
    %p287 = por %p285, %p286
    %p288 = scmp.ne.s32.totalorder %s276, %s277
    %p289 = scmp.eq.s32.totalorder %s36, 1
    %p290 = por %p288, %p289
    %p292 = scmp.ne.s32.totalorder %s277, %s291
    %p293 = scmp.eq.s32.totalorder %s36, 0
    %p294 = por %p292, %p293
    %s296 = sadd.s32 %s295, 1
    %p299 = scmp.eq.s32.totalorder %s30, 1
    %p300 = scmp.ne.s32.totalorder %s295, %s297
    %p301 = scmp.eq.s32.totalorder %s30, 0
    %p302 = por %p300, %p301
    %p303 = scmp.ne.s32.totalorder %s295, %s297
    %p304 = scmp.eq.s32.totalorder %s35, 1
    %p305 = por %p303, %p304
    %p306 = scmp.ne.s32.totalorder %s297, %s298
    %p307 = scmp.eq.s32.totalorder %s35, 0
    %p308 = por %p306, %p307
    %p309 = scmp.ne.s32.totalorder %s297, %s298
    %p310 = scmp.eq.s32.totalorder %s36, 1
    %p311 = por %p309, %p310
    %p313 = scmp.ne.s32.totalorder %s298, %s312
    %p314 = scmp.eq.s32.totalorder %s36, 0
    %p315 = por %p313, %p314
    %s317 = sadd.s32 %s316, 1
    %p320 = scmp.eq.s32.totalorder %s30, 1
    %p321 = scmp.ne.s32.totalorder %s316, %s318
    %p322 = scmp.eq.s32.totalorder %s30, 0
    %p323 = por %p321, %p322
    %p324 = scmp.ne.s32.totalorder %s316, %s318
    %p325 = scmp.eq.s32.totalorder %s35, 1
    %p326 = por %p324, %p325
    %p327 = scmp.ne.s32.totalorder %s318, %s319
    %p328 = scmp.eq.s32.totalorder %s35, 0
    %p329 = por %p327, %p328
    %p330 = scmp.ne.s32.totalorder %s318, %s319
    %p331 = scmp.eq.s32.totalorder %s36, 1
    %p332 = por %p330, %p331
    %p334 = scmp.ne.s32.totalorder %s319, %s333
    %p335 = scmp.eq.s32.totalorder %s36, 0
    %p336 = por %p334, %p335
    %s338 = sadd.s32 %s337, 1
    %p341 = scmp.eq.s32.totalorder %s30, 1
    %p342 = scmp.ne.s32.totalorder %s337, %s339
    %p343 = scmp.eq.s32.totalorder %s30, 0
    %p344 = por %p342, %p343
    %p345 = scmp.ne.s32.totalorder %s337, %s339
    %p346 = scmp.eq.s32.totalorder %s35, 1
    %p347 = por %p345, %p346
    %p348 = scmp.ne.s32.totalorder %s339, %s340
    %p349 = scmp.eq.s32.totalorder %s35, 0
    %p350 = por %p348, %p349
    %p351 = scmp.ne.s32.totalorder %s339, %s340
    %p352 = scmp.eq.s32.totalorder %s36, 1
    %p353 = por %p351, %p352
    %p355 = scmp.ne.s32.totalorder %s340, %s354
    %p356 = scmp.eq.s32.totalorder %s36, 0
    %p357 = por %p355, %p356
    %s359 = sadd.s32 %s358, 1
    %p362 = scmp.eq.s32.totalorder %s30, 1
    %p363 = scmp.ne.s32.totalorder %s358, %s360
    %p364 = scmp.eq.s32.totalorder %s30, 0
    %p365 = por %p363, %p364
    %p366 = scmp.ne.s32.totalorder %s358, %s360
    %p367 = scmp.eq.s32.totalorder %s35, 1
    %p368 = por %p366, %p367
    %p369 = scmp.ne.s32.totalorder %s360, %s361
    %p370 = scmp.eq.s32.totalorder %s35, 0
    %p371 = por %p369, %p370
    %p372 = scmp.ne.s32.totalorder %s360, %s361
    %p373 = scmp.eq.s32.totalorder %s36, 1
    %p374 = por %p372, %p373
    %p376 = scmp.ne.s32.totalorder %s361, %s375
    %p377 = scmp.eq.s32.totalorder %s36, 0
    %p378 = por %p376, %p377
    %s380 = sadd.s32 %s379, 1
    %p383 = scmp.eq.s32.totalorder %s30, 1
    %p384 = scmp.ne.s32.totalorder %s379, %s381
    %p385 = scmp.eq.s32.totalorder %s30, 0
    %p386 = por %p384, %p385
    %p387 = scmp.ne.s32.totalorder %s379, %s381
    %p388 = scmp.eq.s32.totalorder %s35, 1
    %p389 = por %p387, %p388
    %p390 = scmp.ne.s32.totalorder %s381, %s382
    %p391 = scmp.eq.s32.totalorder %s35, 0
    %p392 = por %p390, %p391
    %p393 = scmp.ne.s32.totalorder %s381, %s382
    %p394 = scmp.eq.s32.totalorder %s36, 1
    %p395 = por %p393, %p394
    %p397 = scmp.ne.s32.totalorder %s382, %s396
    %p398 = scmp.eq.s32.totalorder %s36, 0
    %p399 = por %p397, %p398
    %s401 = sadd.s32 %s400, 1
    %p404 = scmp.eq.s32.totalorder %s30, 1
    %p405 = scmp.ne.s32.totalorder %s400, %s402
    %p406 = scmp.eq.s32.totalorder %s30, 0
    %p407 = por %p405, %p406
    %p408 = scmp.ne.s32.totalorder %s400, %s402
    %p409 = scmp.eq.s32.totalorder %s35, 1
    %p410 = por %p408, %p409
    %p411 = scmp.ne.s32.totalorder %s402, %s403
    %p412 = scmp.eq.s32.totalorder %s35, 0
    %p413 = por %p411, %p412
    %p414 = scmp.ne.s32.totalorder %s402, %s403
    %p415 = scmp.eq.s32.totalorder %s36, 1
    %p416 = por %p414, %p415
    %p418 = scmp.ne.s32.totalorder %s403, %s417
    %p419 = scmp.eq.s32.totalorder %s36, 0
    %p420 = por %p418, %p419
    %s422 = sadd.s32 %s421, 1
    %p425 = scmp.eq.s32.totalorder %s30, 1
    %p426 = scmp.ne.s32.totalorder %s421, %s423
    %p427 = scmp.eq.s32.totalorder %s30, 0
    %p428 = por %p426, %p427
    %p429 = scmp.ne.s32.totalorder %s421, %s423
    %p430 = scmp.eq.s32.totalorder %s35, 1
    %p431 = por %p429, %p430
    %p432 = scmp.ne.s32.totalorder %s423, %s424
    %p433 = scmp.eq.s32.totalorder %s35, 0
    %p434 = por %p432, %p433
    %p435 = scmp.ne.s32.totalorder %s423, %s424
    %p436 = scmp.eq.s32.totalorder %s36, 1
    %p437 = por %p435, %p436
    %p439 = scmp.ne.s32.totalorder %s424, %s438
    %p440 = scmp.eq.s32.totalorder %s36, 0
    %p441 = por %p439, %p440
    %s443 = sadd.s32 %s442, 1
    %p446 = scmp.eq.s32.totalorder %s30, 1
    %p447 = scmp.ne.s32.totalorder %s442, %s444
    %p448 = scmp.eq.s32.totalorder %s30, 0
    %p449 = por %p447, %p448
    %p450 = scmp.ne.s32.totalorder %s442, %s444
    %p451 = scmp.eq.s32.totalorder %s35, 1
    %p452 = por %p450, %p451
    %p453 = scmp.ne.s32.totalorder %s444, %s445
    %p454 = scmp.eq.s32.totalorder %s35, 0
    %p455 = por %p453, %p454
    %p456 = scmp.ne.s32.totalorder %s444, %s445
    %p457 = scmp.eq.s32.totalorder %s36, 1
    %p458 = por %p456, %p457
    %p460 = scmp.ne.s32.totalorder %s445, %s459
    %p461 = scmp.eq.s32.totalorder %s36, 0
    %p462 = por %p460, %p461
    %s464 = sadd.s32 %s463, 1
    %p467 = scmp.eq.s32.totalorder %s30, 1
    %p468 = scmp.ne.s32.totalorder %s463, %s465
    %p469 = scmp.eq.s32.totalorder %s30, 0
    %p470 = por %p468, %p469
    %p471 = scmp.ne.s32.totalorder %s463, %s465
    %p472 = scmp.eq.s32.totalorder %s35, 1
    %p473 = por %p471, %p472
    %p474 = scmp.ne.s32.totalorder %s465, %s466
    %p475 = scmp.eq.s32.totalorder %s35, 0
    %p476 = por %p474, %p475
    %p477 = scmp.ne.s32.totalorder %s465, %s466
    %p478 = scmp.eq.s32.totalorder %s36, 1
    %p479 = por %p477, %p478
    %p481 = scmp.ne.s32.totalorder %s466, %s480
    %p482 = scmp.eq.s32.totalorder %s36, 0
    %p483 = por %p481, %p482
    %s485 = sadd.s32 %s484, 1
    %p488 = scmp.eq.s32.totalorder %s30, 1
    %p489 = scmp.ne.s32.totalorder %s484, %s486
    %p490 = scmp.eq.s32.totalorder %s30, 0
    %p491 = por %p489, %p490
    %p492 = scmp.ne.s32.totalorder %s484, %s486
    %p493 = scmp.eq.s32.totalorder %s35, 1
    %p494 = por %p492, %p493
    %p495 = scmp.ne.s32.totalorder %s486, %s487
    %p496 = scmp.eq.s32.totalorder %s35, 0
    %p497 = por %p495, %p496
    %p498 = scmp.ne.s32.totalorder %s486, %s487
    %p499 = scmp.eq.s32.totalorder %s36, 1
    %p500 = por %p498, %p499
    %p502 = scmp.ne.s32.totalorder %s487, %s501
    %p503 = scmp.eq.s32.totalorder %s36, 0
    %p504 = por %p502, %p503
    %s506 = sadd.s32 %s505, 1
    %p509 = scmp.eq.s32.totalorder %s30, 1
    %p510 = scmp.ne.s32.totalorder %s505, %s507
    %p511 = scmp.eq.s32.totalorder %s30, 0
    %p512 = por %p510, %p511
    %p513 = scmp.ne.s32.totalorder %s505, %s507
    %p514 = scmp.eq.s32.totalorder %s35, 1
    %p515 = por %p513, %p514
    %p516 = scmp.ne.s32.totalorder %s507, %s508
    %p517 = scmp.eq.s32.totalorder %s35, 0
    %p518 = por %p516, %p517
    %p519 = scmp.ne.s32.totalorder %s507, %s508
    %p520 = scmp.eq.s32.totalorder %s36, 1
    %p521 = por %p519, %p520
    %p523 = scmp.ne.s32.totalorder %s508, %s522
    %p524 = scmp.eq.s32.totalorder %s36, 0
    %p525 = por %p523, %p524
    %s527 = sadd.s32 %s526, 1
    %p530 = scmp.eq.s32.totalorder %s30, 1
    %p531 = scmp.ne.s32.totalorder %s526, %s528
    %p532 = scmp.eq.s32.totalorder %s30, 0
    %p533 = por %p531, %p532
    %p534 = scmp.ne.s32.totalorder %s526, %s528
    %p535 = scmp.eq.s32.totalorder %s35, 1
    %p536 = por %p534, %p535
    %p537 = scmp.ne.s32.totalorder %s528, %s529
    %p538 = scmp.eq.s32.totalorder %s35, 0
    %p539 = por %p537, %p538
    %p540 = scmp.ne.s32.totalorder %s528, %s529
    %p541 = scmp.eq.s32.totalorder %s36, 1
    %p542 = por %p540, %p541
    %p544 = scmp.ne.s32.totalorder %s529, %s543
    %p545 = scmp.eq.s32.totalorder %s36, 0
    %p546 = por %p544, %p545
    %s547 = ssub.s32 %s30, %s37
    %p548 = scmp.eq.s32.totalorder %s547, 0
    %s550 = sadd.s32 %s549, 1
    %s551 = scalar_select %p548, %s549, %s550
    %p554 = pneg %p548
    %p555 = scmp.eq.s32.totalorder %s30, 1
    %p556 = por %p554, %p555
    %p557 = scmp.ne.s32.totalorder %s549, %s552
    %p558 = scmp.eq.s32.totalorder %s30, 0
    %p559 = por %p557, %p558
    %p560 = scmp.ne.s32.totalorder %s549, %s552
    %p561 = scmp.eq.s32.totalorder %s35, 1
    %p562 = por %p560, %p561
    %p563 = scmp.ne.s32.totalorder %s552, %s553
    %p564 = scmp.eq.s32.totalorder %s35, 0
    %p565 = por %p563, %p564
    %p566 = scmp.ne.s32.totalorder %s552, %s553
    %p567 = scmp.eq.s32.totalorder %s36, 1
    %p568 = por %p566, %p567
    %p570 = scmp.ne.s32.totalorder %s553, %s569
    %p571 = scmp.eq.s32.totalorder %s36, 0
    %p572 = por %p570, %p571
    %p573 = scmp.le.s32.totalorder 1, %s30
    %p574 = scmp.lt.s32.totalorder %s30, 3
    %p575 = pnand %p573, %p574
    %p576 = pneg %p575
    // Predicated region
    $region9: #{parametric_unet_forward.1} parent=5 // pred_check
      _
    $region10: #{parametric_unet_forward.1} parent=5 // pred_check_branch
      %578 = sbr.rel (%p575) target = $region12
    $region11: #{parametric_unet_forward.1} parent=5 // pred_region
      %s579 = ssub.s32 %s30, 1
      // Predicated region
      $region13: #{parametric_unet_forward.1} parent=11 // pred_check
        %p580 = pneg %p77
      $region14: #{parametric_unet_forward.1} parent=11 // pred_check_branch
        %582 = sbr.rel (%p580) target = $region16
      $region15: #{parametric_unet_forward.1} parent=11 // pred_region
        _
      $region16: #{parametric_unet_forward.1} parent=11 // pred_fallthru
        _
      // Predicated region
      $region17: #{parametric_unet_forward.1} parent=11 // pred_check
        %p583 = pneg %p98
      $region18: #{parametric_unet_forward.1} parent=11 // pred_check_branch
        %585 = sbr.rel (%p583) target = $region20
      $region19: #{parametric_unet_forward.1} parent=11 // pred_region
        _
      $region20: #{parametric_unet_forward.1} parent=11 // pred_fallthru
        _
      // Predicated region
      $region21: #{parametric_unet_forward.1} parent=11 // pred_check
        %p586 = pneg %p119
      $region22: #{parametric_unet_forward.1} parent=11 // pred_check_branch
        %588 = sbr.rel (%p586) target = $region24
      $region23: #{parametric_unet_forward.1} parent=11 // pred_region
        _
      $region24: #{parametric_unet_forward.1} parent=11 // pred_fallthru
        _
      // Predicated region
      $region25: #{parametric_unet_forward.1} parent=11 // pred_check
        %p589 = pneg %p140
      $region26: #{parametric_unet_forward.1} parent=11 // pred_check_branch
        %591 = sbr.rel (%p589) target = $region28
      $region27: #{parametric_unet_forward.1} parent=11 // pred_region
        _
      $region28: #{parametric_unet_forward.1} parent=11 // pred_fallthru
        _
      // Predicated region
      $region29: #{parametric_unet_forward.1} parent=11 // pred_check
        %p592 = pneg %p161
      $region30: #{parametric_unet_forward.1} parent=11 // pred_check_branch
        %594 = sbr.rel (%p592) target = $region32
      $region31: #{parametric_unet_forward.1} parent=11 // pred_region
        _
      $region32: #{parametric_unet_forward.1} parent=11 // pred_fallthru
        _
      // Predicated region
      $region33: #{parametric_unet_forward.1} parent=11 // pred_check
        %p595 = pneg %p182
      $region34: #{parametric_unet_forward.1} parent=11 // pred_check_branch
        %597 = sbr.rel (%p595) target = $region36
      $region35: #{parametric_unet_forward.1} parent=11 // pred_region
        _
      $region36: #{parametric_unet_forward.1} parent=11 // pred_fallthru
        _
      // Predicated region
      $region37: #{parametric_unet_forward.1} parent=11 // pred_check
        %p598 = pneg %p203
      $region38: #{parametric_unet_forward.1} parent=11 // pred_check_branch
        %600 = sbr.rel (%p598) target = $region40
      $region39: #{parametric_unet_forward.1} parent=11 // pred_region
        _
      $region40: #{parametric_unet_forward.1} parent=11 // pred_fallthru
        _
      // Predicated region
      $region41: #{parametric_unet_forward.1} parent=11 // pred_check
        %p601 = pneg %p224
      $region42: #{parametric_unet_forward.1} parent=11 // pred_check_branch
        %603 = sbr.rel (%p601) target = $region44
      $region43: #{parametric_unet_forward.1} parent=11 // pred_region
        _
      $region44: #{parametric_unet_forward.1} parent=11 // pred_fallthru
        _
      // Predicated region
      $region45: #{parametric_unet_forward.1} parent=11 // pred_check
        %p604 = pneg %p245
      $region46: #{parametric_unet_forward.1} parent=11 // pred_check_branch
        %606 = sbr.rel (%p604) target = $region48
      $region47: #{parametric_unet_forward.1} parent=11 // pred_region
        _
      $region48: #{parametric_unet_forward.1} parent=11 // pred_fallthru
        _
      // Predicated region
      $region49: #{parametric_unet_forward.1} parent=11 // pred_check
        %p607 = pneg %p266
      $region50: #{parametric_unet_forward.1} parent=11 // pred_check_branch
        %609 = sbr.rel (%p607) target = $region52
      $region51: #{parametric_unet_forward.1} parent=11 // pred_region
        _
      $region52: #{parametric_unet_forward.1} parent=11 // pred_fallthru
        _
      // Predicated region
      $region53: #{parametric_unet_forward.1} parent=11 // pred_check
        %p610 = pneg %p287
      $region54: #{parametric_unet_forward.1} parent=11 // pred_check_branch
        %612 = sbr.rel (%p610) target = $region56
      $region55: #{parametric_unet_forward.1} parent=11 // pred_region
        _
      $region56: #{parametric_unet_forward.1} parent=11 // pred_fallthru
        _
      // Predicated region
      $region57: #{parametric_unet_forward.1} parent=11 // pred_check
        %p613 = pneg %p308
      $region58: #{parametric_unet_forward.1} parent=11 // pred_check_branch
        %615 = sbr.rel (%p613) target = $region60
      $region59: #{parametric_unet_forward.1} parent=11 // pred_region
        _
      $region60: #{parametric_unet_forward.1} parent=11 // pred_fallthru
        _
      // Predicated region
      $region61: #{parametric_unet_forward.1} parent=11 // pred_check
        %p616 = pneg %p329
      $region62: #{parametric_unet_forward.1} parent=11 // pred_check_branch
        %618 = sbr.rel (%p616) target = $region64
      $region63: #{parametric_unet_forward.1} parent=11 // pred_region
        _
      $region64: #{parametric_unet_forward.1} parent=11 // pred_fallthru
        _
      // Predicated region
      $region65: #{parametric_unet_forward.1} parent=11 // pred_check
        %p619 = pneg %p350
      $region66: #{parametric_unet_forward.1} parent=11 // pred_check_branch
        %621 = sbr.rel (%p619) target = $region68
      $region67: #{parametric_unet_forward.1} parent=11 // pred_region
        _
      $region68: #{parametric_unet_forward.1} parent=11 // pred_fallthru
        _
      // Predicated region
      $region69: #{parametric_unet_forward.1} parent=11 // pred_check
        %p622 = pneg %p371
      $region70: #{parametric_unet_forward.1} parent=11 // pred_check_branch
        %624 = sbr.rel (%p622) target = $region72
      $region71: #{parametric_unet_forward.1} parent=11 // pred_region
        _
      $region72: #{parametric_unet_forward.1} parent=11 // pred_fallthru
        _
      // Predicated region
      $region73: #{parametric_unet_forward.1} parent=11 // pred_check
        %p625 = pneg %p392
      $region74: #{parametric_unet_forward.1} parent=11 // pred_check_branch
        %627 = sbr.rel (%p625) target = $region76
      $region75: #{parametric_unet_forward.1} parent=11 // pred_region
        _
      $region76: #{parametric_unet_forward.1} parent=11 // pred_fallthru
        _
      // Predicated region
      $region77: #{parametric_unet_forward.1} parent=11 // pred_check
        %p628 = pneg %p413
      $region78: #{parametric_unet_forward.1} parent=11 // pred_check_branch
        %630 = sbr.rel (%p628) target = $region80
      $region79: #{parametric_unet_forward.1} parent=11 // pred_region
        _
      $region80: #{parametric_unet_forward.1} parent=11 // pred_fallthru
        _
      // Predicated region
      $region81: #{parametric_unet_forward.1} parent=11 // pred_check
        %p631 = pneg %p434
      $region82: #{parametric_unet_forward.1} parent=11 // pred_check_branch
        %633 = sbr.rel (%p631) target = $region84
      $region83: #{parametric_unet_forward.1} parent=11 // pred_region
        _
      $region84: #{parametric_unet_forward.1} parent=11 // pred_fallthru
        _
      // Predicated region
      $region85: #{parametric_unet_forward.1} parent=11 // pred_check
        %p634 = pneg %p455
      $region86: #{parametric_unet_forward.1} parent=11 // pred_check_branch
        %636 = sbr.rel (%p634) target = $region88
      $region87: #{parametric_unet_forward.1} parent=11 // pred_region
        _
      $region88: #{parametric_unet_forward.1} parent=11 // pred_fallthru
        _
      // Predicated region
      $region89: #{parametric_unet_forward.1} parent=11 // pred_check
        %p637 = pneg %p476
      $region90: #{parametric_unet_forward.1} parent=11 // pred_check_branch
        %639 = sbr.rel (%p637) target = $region92
      $region91: #{parametric_unet_forward.1} parent=11 // pred_region
        _
      $region92: #{parametric_unet_forward.1} parent=11 // pred_fallthru
        _
      // Predicated region
      $region93: #{parametric_unet_forward.1} parent=11 // pred_check
        %p640 = pneg %p497
      $region94: #{parametric_unet_forward.1} parent=11 // pred_check_branch
        %642 = sbr.rel (%p640) target = $region96
      $region95: #{parametric_unet_forward.1} parent=11 // pred_region
        _
      $region96: #{parametric_unet_forward.1} parent=11 // pred_fallthru
        _
      // Predicated region
      $region97: #{parametric_unet_forward.1} parent=11 // pred_check
        %p643 = pneg %p518
      $region98: #{parametric_unet_forward.1} parent=11 // pred_check_branch
        %645 = sbr.rel (%p643) target = $region100
      $region99: #{parametric_unet_forward.1} parent=11 // pred_region
        _
      $region100: #{parametric_unet_forward.1} parent=11 // pred_fallthru
        _
      // Predicated region
      $region101: #{parametric_unet_forward.1} parent=11 // pred_check
        %p646 = pneg %p539
      $region102: #{parametric_unet_forward.1} parent=11 // pred_check_branch
        %648 = sbr.rel (%p646) target = $region104
      $region103: #{parametric_unet_forward.1} parent=11 // pred_region
        _
      $region104: #{parametric_unet_forward.1} parent=11 // pred_fallthru
        _
    $region12: #{parametric_unet_forward.1} parent=5 // pred_fallthru
      _
    %p649 = scmp.lt.s32.totalorder %s30, 2
    // Predicated region
    $region105: #{parametric_unet_forward.1} parent=5 // pred_check
      %p650 = pneg %p649
    $region106: #{parametric_unet_forward.1} parent=5 // pred_check_branch
      %652 = sbr.rel (%p650) target = $region108
    $region107: #{parametric_unet_forward.1} parent=5 // pred_region
      // Predicated region
      $region109: #{parametric_unet_forward.1} parent=107 // pred_check
        %p653 = pneg %p50
      $region110: #{parametric_unet_forward.1} parent=107 // pred_check_branch
        %655 = sbr.rel (%p653) target = $region112
      $region111: #{parametric_unet_forward.1} parent=107 // pred_region
        %p656 = scmp.lt.s32.totalorder %s30, 1
        %s657 = scalar_select %p656, %s30, 1
        %s658 = smul.addr %s657, 2
        %s659 = smul.addr %s658, 8
        %s660 = scalar_lea.vmem %s0, %s659
      $region112: #{parametric_unet_forward.1} parent=107 // pred_fallthru
        _
    $region108: #{parametric_unet_forward.1} parent=5 // pred_fallthru
      _
    %p661 = scmp.le.s32.totalorder 1, %s30
    %p662 = scmp.lt.s32.totalorder %s30, 3
    %p663 = pnand %p661, %p662
    %p664 = pneg %p663
    // Predicated region
    $region113: #{parametric_unet_forward.1} parent=5 // pred_check
      _
    $region114: #{parametric_unet_forward.1} parent=5 // pred_check_branch
      %666 = sbr.rel (%p663) target = $region116
    $region115: #{parametric_unet_forward.1} parent=5 // pred_region
      %s667 = ssub.s32 %s30, 1
      %p668 = scmp.lt.s32.totalorder %s35, 1
      %s669 = scalar_select %p668, %s35, 1
      %s670 = smul.addr %s669, 2
      %s671 = smul.addr %s670, 8
      %s672 = scalar_lea.vmem %s0, %s671
      %p673 = pneg %p56
      %p674 = pneg %p53
      %p675 = pneg %p77
      %p676 = pneg %p74
      %p677 = pneg %p98
      %p678 = pneg %p95
      %p679 = pneg %p119
      %p680 = pneg %p116
      %p681 = pneg %p140
      %p682 = pneg %p137
      %p683 = pneg %p161
      %p684 = pneg %p158
      %p685 = pneg %p182
      %p686 = pneg %p179
      %p687 = pneg %p203
      %p688 = pneg %p200
      %p689 = pneg %p224
      %p690 = pneg %p221
      %p691 = pneg %p245
      %p692 = pneg %p242
      %p693 = pneg %p266
      %p694 = pneg %p263
      %p695 = pneg %p287
      %p696 = pneg %p284
      %p697 = pneg %p308
      %p698 = pneg %p305
      %p699 = pneg %p329
      %p700 = pneg %p326
      %p701 = pneg %p350
      %p702 = pneg %p347
      %p703 = pneg %p371
      %p704 = pneg %p368
      %p705 = pneg %p392
      %p706 = pneg %p389
      %p707 = pneg %p413
      %p708 = pneg %p410
      %p709 = pneg %p434
      %p710 = pneg %p431
      %p711 = pneg %p455
      %p712 = pneg %p452
      %p713 = pneg %p476
      %p714 = pneg %p473
      %p715 = pneg %p497
      %p716 = pneg %p494
      %p717 = pneg %p518
      %p718 = pneg %p515
      %p719 = pneg %p539
      %p720 = pneg %p536
      %p721 = pneg %p565
      %p722 = pneg %p562
      %p723 = scmp.lt.s32.totalorder %s35, 1
      %s724 = scalar_select %p723, %s35, 1
      %s725 = smul.addr %s724, 2
      %s726 = smul.addr %s725, 8
      %s727 = scalar_lea.vmem %s24, %s726
      %p728 = scmp.lt.s32.totalorder %s35, 1
      %s729 = scalar_select %p728, %s35, 1
      %s730 = smul.addr %s729, 2
      %s731 = smul.addr %s730, 8
      %s732 = scalar_lea.vmem %s0, %s731
      %p733 = scmp.lt.s32.totalorder %s35, 1
      %s734 = scalar_select %p733, %s35, 1
      %s735 = smul.addr %s734, 2
      %s736 = smul.addr %s735, 8
      %s737 = scalar_lea.vmem %s24, %s736
      %v738 = vld [vmem:[%s732] sm:$0xff]
      %v739 = vld [vmem:[%s732 + $0x8] sm:$0xff]
      %740 = vst [vmem:[#allocation2] sm:$0xff] 0.0
      %741 = vst [vmem:[#allocation2 + $0x8] sm:$0xff] 0.0
      %742 = vst [vmem:[#allocation2 + $0x10] sm:$0xff] 0.0
      %743 = vst [vmem:[#allocation2 + $0x18] sm:$0xff] 0.0
      %744 = vst [vmem:[#allocation2 + $0x8] sm:$0xff] %v738
      %745 = vst [vmem:[#allocation2 + $0x10] sm:$0xff] %v739
      %v746 = vld [vmem:[#allocation2] sm:$0xff]
      %v747 = vld [vmem:[#allocation2 + $0x8] sm:$0xff]
      %v748 = vld [vmem:[#allocation2 + $0x10] sm:$0xff]
      %v749 = vld [vmem:[%s1] sm:$0x3]
      %v751 = vlaneseq
      %v752 = vshrl.u32 %v751, 7
      %v753 = vsub.s32 0, %v752
      %v754 = vrot.slane %v749, %v753
      %v755 = vlaneseq
      %v756 = vshrl.u32 %v755, 7
      %v757 = vsub.s32 1, %v756
      %v758 = vrot.slane %v749, %v757
      %759 = vrot.lane.b32.xlu0 %v754, 111
      %v760 = vpop.permute.xlu0 %759
      %761 = vrot.lane.b32.xlu0 %v758, 111
      %v762 = vpop.permute.xlu0 %761
      %vm763 = vcmask 908288
      %v764 = vsel %vm763, %v760, %v762
      %v768 = vmul.f32 %v746, %v760
      %v769 = vmul.f32 %v747, %v764
      %v770 = vmul.f32 %v748, %v762
      %774 = vrot.lane.b32.xlu0 %v768, 17
      %v775 = vpop.permute.xlu0 %774
      %776 = vrot.lane.b32.xlu0 %v769, 17
      %v777 = vpop.permute.xlu0 %776
      %778 = vrot.lane.b32.xlu0 %v770, 17
      %v779 = vpop.permute.xlu0 %778
      %vm780 = vcmask 138240
      %v781 = vsel %vm780, %v775, %v777
      %v782 = vsel %vm780, %v777, %v779
      %785 = vst [vmem:[#allocation3] sm:$0xff] %v781
      %786 = vst [vmem:[#allocation3 + $0x8] sm:$0xff] %v782
      %v787 = vld [vmem:[#allocation2] sm:$0xff]
      %v788 = vld [vmem:[#allocation2 + $0x8] sm:$0xff]
      %v789 = vld [vmem:[#allocation2 + $0x10] sm:$0xff]
      %s790 = scalar_lea.vmem %s1, 2
      %v791 = vld [vmem:[%s790] sm:$0x3]
      %v793 = vlaneseq
      %v794 = vshrl.u32 %v793, 7
      %v795 = vsub.s32 0, %v794
      %v796 = vrot.slane %v791, %v795
      %v797 = vlaneseq
      %v798 = vshrl.u32 %v797, 7
      %v799 = vsub.s32 1, %v798
      %v800 = vrot.slane %v791, %v799
      %801 = vrot.lane.b32.xlu0 %v796, 112
      %v802 = vpop.permute.xlu0 %801
      %803 = vrot.lane.b32.xlu0 %v800, 112
      %v804 = vpop.permute.xlu0 %803
      %vm805 = vcmask 916480
      %v806 = vsel %vm805, %v802, %v804
      %v810 = vmul.f32 %v787, %v802
      %v811 = vmul.f32 %v788, %v806
      %v812 = vmul.f32 %v789, %v804
      %816 = vrot.lane.b32.xlu0 %v810, 16
      %v817 = vpop.permute.xlu0 %816
      %818 = vrot.lane.b32.xlu0 %v811, 16
      %v819 = vpop.permute.xlu0 %818
      %820 = vrot.lane.b32.xlu0 %v812, 16
      %v821 = vpop.permute.xlu0 %820
      %vm822 = vcmask 130048
      %v823 = vsel %vm822, %v817, %v819
      %v824 = vsel %vm822, %v819, %v821
      %827 = vst [vmem:[#allocation3 + $0x10] sm:$0xff] %v823
      %828 = vst [vmem:[#allocation3 + $0x18] sm:$0xff] %v824
      %v829 = vld [vmem:[#allocation2] sm:$0xff]
      %v830 = vld [vmem:[#allocation2 + $0x8] sm:$0xff]
      %v831 = vld [vmem:[#allocation2 + $0x10] sm:$0xff]
      %s832 = scalar_lea.vmem %s1, 4
      %v833 = vld [vmem:[%s832] sm:$0x3]
      %v835 = vlaneseq
      %v836 = vshrl.u32 %v835, 7
      %v837 = vsub.s32 0, %v836
      %v838 = vrot.slane %v833, %v837
      %v839 = vlaneseq
      %v840 = vshrl.u32 %v839, 7
      %v841 = vsub.s32 1, %v840
      %v842 = vrot.slane %v833, %v841
      %843 = vrot.lane.b32.xlu0 %v838, 113
      %v844 = vpop.permute.xlu0 %843
      %845 = vrot.lane.b32.xlu0 %v842, 113
      %v846 = vpop.permute.xlu0 %845
      %vm847 = vcmask 924672
      %v848 = vsel %vm847, %v844, %v846
      %v852 = vmul.f32 %v829, %v844
      %v853 = vmul.f32 %v830, %v848
      %v854 = vmul.f32 %v831, %v846
      %858 = vrot.lane.b32.xlu0 %v852, 15
      %v859 = vpop.permute.xlu0 %858
      %860 = vrot.lane.b32.xlu0 %v853, 15
      %v861 = vpop.permute.xlu0 %860
      %862 = vrot.lane.b32.xlu0 %v854, 15
      %v863 = vpop.permute.xlu0 %862
      %vm864 = vcmask 121856
      %v865 = vsel %vm864, %v859, %v861
      %v866 = vsel %vm864, %v861, %v863
      %869 = vst [vmem:[#allocation3 + $0x20] sm:$0xff] %v865
      %870 = vst [vmem:[#allocation3 + $0x28] sm:$0xff] %v866
      %v871 = vld [vmem:[#allocation2] sm:$0xff]
      %v872 = vld [vmem:[#allocation2 + $0x8] sm:$0xff]
      %v873 = vld [vmem:[#allocation2 + $0x10] sm:$0xff]
      %s874 = scalar_lea.vmem %s1, 6
      %v875 = vld [vmem:[%s874] sm:$0x3]
      %v877 = vlaneseq
      %v878 = vshrl.u32 %v877, 7
      %v879 = vsub.s32 0, %v878
      %v880 = vrot.slane %v875, %v879
      %v881 = vlaneseq
      %v882 = vshrl.u32 %v881, 7
      %v883 = vsub.s32 1, %v882
      %v884 = vrot.slane %v875, %v883
      %885 = vrot.lane.b32.xlu0 %v880, 127
      %v886 = vpop.permute.xlu0 %885
      %887 = vrot.lane.b32.xlu0 %v884, 127
      %v888 = vpop.permute.xlu0 %887
      %vm889 = vcmask 1039360
      %v890 = vsel %vm889, %v886, %v888
      %v894 = vmul.f32 %v871, %v886
      %v895 = vmul.f32 %v872, %v890
      %v896 = vmul.f32 %v873, %v888
      %900 = vrot.lane.b32.xlu0 %v894, 1
      %v901 = vpop.permute.xlu0 %900
      %902 = vrot.lane.b32.xlu0 %v895, 1
      %v903 = vpop.permute.xlu0 %902
      %904 = vrot.lane.b32.xlu0 %v896, 1
      %v905 = vpop.permute.xlu0 %904
      %vm906 = vcmask 7168
      %v907 = vsel %vm906, %v901, %v903
      %v908 = vsel %vm906, %v903, %v905
      %911 = vst [vmem:[#allocation3 + $0x30] sm:$0xff] %v907
      %912 = vst [vmem:[#allocation3 + $0x38] sm:$0xff] %v908
      %v913 = vld [vmem:[#allocation2 + $0x8] sm:$0xff]
      %v914 = vld [vmem:[#allocation2 + $0x10] sm:$0xff]
      %s915 = scalar_lea.vmem %s1, 8
      %v916 = vld [vmem:[%s915] sm:$0x3]
      %v918 = vlaneseq
      %v919 = vshrl.u32 %v918, 7
      %v920 = vsub.s32 0, %v919
      %v921 = vrot.slane %v916, %v920
      %v922 = vlaneseq
      %v923 = vshrl.u32 %v922, 7
      %v924 = vsub.s32 1, %v923
      %v925 = vrot.slane %v916, %v924
      %v928 = vmul.f32 %v913, %v921
      %v929 = vmul.f32 %v914, %v925
      %930 = vst [vmem:[#allocation3 + $0x40] sm:$0xff] %v928
      %931 = vst [vmem:[#allocation3 + $0x48] sm:$0xff] %v929
      %v932 = vld [vmem:[#allocation2 + $0x8] sm:$0xff]
      %v933 = vld [vmem:[#allocation2 + $0x10] sm:$0xff]
      %v934 = vld [vmem:[#allocation2 + $0x18] sm:$0xff]
      %s935 = scalar_lea.vmem %s1, 10
      %v936 = vld [vmem:[%s935] sm:$0x3]
      %v938 = vlaneseq
      %v939 = vshrl.u32 %v938, 7
      %v940 = vsub.s32 0, %v939
      %v941 = vrot.slane %v936, %v940
      %v942 = vlaneseq
      %v943 = vshrl.u32 %v942, 7
      %v944 = vsub.s32 1, %v943
      %v945 = vrot.slane %v936, %v944
      %946 = vrot.lane.b32.xlu0 %v941, 1
      %v947 = vpop.permute.xlu0 %946
      %948 = vrot.lane.b32.xlu0 %v945, 1
      %v949 = vpop.permute.xlu0 %948
      %v950 = vsel %vm906, %v947, %v949
      %v954 = vmul.f32 %v932, %v947
      %v955 = vmul.f32 %v933, %v950
      %v956 = vmul.f32 %v934, %v949
      %960 = vrot.lane.b32.xlu0 %v954, 127
      %v961 = vpop.permute.xlu0 %960
      %962 = vrot.lane.b32.xlu0 %v955, 127
      %v963 = vpop.permute.xlu0 %962
      %964 = vrot.lane.b32.xlu0 %v956, 127
      %v965 = vpop.permute.xlu0 %964
      %v966 = vsel %vm889, %v961, %v963
      %v967 = vsel %vm889, %v963, %v965
      %970 = vst [vmem:[#allocation3 + $0x50] sm:$0xff] %v966
      %971 = vst [vmem:[#allocation3 + $0x58] sm:$0xff] %v967
      %v972 = vld [vmem:[#allocation2 + $0x8] sm:$0xff]
      %v973 = vld [vmem:[#allocation2 + $0x10] sm:$0xff]
      %v974 = vld [vmem:[#allocation2 + $0x18] sm:$0xff]
      %s975 = scalar_lea.vmem %s1, 12
      %v976 = vld [vmem:[%s975] sm:$0x3]
      %v978 = vlaneseq
      %v979 = vshrl.u32 %v978, 7
      %v980 = vsub.s32 0, %v979
      %v981 = vrot.slane %v976, %v980
      %v982 = vlaneseq
      %v983 = vshrl.u32 %v982, 7
      %v984 = vsub.s32 1, %v983
      %v985 = vrot.slane %v976, %v984
      %986 = vrot.lane.b32.xlu0 %v981, 15
      %v987 = vpop.permute.xlu0 %986
      %988 = vrot.lane.b32.xlu0 %v985, 15
      %v989 = vpop.permute.xlu0 %988
      %v990 = vsel %vm864, %v987, %v989
      %v994 = vmul.f32 %v972, %v987
      %v995 = vmul.f32 %v973, %v990
      %v996 = vmul.f32 %v974, %v989
      %1000 = vrot.lane.b32.xlu0 %v994, 113
      %v1001 = vpop.permute.xlu0 %1000
      %1002 = vrot.lane.b32.xlu0 %v995, 113
      %v1003 = vpop.permute.xlu0 %1002
      %1004 = vrot.lane.b32.xlu0 %v996, 113
      %v1005 = vpop.permute.xlu0 %1004
      %v1006 = vsel %vm847, %v1001, %v1003
      %v1007 = vsel %vm847, %v1003, %v1005
      %1010 = vst [vmem:[#allocation3 + $0x60] sm:$0xff] %v1006
      %1011 = vst [vmem:[#allocation3 + $0x68] sm:$0xff] %v1007
      %v1012 = vld [vmem:[#allocation2 + $0x8] sm:$0xff]
      %v1013 = vld [vmem:[#allocation2 + $0x10] sm:$0xff]
      %v1014 = vld [vmem:[#allocation2 + $0x18] sm:$0xff]
      %s1015 = scalar_lea.vmem %s1, 14
      %v1016 = vld [vmem:[%s1015] sm:$0x3]
      %v1018 = vlaneseq
      %v1019 = vshrl.u32 %v1018, 7
      %v1020 = vsub.s32 0, %v1019
      %v1021 = vrot.slane %v1016, %v1020
      %v1022 = vlaneseq
      %v1023 = vshrl.u32 %v1022, 7
      %v1024 = vsub.s32 1, %v1023
      %v1025 = vrot.slane %v1016, %v1024
      %1026 = vrot.lane.b32.xlu0 %v1021, 16
      %v1027 = vpop.permute.xlu0 %1026
      %1028 = vrot.lane.b32.xlu0 %v1025, 16
      %v1029 = vpop.permute.xlu0 %1028
      %v1030 = vsel %vm822, %v1027, %v1029
      %v1034 = vmul.f32 %v1012, %v1027
      %v1035 = vmul.f32 %v1013, %v1030
      %v1036 = vmul.f32 %v1014, %v1029
      %1040 = vrot.lane.b32.xlu0 %v1034, 112
      %v1041 = vpop.permute.xlu0 %1040
      %1042 = vrot.lane.b32.xlu0 %v1035, 112
      %v1043 = vpop.permute.xlu0 %1042
      %1044 = vrot.lane.b32.xlu0 %v1036, 112
      %v1045 = vpop.permute.xlu0 %1044
      %v1046 = vsel %vm805, %v1041, %v1043
      %v1047 = vsel %vm805, %v1043, %v1045
      %1050 = vst [vmem:[#allocation3 + $0x70] sm:$0xff] %v1046
      %1051 = vst [vmem:[#allocation3 + $0x78] sm:$0xff] %v1047
      %v1052 = vld [vmem:[#allocation2 + $0x8] sm:$0xff]
      %v1053 = vld [vmem:[#allocation2 + $0x10] sm:$0xff]
      %v1054 = vld [vmem:[#allocation2 + $0x18] sm:$0xff]
      %s1055 = scalar_lea.vmem %s1, 16
      %v1056 = vld [vmem:[%s1055] sm:$0x3]
      %v1058 = vlaneseq
      %v1059 = vshrl.u32 %v1058, 7
      %v1060 = vsub.s32 0, %v1059
      %v1061 = vrot.slane %v1056, %v1060
      %v1062 = vlaneseq
      %v1063 = vshrl.u32 %v1062, 7
      %v1064 = vsub.s32 1, %v1063
      %v1065 = vrot.slane %v1056, %v1064
      %1066 = vrot.lane.b32.xlu0 %v1061, 17
      %v1067 = vpop.permute.xlu0 %1066
      %1068 = vrot.lane.b32.xlu0 %v1065, 17
      %v1069 = vpop.permute.xlu0 %1068
      %v1070 = vsel %vm780, %v1067, %v1069
      %v1074 = vmul.f32 %v1052, %v1067
      %v1075 = vmul.f32 %v1053, %v1070
      %v1076 = vmul.f32 %v1054, %v1069
      %1080 = vrot.lane.b32.xlu0 %v1074, 111
      %v1081 = vpop.permute.xlu0 %1080
      %1082 = vrot.lane.b32.xlu0 %v1075, 111
      %v1083 = vpop.permute.xlu0 %1082
      %1084 = vrot.lane.b32.xlu0 %v1076, 111
      %v1085 = vpop.permute.xlu0 %1084
      %v1086 = vsel %vm763, %v1081, %v1083
      %v1087 = vsel %vm763, %v1083, %v1085
      %1090 = vst [vmem:[#allocation3 + $0x80] sm:$0xff] %v1086
      %1091 = vst [vmem:[#allocation3 + $0x88] sm:$0xff] %v1087
      %v1092 = vld [vmem:[%s8] sm:$0xff]
      %v1093 = vld [vmem:[#allocation3] sm:$0xff]
      %v1094 = vld [vmem:[#allocation3 + $0x8] sm:$0xff]
      %v1095 = vld [vmem:[#allocation3 + $0x10] sm:$0xff]
      %v1096 = vld [vmem:[#allocation3 + $0x18] sm:$0xff]
      %v1097 = vld [vmem:[#allocation3 + $0x20] sm:$0xff]
      %v1098 = vld [vmem:[#allocation3 + $0x28] sm:$0xff]
      %v1099 = vld [vmem:[#allocation3 + $0x30] sm:$0xff]
      %v1100 = vld [vmem:[#allocation3 + $0x38] sm:$0xff]
      %v1101 = vld [vmem:[#allocation3 + $0x40] sm:$0xff]
      %v1102 = vld [vmem:[#allocation3 + $0x48] sm:$0xff]
      %v1103 = vld [vmem:[#allocation3 + $0x50] sm:$0xff]
      %v1104 = vld [vmem:[#allocation3 + $0x58] sm:$0xff]
      %v1105 = vld [vmem:[#allocation3 + $0x60] sm:$0xff]
      %v1106 = vld [vmem:[#allocation3 + $0x68] sm:$0xff]
      %v1107 = vld [vmem:[#allocation3 + $0x70] sm:$0xff]
      %v1108 = vld [vmem:[#allocation3 + $0x78] sm:$0xff]
      %v1109 = vld [vmem:[#allocation3 + $0x80] sm:$0xff]
      %v1110 = vld [vmem:[#allocation3 + $0x88] sm:$0xff]
      %v1111 = vld [vmem:[%s9] sm:$0xff]
      %1113 = vset.pattern.permute.xlu0 0
      %1114 = vperm.xlu0 %1113, %v1111
      %v1115 = vpop.permute.xlu0 %1114
      %vm1117 = vcmask 588800
      %v1119 = vsel %vm1117, %v1092, 0
      %1121 = vmatprep.subr.mxu0 0.0
      %1122 = vmatpush1.msra.mxu0 0.0
      %1123 = vmatprep.subr.mxu0 0.0
      %1124 = vmatpush1.msra.mxu0 0.0
      %1125 = vmatprep.subr.mxu0 0.0
      %1126 = vmatpush1.msra.mxu0 0.0
      %1127 = vmatprep.subr.mxu0 0.0
      %1128 = vmatpush1.msra.mxu0 0.0
      %1129 = vmatprep.subr.mxu0 0.0
      %1130 = vmatpush1.msra.mxu0 0.0
      %1131 = vmatprep.subr.mxu0 0.0
      %1132 = vmatpush1.msra.mxu0 0.0
      %1133 = vmatprep.subr.mxu0 0.0
      %1134 = vmatpush1.msra.mxu0 0.0
      %1135 = vmatprep.subr.mxu0 %v1110
      %1136 = vmatpush1.msra.mxu0 %v1109
      %1137 = vmatprep.subr.mxu0 %v1108
      %1138 = vmatpush1.msra.mxu0 %v1107
      %1139 = vmatprep.subr.mxu0 %v1106
      %1140 = vmatpush1.msra.mxu0 %v1105
      %1141 = vmatprep.subr.mxu0 %v1104
      %1142 = vmatpush1.msra.mxu0 %v1103
      %1143 = vmatprep.subr.mxu0 %v1102
      %1144 = vmatpush1.msra.mxu0 %v1101
      %1145 = vmatprep.subr.mxu0 %v1100
      %1146 = vmatpush1.msra.mxu0 %v1099
      %1147 = vmatprep.subr.mxu0 %v1098
      %1148 = vmatpush1.msra.mxu0 %v1097
      %1149 = vmatprep.subr.mxu0 %v1096
      %1150 = vmatpush1.msra.mxu0 %v1095
      %1151 = vmatprep.subr.mxu0 %v1094
      %1152 = vmatpush1.msra.mxu0 %v1093
      %1153 = vmatprep.subr.mxu0 0.0
      %1154 = vmatpush2.msra.mxu0 0.0
      %1155 = vmatprep.subr.mxu0 0.0
      %1156 = vmatpush2.msra.mxu0 0.0
      %1157 = vmatprep.subr.mxu0 0.0
      %1158 = vmatpush2.msra.mxu0 0.0
      %1159 = vmatprep.subr.mxu0 0.0
      %1160 = vmatpush2.msra.mxu0 0.0
      %1161 = vmatprep.subr.mxu0 0.0
      %1162 = vmatpush2.msra.mxu0 0.0
      %1163 = vmatprep.subr.mxu0 0.0
      %1164 = vmatpush2.msra.mxu0 0.0
      %1165 = vmatprep.subr.mxu0 0.0
      %1166 = vmatpush2.msra.mxu0 0.0
      %1167 = vmatprep.subr.mxu0 0.0
      %1168 = vmatpush2.msra.mxu0 0.0
      %1169 = vmatprep.subr.mxu0 0.0
      %1170 = vmatpush2.msra.mxu0 0.0
      %1171 = vmatprep.subr.mxu0 0.0
      %1172 = vmatpush2.msra.mxu0 0.0
      %1173 = vmatprep.subr.mxu0 0.0
      %1174 = vmatpush2.msra.mxu0 0.0
      %1175 = vmatprep.subr.mxu0 0.0
      %1176 = vmatpush2.msra.mxu0 0.0
      %1177 = vmatprep.subr.mxu0 0.0
      %1178 = vmatpush2.msra.mxu0 0.0
      %1179 = vmatprep.subr.mxu0 0.0
      %1180 = vmatpush2.msra.mxu0 0.0
      %1181 = vmatprep.subr.mxu0 0.0
      %1182 = vmatpush2.msra.mxu0 0.0
      %1183 = vmatprep.subr.mxu0 0.0
      %1184 = vmatpush2.msra.mxu0 0.0
      %1185 = vmatprep.mubr.f32.mxu0 0.0
      %1186 = vmatmul.mubr.f32.gmra.mxu0 %v1119
      %v1187 = vpop.f32.mrf.mxu0
      %v1188 = vadd.f32 %v1115, %v1187
      %v1189 = vpop.f32.mrf.mxu0
      %v1190 = vadd.f32 %v1115, %v1189
      %1191 = vdwg.mxu0
      %v1192 = vmax.f32 %v1188, 0.0
      %v1193 = vmax.f32 %v1190, 0.0
      %v1194 = vld [vmem:[%s4] sm:$0xff]
      %v1195 = vld [vmem:[%s4 + $0x8] sm:$0xff]
      %v1196 = vld [vmem:[%s4 + $0x10] sm:$0xff]
      %v1197 = vld [vmem:[%s4 + $0x18] sm:$0xff]
      %v1198 = vld [vmem:[%s4 + $0x20] sm:$0xff]
      %v1199 = vld [vmem:[%s4 + $0x28] sm:$0xff]
      %v1200 = vld [vmem:[%s4 + $0x30] sm:$0xff]
      %v1201 = vld [vmem:[%s4 + $0x38] sm:$0xff]
      %v1202 = vld [vmem:[%s4 + $0x40] sm:$0xff]
      %v1203 = vld [vmem:[%s4 + $0x48] sm:$0xff]
      %v1204 = vld [vmem:[%s4 + $0x50] sm:$0xff]
      %v1205 = vld [vmem:[%s4 + $0x58] sm:$0xff]
      %v1206 = vld [vmem:[%s4 + $0x60] sm:$0xff]
      %v1207 = vld [vmem:[%s4 + $0x68] sm:$0xff]
      %v1208 = vld [vmem:[%s4 + $0x70] sm:$0xff]
      %v1209 = vld [vmem:[%s4 + $0x78] sm:$0xff]
      %v1210 = vld [vmem:[%s4 + $0x80] sm:$0xff]
      %v1211 = vld [vmem:[%s4 + $0x88] sm:$0xff]
      %v1212 = vld [vmem:[%s4 + $0x90] sm:$0xff]
      %v1213 = vld [vmem:[%s4 + $0x98] sm:$0xff]
      %v1214 = vld [vmem:[%s4 + $0xa0] sm:$0xff]
      %v1215 = vld [vmem:[%s4 + $0xa8] sm:$0xff]
      %v1216 = vld [vmem:[%s4 + $0xb0] sm:$0xff]
      %v1217 = vld [vmem:[%s4 + $0xb8] sm:$0xff]
      %v1218 = vld [vmem:[%s4 + $0xc0] sm:$0xff]
      %v1219 = vld [vmem:[%s4 + $0xc8] sm:$0xff]
      %v1220 = vld [vmem:[%s4 + $0xd0] sm:$0xff]
      %v1221 = vld [vmem:[%s4 + $0xd8] sm:$0xff]
      %v1222 = vld [vmem:[%s4 + $0xe0] sm:$0xff]
      %v1223 = vld [vmem:[%s4 + $0xe8] sm:$0xff]
      %v1224 = vld [vmem:[%s4 + $0xf0] sm:$0xff]
      %v1225 = vld [vmem:[%s4 + $0xf8] sm:$0xff]
      %v1226 = vld [vmem:[%s4 + $0x100] sm:$0xff]
      %v1227 = vld [vmem:[%s4 + $0x108] sm:$0xff]
      %v1228 = vld [vmem:[%s4 + $0x110] sm:$0xff]
      %v1229 = vld [vmem:[%s4 + $0x118] sm:$0xff]
      %v1230 = vld [vmem:[%s4 + $0x120] sm:$0xff]
      %v1231 = vld [vmem:[%s4 + $0x128] sm:$0xff]
      %v1232 = vld [vmem:[%s4 + $0x130] sm:$0xff]
      %v1233 = vld [vmem:[%s4 + $0x138] sm:$0xff]
      %v1234 = vld [vmem:[%s4 + $0x140] sm:$0xff]
      %v1235 = vld [vmem:[%s4 + $0x148] sm:$0xff]
      %v1236 = vld [vmem:[%s4 + $0x150] sm:$0xff]
      %v1237 = vld [vmem:[%s4 + $0x158] sm:$0xff]
      %v1238 = vld [vmem:[%s4 + $0x160] sm:$0xff]
      %v1239 = vld [vmem:[%s4 + $0x168] sm:$0xff]
      %v1240 = vld [vmem:[%s4 + $0x170] sm:$0xff]
      %v1241 = vld [vmem:[%s4 + $0x178] sm:$0xff]
      %v1242 = vld [vmem:[%s4 + $0x180] sm:$0xff]
      %v1243 = vld [vmem:[%s4 + $0x188] sm:$0xff]
      %v1244 = vld [vmem:[%s4 + $0x190] sm:$0xff]
      %v1245 = vld [vmem:[%s4 + $0x198] sm:$0xff]
      %v1246 = vld [vmem:[%s4 + $0x1a0] sm:$0xff]
      %v1247 = vld [vmem:[%s4 + $0x1a8] sm:$0xff]
      %v1248 = vld [vmem:[%s4 + $0x1b0] sm:$0xff]
      %v1249 = vld [vmem:[%s4 + $0x1b8] sm:$0xff]
      %v1250 = vld [vmem:[%s4 + $0x1c0] sm:$0xff]
      %v1251 = vld [vmem:[%s4 + $0x1c8] sm:$0xff]
      %v1252 = vld [vmem:[%s4 + $0x1d0] sm:$0xff]
      %v1253 = vld [vmem:[%s4 + $0x1d8] sm:$0xff]
      %v1254 = vld [vmem:[%s4 + $0x1e0] sm:$0xff]
      %v1255 = vld [vmem:[%s4 + $0x1e8] sm:$0xff]
      %v1256 = vld [vmem:[%s4 + $0x1f0] sm:$0xff]
      %v1257 = vld [vmem:[%s4 + $0x1f8] sm:$0xff]
      %1258 = vmatprep.subr.mxu0 %v1225
      %1259 = vmatpush1.msra.mxu0 %v1224
      %1260 = vmatprep.subr.mxu0 %v1223
      %1261 = vmatpush1.msra.mxu0 %v1222
      %1262 = vmatprep.subr.mxu0 %v1221
      %1263 = vmatpush1.msra.mxu0 %v1220
      %1264 = vmatprep.subr.mxu0 %v1219
      %1265 = vmatpush1.msra.mxu0 %v1218
      %1266 = vmatprep.subr.mxu0 %v1217
      %1267 = vmatpush1.msra.mxu0 %v1216
      %1268 = vmatprep.subr.mxu0 %v1215
      %1269 = vmatpush1.msra.mxu0 %v1214
      %1270 = vmatprep.subr.mxu0 %v1213
      %1271 = vmatpush1.msra.mxu0 %v1212
      %1272 = vmatprep.subr.mxu0 %v1211
      %1273 = vmatpush1.msra.mxu0 %v1210
      %1274 = vmatprep.subr.mxu0 %v1209
      %1275 = vmatpush1.msra.mxu0 %v1208
      %1276 = vmatprep.subr.mxu0 %v1207
      %1277 = vmatpush1.msra.mxu0 %v1206
      %1278 = vmatprep.subr.mxu0 %v1205
      %1279 = vmatpush1.msra.mxu0 %v1204
      %1280 = vmatprep.subr.mxu0 %v1203
      %1281 = vmatpush1.msra.mxu0 %v1202
      %1282 = vmatprep.subr.mxu0 %v1201
      %1283 = vmatpush1.msra.mxu0 %v1200
      %1284 = vmatprep.subr.mxu0 %v1199
      %1285 = vmatpush1.msra.mxu0 %v1198
      %1286 = vmatprep.subr.mxu0 %v1197
      %1287 = vmatpush1.msra.mxu0 %v1196
      %1288 = vmatprep.subr.mxu0 %v1195
      %1289 = vmatpush1.msra.mxu0 %v1194
      %1290 = vmatprep.subr.mxu0 %v1257
      %1291 = vmatpush2.msra.mxu0 %v1256
      %1292 = vmatprep.subr.mxu0 %v1255
      %1293 = vmatpush2.msra.mxu0 %v1254
      %1294 = vmatprep.subr.mxu0 %v1253
      %1295 = vmatpush2.msra.mxu0 %v1252
      %1296 = vmatprep.subr.mxu0 %v1251
      %1297 = vmatpush2.msra.mxu0 %v1250
      %1298 = vmatprep.subr.mxu0 %v1249
      %1299 = vmatpush2.msra.mxu0 %v1248
      %1300 = vmatprep.subr.mxu0 %v1247
      %1301 = vmatpush2.msra.mxu0 %v1246
      %1302 = vmatprep.subr.mxu0 %v1245
      %1303 = vmatpush2.msra.mxu0 %v1244
      %1304 = vmatprep.subr.mxu0 %v1243
      %1305 = vmatpush2.msra.mxu0 %v1242
      %1306 = vmatprep.subr.mxu0 %v1241
      %1307 = vmatpush2.msra.mxu0 %v1240
      %1308 = vmatprep.subr.mxu0 %v1239
      %1309 = vmatpush2.msra.mxu0 %v1238
      %1310 = vmatprep.subr.mxu0 %v1237
      %1311 = vmatpush2.msra.mxu0 %v1236
      %1312 = vmatprep.subr.mxu0 %v1235
      %1313 = vmatpush2.msra.mxu0 %v1234
      %1314 = vmatprep.subr.mxu0 %v1233
      %1315 = vmatpush2.msra.mxu0 %v1232
      %1316 = vmatprep.subr.mxu0 %v1231
      %1317 = vmatpush2.msra.mxu0 %v1230
      %1318 = vmatprep.subr.mxu0 %v1229
      %1319 = vmatpush2.msra.mxu0 %v1228
      %1320 = vmatprep.subr.mxu0 %v1227
      %1321 = vmatpush2.msra.mxu0 %v1226
      %1322 = vmatprep.mubr.f32.mxu0 %v1193
      %1323 = vmatmul.mubr.f32.gmra.mxu0 %v1192
      %v1324 = vpop.f32.mrf.mxu0
      %v1325 = vadd.f32 0.0, %v1324
      %v1326 = vpop.f32.mrf.mxu0
      %v1327 = vadd.f32 0.0, %v1326
      %1328 = vdwg.mxu0
      %1329 = vst [vmem:[#allocation4] sm:$0xff] %v1325
      %1330 = vst [vmem:[#allocation4 + $0x8] sm:$0xff] %v1327
      %v1331 = vld [vmem:[#allocation4] sm:$0xff]
      %1333 = vrot.lane.b32.xlu0 %v1331, 64
      %v1334 = vpop.permute.xlu0 %1333
      %v1336 = vmax.f32 %v1331, %v1334
      %v1337 = vld [vmem:[#allocation4 + $0x8] sm:$0xff]
      %1339 = vrot.lane.b32.xlu0 %v1337, 64
      %v1340 = vpop.permute.xlu0 %1339
      %v1342 = vmax.f32 %v1337, %v1340
      %v1343 = vmax.f32 %v1336, %v1342
      %1344 = vst [vmem:[#allocation2] sm:$0xff] 0.0
      %1345 = vst [vmem:[#allocation2 + $0x8] sm:$0xff] 0.0
      %1346 = vst [vmem:[#allocation2 + $0x10] sm:$0xff] 0.0
      %1347 = vst [vmem:[#allocation2 + $0x18] sm:$0xff] 0.0
      %vm1348 = vcmask 523264
      %1349 = vst.msk [vmem:[#allocation2 + $0x8] sm:$0xff] %vm1348, %v1343
      %v1350 = vld [vmem:[#allocation2] sm:$0xff]
      %v1351 = vld [vmem:[#allocation2 + $0x8] sm:$0xff]
      %v1352 = vld [vmem:[%s2] sm:$0x1]
      %v1354 = vlaneseq
      %v1355 = vshrl.u32 %v1354, 7
      %v1356 = vsub.s32 0, %v1355
      %v1357 = vrot.slane %v1352, %v1356
      %1358 = vrot.lane.b32.xlu0 %v1357, 119
      %v1359 = vpop.permute.xlu0 %1358
      %v1361 = vmul.f32 %v1350, %v1359
      %v1362 = vmul.f32 %v1351, %v1359
      %1365 = vrot.lane.b32.xlu0 %v1361, 9
      %v1366 = vpop.permute.xlu0 %1365
      %1367 = vrot.lane.b32.xlu0 %v1362, 9
      %v1368 = vpop.permute.xlu0 %1367
      %vm1369 = vcmask 72704
      %v1370 = vsel %vm1369, %v1366, %v1368
      %1372 = vst.msk [vmem:[#allocation3] sm:$0xff] %vm1348, %v1370
      %v1373 = vld [vmem:[#allocation2] sm:$0xff]
      %v1374 = vld [vmem:[#allocation2 + $0x8] sm:$0xff]
      %s1375 = scalar_lea.vmem %s2, 1
      %v1376 = vld [vmem:[%s1375] sm:$0x1]
      %v1378 = vlaneseq
      %v1379 = vshrl.u32 %v1378, 7
      %v1380 = vsub.s32 0, %v1379
      %v1381 = vrot.slane %v1376, %v1380
      %1382 = vrot.lane.b32.xlu0 %v1381, 120
      %v1383 = vpop.permute.xlu0 %1382
      %v1385 = vmul.f32 %v1373, %v1383
      %v1386 = vmul.f32 %v1374, %v1383
      %1389 = vrot.lane.b32.xlu0 %v1385, 8
      %v1390 = vpop.permute.xlu0 %1389
      %1391 = vrot.lane.b32.xlu0 %v1386, 8
      %v1392 = vpop.permute.xlu0 %1391
      %vm1393 = vcmask 64512
      %v1394 = vsel %vm1393, %v1390, %v1392
      %1396 = vst.msk [vmem:[#allocation3 + $0x10] sm:$0xff] %vm1348, %v1394
      %v1397 = vld [vmem:[#allocation2] sm:$0xff]
      %v1398 = vld [vmem:[#allocation2 + $0x8] sm:$0xff]
      %s1399 = scalar_lea.vmem %s2, 2
      %v1400 = vld [vmem:[%s1399] sm:$0x1]
      %v1402 = vlaneseq
      %v1403 = vshrl.u32 %v1402, 7
      %v1404 = vsub.s32 0, %v1403
      %v1405 = vrot.slane %v1400, %v1404
      %1406 = vrot.lane.b32.xlu0 %v1405, 121
      %v1407 = vpop.permute.xlu0 %1406
      %v1409 = vmul.f32 %v1397, %v1407
      %v1410 = vmul.f32 %v1398, %v1407
      %1413 = vrot.lane.b32.xlu0 %v1409, 7
      %v1414 = vpop.permute.xlu0 %1413
      %1415 = vrot.lane.b32.xlu0 %v1410, 7
      %v1416 = vpop.permute.xlu0 %1415
      %vm1417 = vcmask 56320
      %v1418 = vsel %vm1417, %v1414, %v1416
      %1420 = vst.msk [vmem:[#allocation3 + $0x20] sm:$0xff] %vm1348, %v1418
      %v1421 = vld [vmem:[#allocation2] sm:$0xff]
      %v1422 = vld [vmem:[#allocation2 + $0x8] sm:$0xff]
      %s1423 = scalar_lea.vmem %s2, 3
      %v1424 = vld [vmem:[%s1423] sm:$0x1]
      %v1426 = vlaneseq
      %v1427 = vshrl.u32 %v1426, 7
      %v1428 = vsub.s32 0, %v1427
      %v1429 = vrot.slane %v1424, %v1428
      %1430 = vrot.lane.b32.xlu0 %v1429, 127
      %v1431 = vpop.permute.xlu0 %1430
      %v1433 = vmul.f32 %v1421, %v1431
      %v1434 = vmul.f32 %v1422, %v1431
      %1437 = vrot.lane.b32.xlu0 %v1433, 1
      %v1438 = vpop.permute.xlu0 %1437
      %1439 = vrot.lane.b32.xlu0 %v1434, 1
      %v1440 = vpop.permute.xlu0 %1439
      %v1441 = vsel %vm906, %v1438, %v1440
      %1443 = vst.msk [vmem:[#allocation3 + $0x30] sm:$0xff] %vm1348, %v1441
      %v1444 = vld [vmem:[#allocation2 + $0x8] sm:$0xff]
      %s1445 = scalar_lea.vmem %s2, 4
      %v1446 = vld [vmem:[%s1445] sm:$0x1]
      %v1448 = vlaneseq
      %v1449 = vshrl.u32 %v1448, 7
      %v1450 = vsub.s32 0, %v1449
      %v1451 = vrot.slane %v1446, %v1450
      %v1453 = vmul.f32 %v1444, %v1451
      %1454 = vst.msk [vmem:[#allocation3 + $0x40] sm:$0xff] %vm1348, %v1453
      %v1455 = vld [vmem:[#allocation2 + $0x8] sm:$0xff]
      %s1456 = scalar_lea.vmem %s2, 5
      %v1457 = vld [vmem:[%s1456] sm:$0x1]
      %v1459 = vlaneseq
      %v1460 = vshrl.u32 %v1459, 7
      %v1461 = vsub.s32 0, %v1460
      %v1462 = vrot.slane %v1457, %v1461
      %1463 = vrot.lane.b32.xlu0 %v1462, 1
      %v1464 = vpop.permute.xlu0 %1463
      %v1466 = vmul.f32 %v1455, %v1464
      %1468 = vrot.lane.b32.xlu0 %v1466, 127
      %v1469 = vpop.permute.xlu0 %1468
      %1471 = vst.msk [vmem:[#allocation3 + $0x50] sm:$0xff] %vm1348, %v1469
      %v1472 = vld [vmem:[#allocation2 + $0x8] sm:$0xff]
      %s1473 = scalar_lea.vmem %s2, 6
      %v1474 = vld [vmem:[%s1473] sm:$0x1]
      %v1476 = vlaneseq
      %v1477 = vshrl.u32 %v1476, 7
      %v1478 = vsub.s32 0, %v1477
      %v1479 = vrot.slane %v1474, %v1478
      %1480 = vrot.lane.b32.xlu0 %v1479, 7
      %v1481 = vpop.permute.xlu0 %1480
      %v1483 = vmul.f32 %v1472, %v1481
      %1485 = vrot.lane.b32.xlu0 %v1483, 121
      %v1486 = vpop.permute.xlu0 %1485
      %1488 = vst.msk [vmem:[#allocation3 + $0x60] sm:$0xff] %vm1348, %v1486
      %v1489 = vld [vmem:[#allocation2 + $0x8] sm:$0xff]
      %s1490 = scalar_lea.vmem %s2, 7
      %v1491 = vld [vmem:[%s1490] sm:$0x1]
      %v1493 = vlaneseq
      %v1494 = vshrl.u32 %v1493, 7
      %v1495 = vsub.s32 0, %v1494
      %v1496 = vrot.slane %v1491, %v1495
      %1497 = vrot.lane.b32.xlu0 %v1496, 8
      %v1498 = vpop.permute.xlu0 %1497
      %v1500 = vmul.f32 %v1489, %v1498
      %1502 = vrot.lane.b32.xlu0 %v1500, 120
      %v1503 = vpop.permute.xlu0 %1502
      %1505 = vst.msk [vmem:[#allocation3 + $0x70] sm:$0xff] %vm1348, %v1503
      %v1506 = vld [vmem:[#allocation2 + $0x8] sm:$0xff]
      %s1507 = scalar_lea.vmem %s2, 8
      %v1508 = vld [vmem:[%s1507] sm:$0x1]
      %v1510 = vlaneseq
      %v1511 = vshrl.u32 %v1510, 7
      %v1512 = vsub.s32 0, %v1511
      %v1513 = vrot.slane %v1508, %v1512
      %1514 = vrot.lane.b32.xlu0 %v1513, 9
      %v1515 = vpop.permute.xlu0 %1514
      %v1517 = vmul.f32 %v1506, %v1515
      %1519 = vrot.lane.b32.xlu0 %v1517, 119
      %v1520 = vpop.permute.xlu0 %1519
      %1522 = vst.msk [vmem:[#allocation3 + $0x80] sm:$0xff] %vm1348, %v1520
      %v1523 = vld [vmem:[%s10] sm:$0xff]
      %v1524 = vld [vmem:[%s10 + $0x8] sm:$0xff]
      %v1525 = vld [vmem:[#allocation3] sm:$0xff]
      %v1526 = vld [vmem:[#allocation3 + $0x10] sm:$0xff]
      %v1527 = vld [vmem:[#allocation3 + $0x20] sm:$0xff]
      %v1528 = vld [vmem:[#allocation3 + $0x30] sm:$0xff]
      %v1529 = vld [vmem:[#allocation3 + $0x40] sm:$0xff]
      %v1530 = vld [vmem:[#allocation3 + $0x50] sm:$0xff]
      %v1531 = vld [vmem:[#allocation3 + $0x60] sm:$0xff]
      %v1532 = vld [vmem:[#allocation3 + $0x70] sm:$0xff]
      %v1533 = vld [vmem:[#allocation3 + $0x80] sm:$0xff]
      %v1534 = vld [vmem:[%s11] sm:$0xff]
      %v1535 = vld [vmem:[%s11 + $0x8] sm:$0xff]
      %1537 = vset.pattern.permute.xlu0 0
      %1538 = vperm.xlu0 %1537, %v1534
      %v1539 = vpop.permute.xlu0 %1538
      %1542 = vset.pattern.permute.xlu0 0
      %1543 = vperm.xlu0 %1542, %v1535
      %v1544 = vpop.permute.xlu0 %1543
      %v1547 = vsel %vm1117, %v1523, 0
      %v1550 = vsel %vm1117, %v1524, 0
      %1552 = vmatprep.subr.mxu0 0.0
      %1553 = vmatpush1.msra.mxu0 0.0
      %1554 = vmatprep.subr.mxu0 0.0
      %1555 = vmatpush1.msra.mxu0 0.0
      %1556 = vmatprep.subr.mxu0 0.0
      %1557 = vmatpush1.msra.mxu0 0.0
      %1558 = vmatprep.subr.mxu0 0.0
      %1559 = vmatpush1.msra.mxu0 0.0
      %1560 = vmatprep.subr.mxu0 0.0
      %1561 = vmatpush1.msra.mxu0 0.0
      %1562 = vmatprep.subr.mxu0 0.0
      %1563 = vmatpush1.msra.mxu0 0.0
      %1564 = vmatprep.subr.mxu0 0.0
      %1565 = vmatpush1.msra.mxu0 0.0
      %1566 = vmatprep.subr.mxu0 0.0
      %1567 = vmatpush1.msra.mxu0 %v1533
      %1568 = vmatprep.subr.mxu0 0.0
      %1569 = vmatpush1.msra.mxu0 %v1532
      %1570 = vmatprep.subr.mxu0 0.0
      %1571 = vmatpush1.msra.mxu0 %v1531
      %1572 = vmatprep.subr.mxu0 0.0
      %1573 = vmatpush1.msra.mxu0 %v1530
      %1574 = vmatprep.subr.mxu0 0.0
      %1575 = vmatpush1.msra.mxu0 %v1529
      %1576 = vmatprep.subr.mxu0 0.0
      %1577 = vmatpush1.msra.mxu0 %v1528
      %1578 = vmatprep.subr.mxu0 0.0
      %1579 = vmatpush1.msra.mxu0 %v1527
      %1580 = vmatprep.subr.mxu0 0.0
      %1581 = vmatpush1.msra.mxu0 %v1526
      %1582 = vmatprep.subr.mxu0 0.0
      %1583 = vmatpush1.msra.mxu0 %v1525
      %1584 = vmatprep.subr.mxu0 0.0
      %1585 = vmatpush2.msra.mxu0 0.0
      %1586 = vmatprep.subr.mxu0 0.0
      %1587 = vmatpush2.msra.mxu0 0.0
      %1588 = vmatprep.subr.mxu0 0.0
      %1589 = vmatpush2.msra.mxu0 0.0
      %1590 = vmatprep.subr.mxu0 0.0
      %1591 = vmatpush2.msra.mxu0 0.0
      %1592 = vmatprep.subr.mxu0 0.0
      %1593 = vmatpush2.msra.mxu0 0.0
      %1594 = vmatprep.subr.mxu0 0.0
      %1595 = vmatpush2.msra.mxu0 0.0
      %1596 = vmatprep.subr.mxu0 0.0
      %1597 = vmatpush2.msra.mxu0 0.0
      %1598 = vmatprep.subr.mxu0 0.0
      %1599 = vmatpush2.msra.mxu0 0.0
      %1600 = vmatprep.subr.mxu0 0.0
      %1601 = vmatpush2.msra.mxu0 0.0
      %1602 = vmatprep.subr.mxu0 0.0
      %1603 = vmatpush2.msra.mxu0 0.0
      %1604 = vmatprep.subr.mxu0 0.0
      %1605 = vmatpush2.msra.mxu0 0.0
      %1606 = vmatprep.subr.mxu0 0.0
      %1607 = vmatpush2.msra.mxu0 0.0
      %1608 = vmatprep.subr.mxu0 0.0
      %1609 = vmatpush2.msra.mxu0 0.0
      %1610 = vmatprep.subr.mxu0 0.0
      %1611 = vmatpush2.msra.mxu0 0.0
      %1612 = vmatprep.subr.mxu0 0.0
      %1613 = vmatpush2.msra.mxu0 0.0
      %1614 = vmatprep.subr.mxu0 0.0
      %1615 = vmatpush2.msra.mxu0 0.0
      %1616 = vmatprep.mubr.f32.mxu0 0.0
      %1617 = vmatmul.mubr.f32.gmra.mxu0 %v1547
      %v1618 = vpop.f32.mrf.mxu0
      %v1619 = vadd.f32 %v1539, %v1618
      %v1620 = vpop.f32.mrf.mxu0
      %1621 = vmatprep.mubr.f32.mxu0 0.0
      %1622 = vmatmul.mubr.f32.gmra.mxu0 %v1550
      %v1623 = vpop.f32.mrf.mxu0
      %v1624 = vadd.f32 %v1544, %v1623
      %v1625 = vpop.f32.mrf.mxu0
      %1626 = vdwg.mxu0
      %v1627 = vmax.f32 %v1619, 0.0
      %v1628 = vmax.f32 %v1624, 0.0
      %v1629 = vld [vmem:[%s5] sm:$0xff]
      %v1630 = vld [vmem:[%s5 + $0x8] sm:$0xff]
      %v1631 = vld [vmem:[%s5 + $0x10] sm:$0xff]
      %v1632 = vld [vmem:[%s5 + $0x18] sm:$0xff]
      %v1633 = vld [vmem:[%s5 + $0x20] sm:$0xff]
      %v1634 = vld [vmem:[%s5 + $0x28] sm:$0xff]
      %v1635 = vld [vmem:[%s5 + $0x30] sm:$0xff]
      %v1636 = vld [vmem:[%s5 + $0x38] sm:$0xff]
      %v1638 = vsel %vm1348, %v1627, 0
      %v1641 = vsel %vm1348, %v1628, 0
      %1643 = vmatprep.subr.mxu0 0.0
      %1644 = vmatpush1.msra.mxu0 0.0
      %1645 = vmatprep.subr.mxu0 0.0
      %1646 = vmatpush1.msra.mxu0 0.0
      %1647 = vmatprep.subr.mxu0 0.0
      %1648 = vmatpush1.msra.mxu0 0.0
      %1649 = vmatprep.subr.mxu0 0.0
      %1650 = vmatpush1.msra.mxu0 0.0
      %1651 = vmatprep.subr.mxu0 0.0
      %1652 = vmatpush1.msra.mxu0 0.0
      %1653 = vmatprep.subr.mxu0 0.0
      %1654 = vmatpush1.msra.mxu0 0.0
      %1655 = vmatprep.subr.mxu0 0.0
      %1656 = vmatpush1.msra.mxu0 0.0
      %1657 = vmatprep.subr.mxu0 0.0
      %1658 = vmatpush1.msra.mxu0 0.0
      %1659 = vmatprep.subr.mxu0 0.0
      %1660 = vmatpush1.msra.mxu0 %v1636
      %1661 = vmatprep.subr.mxu0 0.0
      %1662 = vmatpush1.msra.mxu0 %v1635
      %1663 = vmatprep.subr.mxu0 0.0
      %1664 = vmatpush1.msra.mxu0 %v1634
      %1665 = vmatprep.subr.mxu0 0.0
      %1666 = vmatpush1.msra.mxu0 %v1633
      %1667 = vmatprep.subr.mxu0 0.0
      %1668 = vmatpush1.msra.mxu0 %v1632
      %1669 = vmatprep.subr.mxu0 0.0
      %1670 = vmatpush1.msra.mxu0 %v1631
      %1671 = vmatprep.subr.mxu0 0.0
      %1672 = vmatpush1.msra.mxu0 %v1630
      %1673 = vmatprep.subr.mxu0 0.0
      %1674 = vmatpush1.msra.mxu0 %v1629
      %1675 = vmatprep.subr.mxu0 0.0
      %1676 = vmatpush2.msra.mxu0 0.0
      %1677 = vmatprep.subr.mxu0 0.0
      %1678 = vmatpush2.msra.mxu0 0.0
      %1679 = vmatprep.subr.mxu0 0.0
      %1680 = vmatpush2.msra.mxu0 0.0
      %1681 = vmatprep.subr.mxu0 0.0
      %1682 = vmatpush2.msra.mxu0 0.0
      %1683 = vmatprep.subr.mxu0 0.0
      %1684 = vmatpush2.msra.mxu0 0.0
      %1685 = vmatprep.subr.mxu0 0.0
      %1686 = vmatpush2.msra.mxu0 0.0
      %1687 = vmatprep.subr.mxu0 0.0
      %1688 = vmatpush2.msra.mxu0 0.0
      %1689 = vmatprep.subr.mxu0 0.0
      %1690 = vmatpush2.msra.mxu0 0.0
      %1691 = vmatprep.subr.mxu0 0.0
      %1692 = vmatpush2.msra.mxu0 0.0
      %1693 = vmatprep.subr.mxu0 0.0
      %1694 = vmatpush2.msra.mxu0 0.0
      %1695 = vmatprep.subr.mxu0 0.0
      %1696 = vmatpush2.msra.mxu0 0.0
      %1697 = vmatprep.subr.mxu0 0.0
      %1698 = vmatpush2.msra.mxu0 0.0
      %1699 = vmatprep.subr.mxu0 0.0
      %1700 = vmatpush2.msra.mxu0 0.0
      %1701 = vmatprep.subr.mxu0 0.0
      %1702 = vmatpush2.msra.mxu0 0.0
      %1703 = vmatprep.subr.mxu0 0.0
      %1704 = vmatpush2.msra.mxu0 0.0
      %1705 = vmatprep.subr.mxu0 0.0
      %1706 = vmatpush2.msra.mxu0 0.0
      %1707 = vmatprep.mubr.f32.mxu0 0.0
      %1708 = vmatmul.mubr.f32.gmra.mxu0 %v1638
      %v1709 = vpop.f32.mrf.mxu0
      %v1710 = vadd.f32 0.0, %v1709
      %v1711 = vpop.f32.mrf.mxu0
      %1712 = vmatprep.mubr.f32.mxu0 0.0
      %1713 = vmatmul.mubr.f32.gmra.mxu0 %v1641
      %v1714 = vpop.f32.mrf.mxu0
      %v1715 = vadd.f32 0.0, %v1714
      %v1716 = vpop.f32.mrf.mxu0
      %1717 = vdwg.mxu0
      %1718 = vst.msk [vmem:[#allocation4] sm:$0xff] %vm1348, %v1710
      %1719 = vst.msk [vmem:[#allocation4 + $0x10] sm:$0xff] %vm1348, %v1715
      %v1720 = vld [vmem:[#allocation4] sm:$0xff]
      %v1721 = vld [vmem:[#allocation4 + $0x10] sm:$0xff]
      %1724 = vrot.lane.b32.xlu0 %v1720, 112
      %v1725 = vpop.permute.xlu0 %1724
      %1726 = vrot.lane.b32.xlu0 %v1721, 112
      %v1727 = vpop.permute.xlu0 %1726
      %v1730 = vmax.f32 %v1720, %v1725
      %v1731 = vmax.f32 %v1721, %v1727
      %1734 = vrot.lane.b32.xlu0 %v1730, 96
      %v1735 = vpop.permute.xlu0 %1734
      %1736 = vrot.lane.b32.xlu0 %v1731, 96
      %v1737 = vpop.permute.xlu0 %1736
      %v1740 = vmax.f32 %v1730, %v1735
      %v1741 = vmax.f32 %v1731, %v1737
      %1742 = vst [vmem:[#allocation2] sm:$0xff] 0.0
      %1743 = vst [vmem:[#allocation2 + $0x8] sm:$0xff] 0.0
      %1744 = vst [vmem:[#allocation2 + $0x10] sm:$0xff] 0.0
      %1745 = vst [vmem:[#allocation2 + $0x18] sm:$0xff] 0.0
      %1746 = vst [vmem:[#allocation2 + $0x20] sm:$0xff] 0.0
      %1747 = vst [vmem:[#allocation2 + $0x28] sm:$0xff] 0.0
      %1748 = vst [vmem:[#allocation2 + $0x30] sm:$0xff] 0.0
      %1749 = vst [vmem:[#allocation2 + $0x38] sm:$0xff] 0.0
      %1750 = vst.msk [vmem:[#allocation2 + $0x8] sm:$0xff] %vm822, %v1740
      %1751 = vst.msk [vmem:[#allocation2 + $0x28] sm:$0xff] %vm822, %v1741
      %v1752 = vld [vmem:[#allocation2] sm:$0xff]
      %v1753 = vld [vmem:[#allocation2 + $0x8] sm:$0xff]
      %v1754 = vld [vmem:[#allocation2 + $0x20] sm:$0xff]
      %v1755 = vld [vmem:[#allocation2 + $0x28] sm:$0xff]
      %v1756 = vld [vmem:[%s3] sm:$0x1]
      %v1758 = vlaneseq
      %v1759 = vshrl.u32 %v1758, 7
      %v1760 = vsub.s32 0, %v1759
      %v1761 = vrot.slane %v1756, %v1760
      %1762 = vrot.lane.b32.xlu0 %v1761, 123
      %v1763 = vpop.permute.xlu0 %1762
      %v1765 = vmul.f32 %v1752, %v1763
      %v1766 = vmul.f32 %v1753, %v1763
      %v1767 = vmul.f32 %v1754, %v1763
      %v1768 = vmul.f32 %v1755, %v1763
      %1773 = vrot.lane.b32.xlu0 %v1765, 5
      %v1774 = vpop.permute.xlu0 %1773
      %1775 = vrot.lane.b32.xlu0 %v1766, 5
      %v1776 = vpop.permute.xlu0 %1775
      %1777 = vrot.lane.b32.xlu0 %v1767, 5
      %v1778 = vpop.permute.xlu0 %1777
      %1779 = vrot.lane.b32.xlu0 %v1768, 5
      %v1780 = vpop.permute.xlu0 %1779
      %vm1781 = vcmask 39936
      %v1782 = vsel %vm1781, %v1774, %v1776
      %v1783 = vsel %vm1781, %v1778, %v1780
      %1786 = vst.msk [vmem:[#allocation3] sm:$0xff] %vm822, %v1782
      %1787 = vst.msk [vmem:[#allocation3 + $0x10] sm:$0xff] %vm822, %v1783
      %v1788 = vld [vmem:[#allocation2] sm:$0xff]
      %v1789 = vld [vmem:[#allocation2 + $0x8] sm:$0xff]
      %v1790 = vld [vmem:[#allocation2 + $0x20] sm:$0xff]
      %v1791 = vld [vmem:[#allocation2 + $0x28] sm:$0xff]
      %s1792 = scalar_lea.vmem %s3, 1
      %v1793 = vld [vmem:[%s1792] sm:$0x1]
      %v1795 = vlaneseq
      %v1796 = vshrl.u32 %v1795, 7
      %v1797 = vsub.s32 0, %v1796
      %v1798 = vrot.slane %v1793, %v1797
      %1799 = vrot.lane.b32.xlu0 %v1798, 124
      %v1800 = vpop.permute.xlu0 %1799
      %v1802 = vmul.f32 %v1788, %v1800
      %v1803 = vmul.f32 %v1789, %v1800
      %v1804 = vmul.f32 %v1790, %v1800
      %v1805 = vmul.f32 %v1791, %v1800
      %1810 = vrot.lane.b32.xlu0 %v1802, 4
      %v1811 = vpop.permute.xlu0 %1810
      %1812 = vrot.lane.b32.xlu0 %v1803, 4
      %v1813 = vpop.permute.xlu0 %1812
      %1814 = vrot.lane.b32.xlu0 %v1804, 4
      %v1815 = vpop.permute.xlu0 %1814
      %1816 = vrot.lane.b32.xlu0 %v1805, 4
      %v1817 = vpop.permute.xlu0 %1816
      %vm1818 = vcmask 31744
      %v1819 = vsel %vm1818, %v1811, %v1813
      %v1820 = vsel %vm1818, %v1815, %v1817
      %1823 = vst.msk [vmem:[#allocation3 + $0x20] sm:$0xff] %vm822, %v1819
      %1824 = vst.msk [vmem:[#allocation3 + $0x30] sm:$0xff] %vm822, %v1820
      %v1825 = vld [vmem:[#allocation2] sm:$0xff]
      %v1826 = vld [vmem:[#allocation2 + $0x8] sm:$0xff]
      %v1827 = vld [vmem:[#allocation2 + $0x20] sm:$0xff]
      %v1828 = vld [vmem:[#allocation2 + $0x28] sm:$0xff]
      %s1829 = scalar_lea.vmem %s3, 2
      %v1830 = vld [vmem:[%s1829] sm:$0x1]
      %v1832 = vlaneseq
      %v1833 = vshrl.u32 %v1832, 7
      %v1834 = vsub.s32 0, %v1833
      %v1835 = vrot.slane %v1830, %v1834
      %1836 = vrot.lane.b32.xlu0 %v1835, 125
      %v1837 = vpop.permute.xlu0 %1836
      %v1839 = vmul.f32 %v1825, %v1837
      %v1840 = vmul.f32 %v1826, %v1837
      %v1841 = vmul.f32 %v1827, %v1837
      %v1842 = vmul.f32 %v1828, %v1837
      %1847 = vrot.lane.b32.xlu0 %v1839, 3
      %v1848 = vpop.permute.xlu0 %1847
      %1849 = vrot.lane.b32.xlu0 %v1840, 3
      %v1850 = vpop.permute.xlu0 %1849
      %1851 = vrot.lane.b32.xlu0 %v1841, 3
      %v1852 = vpop.permute.xlu0 %1851
      %1853 = vrot.lane.b32.xlu0 %v1842, 3
      %v1854 = vpop.permute.xlu0 %1853
      %vm1855 = vcmask 23552
      %v1856 = vsel %vm1855, %v1848, %v1850
      %v1857 = vsel %vm1855, %v1852, %v1854
      %1860 = vst.msk [vmem:[#allocation3 + $0x40] sm:$0xff] %vm822, %v1856
      %1861 = vst.msk [vmem:[#allocation3 + $0x50] sm:$0xff] %vm822, %v1857
      %v1862 = vld [vmem:[#allocation2] sm:$0xff]
      %v1863 = vld [vmem:[#allocation2 + $0x8] sm:$0xff]
      %v1864 = vld [vmem:[#allocation2 + $0x20] sm:$0xff]
      %v1865 = vld [vmem:[#allocation2 + $0x28] sm:$0xff]
      %s1866 = scalar_lea.vmem %s3, 3
      %v1867 = vld [vmem:[%s1866] sm:$0x1]
      %v1869 = vlaneseq
      %v1870 = vshrl.u32 %v1869, 7
      %v1871 = vsub.s32 0, %v1870
      %v1872 = vrot.slane %v1867, %v1871
      %1873 = vrot.lane.b32.xlu0 %v1872, 127
      %v1874 = vpop.permute.xlu0 %1873
      %v1876 = vmul.f32 %v1862, %v1874
      %v1877 = vmul.f32 %v1863, %v1874
      %v1878 = vmul.f32 %v1864, %v1874
      %v1879 = vmul.f32 %v1865, %v1874
      %1884 = vrot.lane.b32.xlu0 %v1876, 1
      %v1885 = vpop.permute.xlu0 %1884
      %1886 = vrot.lane.b32.xlu0 %v1877, 1
      %v1887 = vpop.permute.xlu0 %1886
      %1888 = vrot.lane.b32.xlu0 %v1878, 1
      %v1889 = vpop.permute.xlu0 %1888
      %1890 = vrot.lane.b32.xlu0 %v1879, 1
      %v1891 = vpop.permute.xlu0 %1890
      %v1892 = vsel %vm906, %v1885, %v1887
      %v1893 = vsel %vm906, %v1889, %v1891
      %1896 = vst.msk [vmem:[#allocation3 + $0x60] sm:$0xff] %vm822, %v1892
      %1897 = vst.msk [vmem:[#allocation3 + $0x70] sm:$0xff] %vm822, %v1893
      %v1898 = vld [vmem:[#allocation2 + $0x8] sm:$0xff]
      %v1899 = vld [vmem:[#allocation2 + $0x28] sm:$0xff]
      %s1900 = scalar_lea.vmem %s3, 4
      %v1901 = vld [vmem:[%s1900] sm:$0x1]
      %v1903 = vlaneseq
      %v1904 = vshrl.u32 %v1903, 7
      %v1905 = vsub.s32 0, %v1904
      %v1906 = vrot.slane %v1901, %v1905
      %v1908 = vmul.f32 %v1898, %v1906
      %v1909 = vmul.f32 %v1899, %v1906
      %1910 = vst.msk [vmem:[#allocation3 + $0x80] sm:$0xff] %vm822, %v1908
      %1911 = vst.msk [vmem:[#allocation3 + $0x90] sm:$0xff] %vm822, %v1909
      %v1912 = vld [vmem:[#allocation2 + $0x8] sm:$0xff]
      %v1913 = vld [vmem:[#allocation2 + $0x28] sm:$0xff]
      %s1914 = scalar_lea.vmem %s3, 5
      %v1915 = vld [vmem:[%s1914] sm:$0x1]
      %v1917 = vlaneseq
      %v1918 = vshrl.u32 %v1917, 7
      %v1919 = vsub.s32 0, %v1918
      %v1920 = vrot.slane %v1915, %v1919
      %1921 = vrot.lane.b32.xlu0 %v1920, 1
      %v1922 = vpop.permute.xlu0 %1921
      %v1924 = vmul.f32 %v1912, %v1922
      %v1925 = vmul.f32 %v1913, %v1922
      %1928 = vrot.lane.b32.xlu0 %v1924, 127
      %v1929 = vpop.permute.xlu0 %1928
      %1930 = vrot.lane.b32.xlu0 %v1925, 127
      %v1931 = vpop.permute.xlu0 %1930
      %1934 = vst.msk [vmem:[#allocation3 + $0xa0] sm:$0xff] %vm822, %v1929
      %1935 = vst.msk [vmem:[#allocation3 + $0xb0] sm:$0xff] %vm822, %v1931
      %v1936 = vld [vmem:[#allocation2 + $0x8] sm:$0xff]
      %v1937 = vld [vmem:[#allocation2 + $0x28] sm:$0xff]
      %s1938 = scalar_lea.vmem %s3, 6
      %v1939 = vld [vmem:[%s1938] sm:$0x1]
      %v1941 = vlaneseq
      %v1942 = vshrl.u32 %v1941, 7
      %v1943 = vsub.s32 0, %v1942
      %v1944 = vrot.slane %v1939, %v1943
      %1945 = vrot.lane.b32.xlu0 %v1944, 3
      %v1946 = vpop.permute.xlu0 %1945
      %v1948 = vmul.f32 %v1936, %v1946
      %v1949 = vmul.f32 %v1937, %v1946
      %1952 = vrot.lane.b32.xlu0 %v1948, 125
      %v1953 = vpop.permute.xlu0 %1952
      %1954 = vrot.lane.b32.xlu0 %v1949, 125
      %v1955 = vpop.permute.xlu0 %1954
      %1958 = vst.msk [vmem:[#allocation3 + $0xc0] sm:$0xff] %vm822, %v1953
      %1959 = vst.msk [vmem:[#allocation3 + $0xd0] sm:$0xff] %vm822, %v1955
      %v1960 = vld [vmem:[#allocation2 + $0x8] sm:$0xff]
      %v1961 = vld [vmem:[#allocation2 + $0x28] sm:$0xff]
      %s1962 = scalar_lea.vmem %s3, 7
      %v1963 = vld [vmem:[%s1962] sm:$0x1]
      %v1965 = vlaneseq
      %v1966 = vshrl.u32 %v1965, 7
      %v1967 = vsub.s32 0, %v1966
      %v1968 = vrot.slane %v1963, %v1967
      %1969 = vrot.lane.b32.xlu0 %v1968, 4
      %v1970 = vpop.permute.xlu0 %1969
      %v1972 = vmul.f32 %v1960, %v1970
      %v1973 = vmul.f32 %v1961, %v1970
      %1976 = vrot.lane.b32.xlu0 %v1972, 124
      %v1977 = vpop.permute.xlu0 %1976
      %1978 = vrot.lane.b32.xlu0 %v1973, 124
      %v1979 = vpop.permute.xlu0 %1978
      %1982 = vst.msk [vmem:[#allocation3 + $0xe0] sm:$0xff] %vm822, %v1977
      %1983 = vst.msk [vmem:[#allocation3 + $0xf0] sm:$0xff] %vm822, %v1979
      %v1984 = vld [vmem:[#allocation2 + $0x8] sm:$0xff]
      %v1985 = vld [vmem:[#allocation2 + $0x28] sm:$0xff]
      %s1986 = scalar_lea.vmem %s3, 8
      %v1987 = vld [vmem:[%s1986] sm:$0x1]
      %v1989 = vlaneseq
      %v1990 = vshrl.u32 %v1989, 7
      %v1991 = vsub.s32 0, %v1990
      %v1992 = vrot.slane %v1987, %v1991
      %1993 = vrot.lane.b32.xlu0 %v1992, 5
      %v1994 = vpop.permute.xlu0 %1993
      %v1996 = vmul.f32 %v1984, %v1994
      %v1997 = vmul.f32 %v1985, %v1994
      %2000 = vrot.lane.b32.xlu0 %v1996, 123
      %v2001 = vpop.permute.xlu0 %2000
      %2002 = vrot.lane.b32.xlu0 %v1997, 123
      %v2003 = vpop.permute.xlu0 %2002
      %2006 = vst.msk [vmem:[#allocation3 + $0x100] sm:$0xff] %vm822, %v2001
      %2007 = vst.msk [vmem:[#allocation3 + $0x110] sm:$0xff] %vm822, %v2003
      %v2008 = vld [vmem:[%s12] sm:$0xff]
      %v2009 = vld [vmem:[%s12 + $0x8] sm:$0xff]
      %v2010 = vld [vmem:[%s12 + $0x10] sm:$0xff]
      %v2011 = vld [vmem:[%s12 + $0x18] sm:$0xff]
      %v2012 = vld [vmem:[%s12 + $0x20] sm:$0xff]
      %v2013 = vld [vmem:[%s12 + $0x28] sm:$0xff]
      %v2014 = vld [vmem:[%s12 + $0x30] sm:$0xff]
      %v2015 = vld [vmem:[%s12 + $0x38] sm:$0xff]
      %v2016 = vld [vmem:[#allocation3] sm:$0xff]
      %v2017 = vld [vmem:[#allocation3 + $0x10] sm:$0xff]
      %v2018 = vld [vmem:[#allocation3 + $0x20] sm:$0xff]
      %v2019 = vld [vmem:[#allocation3 + $0x30] sm:$0xff]
      %v2020 = vld [vmem:[#allocation3 + $0x40] sm:$0xff]
      %v2021 = vld [vmem:[#allocation3 + $0x50] sm:$0xff]
      %v2022 = vld [vmem:[#allocation3 + $0x60] sm:$0xff]
      %v2023 = vld [vmem:[#allocation3 + $0x70] sm:$0xff]
      %v2024 = vld [vmem:[#allocation3 + $0x80] sm:$0xff]
      %v2025 = vld [vmem:[#allocation3 + $0x90] sm:$0xff]
      %v2026 = vld [vmem:[#allocation3 + $0xa0] sm:$0xff]
      %v2027 = vld [vmem:[#allocation3 + $0xb0] sm:$0xff]
      %v2028 = vld [vmem:[#allocation3 + $0xc0] sm:$0xff]
      %v2029 = vld [vmem:[#allocation3 + $0xd0] sm:$0xff]
      %v2030 = vld [vmem:[#allocation3 + $0xe0] sm:$0xff]
      %v2031 = vld [vmem:[#allocation3 + $0xf0] sm:$0xff]
      %v2032 = vld [vmem:[#allocation3 + $0x100] sm:$0xff]
      %v2033 = vld [vmem:[#allocation3 + $0x110] sm:$0xff]
      %v2034 = vld [vmem:[%s13] sm:$0xff]
      %v2035 = vld [vmem:[%s13 + $0x8] sm:$0xff]
      %v2036 = vld [vmem:[%s13 + $0x10] sm:$0xff]
      %v2037 = vld [vmem:[%s13 + $0x18] sm:$0xff]
      %2039 = vset.pattern.permute.xlu0 0
      %2040 = vperm.xlu0 %2039, %v2034
      %v2041 = vpop.permute.xlu0 %2040
      %2044 = vset.pattern.permute.xlu0 0
      %2045 = vperm.xlu0 %2044, %v2035
      %v2046 = vpop.permute.xlu0 %2045
      %2049 = vset.pattern.permute.xlu0 0
      %2050 = vperm.xlu0 %2049, %v2036
      %v2051 = vpop.permute.xlu0 %2050
      %2054 = vset.pattern.permute.xlu0 0
      %2055 = vperm.xlu0 %2054, %v2037
      %v2056 = vpop.permute.xlu0 %2055
      %v2059 = vsel %vm822, %v2009, 0
      %v2062 = vsel %vm822, %v2011, 0
      %v2065 = vsel %vm822, %v2013, 0
      %v2068 = vsel %vm822, %v2015, 0
      %2070 = vmatprep.subr.mxu0 0.0
      %2071 = vmatpush1.msra.mxu0 %v2031
      %2072 = vmatprep.subr.mxu0 0.0
      %2073 = vmatpush1.msra.mxu0 %v2030
      %2074 = vmatprep.subr.mxu0 0.0
      %2075 = vmatpush1.msra.mxu0 %v2029
      %2076 = vmatprep.subr.mxu0 0.0
      %2077 = vmatpush1.msra.mxu0 %v2028
      %2078 = vmatprep.subr.mxu0 0.0
      %2079 = vmatpush1.msra.mxu0 %v2027
      %2080 = vmatprep.subr.mxu0 0.0
      %2081 = vmatpush1.msra.mxu0 %v2026
      %2082 = vmatprep.subr.mxu0 0.0
      %2083 = vmatpush1.msra.mxu0 %v2025
      %2084 = vmatprep.subr.mxu0 0.0
      %2085 = vmatpush1.msra.mxu0 %v2024
      %2086 = vmatprep.subr.mxu0 0.0
      %2087 = vmatpush1.msra.mxu0 %v2023
      %2088 = vmatprep.subr.mxu0 0.0
      %2089 = vmatpush1.msra.mxu0 %v2022
      %2090 = vmatprep.subr.mxu0 0.0
      %2091 = vmatpush1.msra.mxu0 %v2021
      %2092 = vmatprep.subr.mxu0 0.0
      %2093 = vmatpush1.msra.mxu0 %v2020
      %2094 = vmatprep.subr.mxu0 0.0
      %2095 = vmatpush1.msra.mxu0 %v2019
      %2096 = vmatprep.subr.mxu0 0.0
      %2097 = vmatpush1.msra.mxu0 %v2018
      %2098 = vmatprep.subr.mxu0 0.0
      %2099 = vmatpush1.msra.mxu0 %v2017
      %2100 = vmatprep.subr.mxu0 0.0
      %2101 = vmatpush1.msra.mxu0 %v2016
      %2102 = vmatprep.subr.mxu0 0.0
      %2103 = vmatpush2.msra.mxu0 0.0
      %2104 = vmatprep.subr.mxu0 0.0
      %2105 = vmatpush2.msra.mxu0 0.0
      %2106 = vmatprep.subr.mxu0 0.0
      %2107 = vmatpush2.msra.mxu0 0.0
      %2108 = vmatprep.subr.mxu0 0.0
      %2109 = vmatpush2.msra.mxu0 0.0
      %2110 = vmatprep.subr.mxu0 0.0
      %2111 = vmatpush2.msra.mxu0 0.0
      %2112 = vmatprep.subr.mxu0 0.0
      %2113 = vmatpush2.msra.mxu0 0.0
      %2114 = vmatprep.subr.mxu0 0.0
      %2115 = vmatpush2.msra.mxu0 0.0
      %2116 = vmatprep.subr.mxu0 0.0
      %2117 = vmatpush2.msra.mxu0 0.0
      %2118 = vmatprep.subr.mxu0 0.0
      %2119 = vmatpush2.msra.mxu0 0.0
      %2120 = vmatprep.subr.mxu0 0.0
      %2121 = vmatpush2.msra.mxu0 0.0
      %2122 = vmatprep.subr.mxu0 0.0
      %2123 = vmatpush2.msra.mxu0 0.0
      %2124 = vmatprep.subr.mxu0 0.0
      %2125 = vmatpush2.msra.mxu0 0.0
      %2126 = vmatprep.subr.mxu0 0.0
      %2127 = vmatpush2.msra.mxu0 0.0
      %2128 = vmatprep.subr.mxu0 0.0
      %2129 = vmatpush2.msra.mxu0 0.0
      %2130 = vmatprep.subr.mxu0 0.0
      %2131 = vmatpush2.msra.mxu0 %v2033
      %2132 = vmatprep.subr.mxu0 0.0
      %2133 = vmatpush2.msra.mxu0 %v2032
      %2134 = vmatprep.mubr.f32.mxu0 %v2059
      %2135 = vmatmul.mubr.f32.gmra.mxu0 %v2008
      %v2136 = vpop.f32.mrf.mxu0
      %v2137 = vadd.f32 %v2041, %v2136
      %v2138 = vpop.f32.mrf.mxu0
      %2139 = vmatprep.mubr.f32.mxu0 %v2062
      %2140 = vmatmul.mubr.f32.gmra.mxu0 %v2010
      %v2141 = vpop.f32.mrf.mxu0
      %v2142 = vadd.f32 %v2046, %v2141
      %v2143 = vpop.f32.mrf.mxu0
      %2144 = vmatprep.mubr.f32.mxu0 %v2065
      %2145 = vmatmul.mubr.f32.gmra.mxu0 %v2012
      %v2146 = vpop.f32.mrf.mxu0
      %v2147 = vadd.f32 %v2051, %v2146
      %v2148 = vpop.f32.mrf.mxu0
      %2149 = vmatprep.mubr.f32.mxu0 %v2068
      %2150 = vmatmul.mubr.f32.gmra.mxu0 %v2014
      %v2151 = vpop.f32.mrf.mxu0
      %v2152 = vadd.f32 %v2056, %v2151
      %v2153 = vpop.f32.mrf.mxu0
      %2154 = vdwg.mxu0
      %v2155 = vmax.f32 %v2137, 0.0
      %v2156 = vmax.f32 %v2142, 0.0
      %v2157 = vmax.f32 %v2147, 0.0
      %v2158 = vmax.f32 %v2152, 0.0
      %v2159 = vld [vmem:[%s14] sm:$0xff]
      %v2160 = vld [vmem:[%s14 + $0x8] sm:$0xff]
      %v2161 = vld [vmem:[%s14 + $0x10] sm:$0xff]
      %v2162 = vld [vmem:[%s14 + $0x18] sm:$0xff]
      %v2163 = vld [vmem:[%s14 + $0x20] sm:$0xff]
      %v2164 = vld [vmem:[%s14 + $0x28] sm:$0xff]
      %v2165 = vld [vmem:[%s14 + $0x30] sm:$0xff]
      %v2166 = vld [vmem:[%s14 + $0x38] sm:$0xff]
      %vm2167 = vcmask 261120
      %v2169 = vsel %vm2167, %v2159, 0
      %v2172 = vsel %vm2167, %v2160, 0
      %v2175 = vsel %vm2167, %v2161, 0
      %v2178 = vsel %vm2167, %v2162, 0
      %v2181 = vsel %vm2167, %v2163, 0
      %v2184 = vsel %vm2167, %v2164, 0
      %v2187 = vsel %vm2167, %v2165, 0
      %v2190 = vsel %vm2167, %v2166, 0
      %2192 = vmatprep.subr.mxu0 0.0
      %2193 = vmatpush1.msra.mxu0 0.0
      %2194 = vmatprep.subr.mxu0 0.0
      %2195 = vmatpush1.msra.mxu0 0.0
      %2196 = vmatprep.subr.mxu0 0.0
      %2197 = vmatpush1.msra.mxu0 0.0
      %2198 = vmatprep.subr.mxu0 0.0
      %2199 = vmatpush1.msra.mxu0 0.0
      %2200 = vmatprep.subr.mxu0 0.0
      %2201 = vmatpush1.msra.mxu0 0.0
      %2202 = vmatprep.subr.mxu0 0.0
      %2203 = vmatpush1.msra.mxu0 0.0
      %2204 = vmatprep.subr.mxu0 0.0
      %2205 = vmatpush1.msra.mxu0 0.0
      %2206 = vmatprep.subr.mxu0 0.0
      %2207 = vmatpush1.msra.mxu0 0.0
      %2208 = vmatprep.subr.mxu0 0.0
      %2209 = vmatpush1.msra.mxu0 0.0
      %2210 = vmatprep.subr.mxu0 0.0
      %2211 = vmatpush1.msra.mxu0 0.0
      %2212 = vmatprep.subr.mxu0 0.0
      %2213 = vmatpush1.msra.mxu0 0.0
      %2214 = vmatprep.subr.mxu0 0.0
      %2215 = vmatpush1.msra.mxu0 0.0
      %2216 = vmatprep.subr.mxu0 0.0
      %2217 = vmatpush1.msra.mxu0 %v2158
      %2218 = vmatprep.subr.mxu0 0.0
      %2219 = vmatpush1.msra.mxu0 %v2157
      %2220 = vmatprep.subr.mxu0 0.0
      %2221 = vmatpush1.msra.mxu0 %v2156
      %2222 = vmatprep.subr.mxu0 0.0
      %2223 = vmatpush1.msra.mxu0 %v2155
      %2224 = vmatprep.subr.mxu0 0.0
      %2225 = vmatpush2.msra.mxu0 0.0
      %2226 = vmatprep.subr.mxu0 0.0
      %2227 = vmatpush2.msra.mxu0 0.0
      %2228 = vmatprep.subr.mxu0 0.0
      %2229 = vmatpush2.msra.mxu0 0.0
      %2230 = vmatprep.subr.mxu0 0.0
      %2231 = vmatpush2.msra.mxu0 0.0
      %2232 = vmatprep.subr.mxu0 0.0
      %2233 = vmatpush2.msra.mxu0 0.0
      %2234 = vmatprep.subr.mxu0 0.0
      %2235 = vmatpush2.msra.mxu0 0.0
      %2236 = vmatprep.subr.mxu0 0.0
      %2237 = vmatpush2.msra.mxu0 0.0
      %2238 = vmatprep.subr.mxu0 0.0
      %2239 = vmatpush2.msra.mxu0 0.0
      %2240 = vmatprep.subr.mxu0 0.0
      %2241 = vmatpush2.msra.mxu0 0.0
      %2242 = vmatprep.subr.mxu0 0.0
      %2243 = vmatpush2.msra.mxu0 0.0
      %2244 = vmatprep.subr.mxu0 0.0
      %2245 = vmatpush2.msra.mxu0 0.0
      %2246 = vmatprep.subr.mxu0 0.0
      %2247 = vmatpush2.msra.mxu0 0.0
      %2248 = vmatprep.subr.mxu0 0.0
      %2249 = vmatpush2.msra.mxu0 0.0
      %2250 = vmatprep.subr.mxu0 0.0
      %2251 = vmatpush2.msra.mxu0 0.0
      %2252 = vmatprep.subr.mxu0 0.0
      %2253 = vmatpush2.msra.mxu0 0.0
      %2254 = vmatprep.subr.mxu0 0.0
      %2255 = vmatpush2.msra.mxu0 0.0
      %2256 = vmatprep.mubr.f32.mxu0 0.0
      %2257 = vmatmul.mubr.f32.gmra.mxu0 %v2169
      %v2258 = vpop.f32.mrf.mxu0
      %v2259 = vadd.f32 0.0, %v2258
      %v2260 = vpop.f32.mrf.mxu0
      %2261 = vmatprep.mubr.f32.mxu0 0.0
      %2262 = vmatmul.mubr.f32.gmra.mxu0 %v2172
      %v2263 = vpop.f32.mrf.mxu0
      %v2264 = vadd.f32 0.0, %v2263
      %v2265 = vpop.f32.mrf.mxu0
      %2266 = vmatprep.mubr.f32.mxu0 0.0
      %2267 = vmatmul.mubr.f32.gmra.mxu0 %v2175
      %v2268 = vpop.f32.mrf.mxu0
      %v2269 = vadd.f32 0.0, %v2268
      %v2270 = vpop.f32.mrf.mxu0
      %2271 = vmatprep.mubr.f32.mxu0 0.0
      %2272 = vmatmul.mubr.f32.gmra.mxu0 %v2178
      %v2273 = vpop.f32.mrf.mxu0
      %v2274 = vadd.f32 0.0, %v2273
      %v2275 = vpop.f32.mrf.mxu0
      %2276 = vmatprep.mubr.f32.mxu0 0.0
      %2277 = vmatmul.mubr.f32.gmra.mxu0 %v2181
      %v2278 = vpop.f32.mrf.mxu0
      %v2279 = vadd.f32 0.0, %v2278
      %v2280 = vpop.f32.mrf.mxu0
      %2281 = vmatprep.mubr.f32.mxu0 0.0
      %2282 = vmatmul.mubr.f32.gmra.mxu0 %v2184
      %v2283 = vpop.f32.mrf.mxu0
      %v2284 = vadd.f32 0.0, %v2283
      %v2285 = vpop.f32.mrf.mxu0
      %2286 = vmatprep.mubr.f32.mxu0 0.0
      %2287 = vmatmul.mubr.f32.gmra.mxu0 %v2187
      %v2288 = vpop.f32.mrf.mxu0
      %v2289 = vadd.f32 0.0, %v2288
      %v2290 = vpop.f32.mrf.mxu0
      %2291 = vmatprep.mubr.f32.mxu0 0.0
      %2292 = vmatmul.mubr.f32.gmra.mxu0 %v2190
      %v2293 = vpop.f32.mrf.mxu0
      %v2294 = vadd.f32 0.0, %v2293
      %v2295 = vpop.f32.mrf.mxu0
      %2296 = vdwg.mxu0
      %2297 = vst.msk [vmem:[#allocation4] sm:$0xff] %vm822, %v2259
      %2298 = vst.msk [vmem:[#allocation4 + $0x10] sm:$0xff] %vm822, %v2264
      %2301 = vrot.lane.b32.xlu0 %v2269, 16
      %v2302 = vpop.permute.xlu0 %2301
      %2303 = vrot.lane.b32.xlu0 %v2274, 16
      %v2304 = vpop.permute.xlu0 %2303
      %vm2307 = vcmask 261248
      %2308 = vst.msk [vmem:[#allocation4] sm:$0xff] %vm2307, %v2302
      %2309 = vst.msk [vmem:[#allocation4 + $0x10] sm:$0xff] %vm2307, %v2304
      %2312 = vrot.lane.b32.xlu0 %v2279, 32
      %v2313 = vpop.permute.xlu0 %2312
      %2314 = vrot.lane.b32.xlu0 %v2284, 32
      %v2315 = vpop.permute.xlu0 %2314
      %vm2318 = vcmask 392448
      %2319 = vst.msk [vmem:[#allocation4] sm:$0xff] %vm2318, %v2313
      %2320 = vst.msk [vmem:[#allocation4 + $0x10] sm:$0xff] %vm2318, %v2315
      %2323 = vrot.lane.b32.xlu0 %v2289, 48
      %v2324 = vpop.permute.xlu0 %2323
      %2325 = vrot.lane.b32.xlu0 %v2294, 48
      %v2326 = vpop.permute.xlu0 %2325
      %vm2329 = vcmask 523648
      %2330 = vst.msk [vmem:[#allocation4] sm:$0xff] %vm2329, %v2324
      %2331 = vst.msk [vmem:[#allocation4 + $0x10] sm:$0xff] %vm2329, %v2326
      %v2332 = vld [vmem:[#allocation4] sm:$0xff]
      %v2333 = vld [vmem:[#allocation4 + $0x10] sm:$0xff]
      %v2334 = vld [vmem:[%s6] sm:$0xff]
      %v2335 = vld [vmem:[%s6 + $0x8] sm:$0xff]
      %v2336 = vld [vmem:[%s6 + $0x10] sm:$0xff]
      %v2337 = vld [vmem:[%s6 + $0x18] sm:$0xff]
      %v2338 = vld [vmem:[%s6 + $0x20] sm:$0xff]
      %v2339 = vld [vmem:[%s6 + $0x28] sm:$0xff]
      %v2340 = vld [vmem:[%s6 + $0x30] sm:$0xff]
      %v2341 = vld [vmem:[%s6 + $0x38] sm:$0xff]
      %v2342 = vld [vmem:[%s15] sm:$0xff]
      %v2343 = vld [vmem:[%s15 + $0x8] sm:$0xff]
      %2345 = vset.pattern.permute.xlu0 0
      %2346 = vperm.xlu0 %2345, %v2342
      %v2347 = vpop.permute.xlu0 %2346
      %2350 = vset.pattern.permute.xlu0 0
      %2351 = vperm.xlu0 %2350, %v2343
      %v2352 = vpop.permute.xlu0 %2351
      %v2355 = vsel %vm1348, %v2332, 0
      %v2358 = vsel %vm1348, %v2333, 0
      %2360 = vmatprep.subr.mxu0 0.0
      %2361 = vmatpush1.msra.mxu0 0.0
      %2362 = vmatprep.subr.mxu0 0.0
      %2363 = vmatpush1.msra.mxu0 0.0
      %2364 = vmatprep.subr.mxu0 0.0
      %2365 = vmatpush1.msra.mxu0 0.0
      %2366 = vmatprep.subr.mxu0 0.0
      %2367 = vmatpush1.msra.mxu0 0.0
      %2368 = vmatprep.subr.mxu0 0.0
      %2369 = vmatpush1.msra.mxu0 0.0
      %2370 = vmatprep.subr.mxu0 0.0
      %2371 = vmatpush1.msra.mxu0 0.0
      %2372 = vmatprep.subr.mxu0 0.0
      %2373 = vmatpush1.msra.mxu0 0.0
      %2374 = vmatprep.subr.mxu0 0.0
      %2375 = vmatpush1.msra.mxu0 0.0
      %2376 = vmatprep.subr.mxu0 0.0
      %2377 = vmatpush1.msra.mxu0 %v2341
      %2378 = vmatprep.subr.mxu0 0.0
      %2379 = vmatpush1.msra.mxu0 %v2340
      %2380 = vmatprep.subr.mxu0 0.0
      %2381 = vmatpush1.msra.mxu0 %v2339
      %2382 = vmatprep.subr.mxu0 0.0
      %2383 = vmatpush1.msra.mxu0 %v2338
      %2384 = vmatprep.subr.mxu0 0.0
      %2385 = vmatpush1.msra.mxu0 %v2337
      %2386 = vmatprep.subr.mxu0 0.0
      %2387 = vmatpush1.msra.mxu0 %v2336
      %2388 = vmatprep.subr.mxu0 0.0
      %2389 = vmatpush1.msra.mxu0 %v2335
      %2390 = vmatprep.subr.mxu0 0.0
      %2391 = vmatpush1.msra.mxu0 %v2334
      %2392 = vmatprep.subr.mxu0 0.0
      %2393 = vmatpush2.msra.mxu0 0.0
      %2394 = vmatprep.subr.mxu0 0.0
      %2395 = vmatpush2.msra.mxu0 0.0
      %2396 = vmatprep.subr.mxu0 0.0
      %2397 = vmatpush2.msra.mxu0 0.0
      %2398 = vmatprep.subr.mxu0 0.0
      %2399 = vmatpush2.msra.mxu0 0.0
      %2400 = vmatprep.subr.mxu0 0.0
      %2401 = vmatpush2.msra.mxu0 0.0
      %2402 = vmatprep.subr.mxu0 0.0
      %2403 = vmatpush2.msra.mxu0 0.0
      %2404 = vmatprep.subr.mxu0 0.0
      %2405 = vmatpush2.msra.mxu0 0.0
      %2406 = vmatprep.subr.mxu0 0.0
      %2407 = vmatpush2.msra.mxu0 0.0
      %2408 = vmatprep.subr.mxu0 0.0
      %2409 = vmatpush2.msra.mxu0 0.0
      %2410 = vmatprep.subr.mxu0 0.0
      %2411 = vmatpush2.msra.mxu0 0.0
      %2412 = vmatprep.subr.mxu0 0.0
      %2413 = vmatpush2.msra.mxu0 0.0
      %2414 = vmatprep.subr.mxu0 0.0
      %2415 = vmatpush2.msra.mxu0 0.0
      %2416 = vmatprep.subr.mxu0 0.0
      %2417 = vmatpush2.msra.mxu0 0.0
      %2418 = vmatprep.subr.mxu0 0.0
      %2419 = vmatpush2.msra.mxu0 0.0
      %2420 = vmatprep.subr.mxu0 0.0
      %2421 = vmatpush2.msra.mxu0 0.0
      %2422 = vmatprep.subr.mxu0 0.0
      %2423 = vmatpush2.msra.mxu0 0.0
      %2424 = vmatprep.mubr.f32.mxu0 0.0
      %2425 = vmatmul.mubr.f32.gmra.mxu0 %v2355
      %v2426 = vpop.f32.mrf.mxu0
      %v2427 = vadd.f32 %v2347, %v2426
      %v2428 = vpop.f32.mrf.mxu0
      %2429 = vmatprep.mubr.f32.mxu0 0.0
      %2430 = vmatmul.mubr.f32.gmra.mxu0 %v2358
      %v2431 = vpop.f32.mrf.mxu0
      %v2432 = vadd.f32 %v2352, %v2431
      %v2433 = vpop.f32.mrf.mxu0
      %2434 = vdwg.mxu0
      %2435 = vst [vmem:[#allocation2] sm:$0xff] 0.0
      %2436 = vst [vmem:[#allocation2 + $0x8] sm:$0xff] 0.0
      %2437 = vst [vmem:[#allocation2 + $0x10] sm:$0xff] 0.0
      %2438 = vst [vmem:[#allocation2 + $0x18] sm:$0xff] 0.0
      %2439 = vst [vmem:[#allocation2 + $0x20] sm:$0xff] 0.0
      %2440 = vst [vmem:[#allocation2 + $0x28] sm:$0xff] 0.0
      %2441 = vst [vmem:[#allocation2 + $0x30] sm:$0xff] 0.0
      %2442 = vst [vmem:[#allocation2 + $0x38] sm:$0xff] 0.0
      %2443 = vst [vmem:[#allocation2 + $0x40] sm:$0xff] 0.0
      %2444 = vst [vmem:[#allocation2 + $0x48] sm:$0xff] 0.0
      %2445 = vst [vmem:[#allocation2 + $0x50] sm:$0xff] 0.0
      %2446 = vst [vmem:[#allocation2 + $0x58] sm:$0xff] 0.0
      %2447 = vst [vmem:[#allocation2 + $0x60] sm:$0xff] 0.0
      %2448 = vst [vmem:[#allocation2 + $0x68] sm:$0xff] 0.0
      %2449 = vst [vmem:[#allocation2 + $0x70] sm:$0xff] 0.0
      %2450 = vst [vmem:[#allocation2 + $0x78] sm:$0xff] 0.0
      %2451 = vst.msk [vmem:[#allocation2 + $0x8] sm:$0xff] %vm1348, %v1627
      %2452 = vst.msk [vmem:[#allocation2 + $0x28] sm:$0xff] %vm1348, %v1628
      %2453 = vst.msk [vmem:[#allocation2 + $0x48] sm:$0xff] %vm1348, %v2427
      %2454 = vst.msk [vmem:[#allocation2 + $0x68] sm:$0xff] %vm1348, %v2432
      %v2455 = vld [vmem:[#allocation2] sm:$0xff]
      %v2456 = vld [vmem:[#allocation2 + $0x8] sm:$0xff]
      %v2457 = vld [vmem:[#allocation2 + $0x20] sm:$0xff]
      %v2458 = vld [vmem:[#allocation2 + $0x28] sm:$0xff]
      %v2459 = vld [vmem:[#allocation2 + $0x40] sm:$0xff]
      %v2460 = vld [vmem:[#allocation2 + $0x48] sm:$0xff]
      %v2461 = vld [vmem:[#allocation2 + $0x60] sm:$0xff]
      %v2462 = vld [vmem:[#allocation2 + $0x68] sm:$0xff]
      %v2463 = vld [vmem:[%s2] sm:$0x1]
      %v2465 = vlaneseq
      %v2466 = vshrl.u32 %v2465, 7
      %v2467 = vsub.s32 0, %v2466
      %v2468 = vrot.slane %v2463, %v2467
      %2469 = vrot.lane.b32.xlu0 %v2468, 119
      %v2470 = vpop.permute.xlu0 %2469
      %v2472 = vmul.f32 %v2455, %v2470
      %v2473 = vmul.f32 %v2456, %v2470
      %v2474 = vmul.f32 %v2457, %v2470
      %v2475 = vmul.f32 %v2458, %v2470
      %v2476 = vmul.f32 %v2459, %v2470
      %v2477 = vmul.f32 %v2460, %v2470
      %v2478 = vmul.f32 %v2461, %v2470
      %v2479 = vmul.f32 %v2462, %v2470
      %2488 = vrot.lane.b32.xlu0 %v2472, 9
      %v2489 = vpop.permute.xlu0 %2488
      %2490 = vrot.lane.b32.xlu0 %v2473, 9
      %v2491 = vpop.permute.xlu0 %2490
      %2492 = vrot.lane.b32.xlu0 %v2474, 9
      %v2493 = vpop.permute.xlu0 %2492
      %2494 = vrot.lane.b32.xlu0 %v2475, 9
      %v2495 = vpop.permute.xlu0 %2494
      %2496 = vrot.lane.b32.xlu0 %v2476, 9
      %v2497 = vpop.permute.xlu0 %2496
      %2498 = vrot.lane.b32.xlu0 %v2477, 9
      %v2499 = vpop.permute.xlu0 %2498
      %2500 = vrot.lane.b32.xlu0 %v2478, 9
      %v2501 = vpop.permute.xlu0 %2500
      %2502 = vrot.lane.b32.xlu0 %v2479, 9
      %v2503 = vpop.permute.xlu0 %2502
      %v2504 = vsel %vm1369, %v2489, %v2491
      %v2505 = vsel %vm1369, %v2493, %v2495
      %v2506 = vsel %vm1369, %v2497, %v2499
      %v2507 = vsel %vm1369, %v2501, %v2503
      %2512 = vst.msk [vmem:[#allocation3] sm:$0xff] %vm1348, %v2504
      %2513 = vst.msk [vmem:[#allocation3 + $0x10] sm:$0xff] %vm1348, %v2505
      %2514 = vst.msk [vmem:[#allocation3 + $0x20] sm:$0xff] %vm1348, %v2506
      %2515 = vst.msk [vmem:[#allocation3 + $0x30] sm:$0xff] %vm1348, %v2507
      %v2516 = vld [vmem:[#allocation2] sm:$0xff]
      %v2517 = vld [vmem:[#allocation2 + $0x8] sm:$0xff]
      %v2518 = vld [vmem:[#allocation2 + $0x20] sm:$0xff]
      %v2519 = vld [vmem:[#allocation2 + $0x28] sm:$0xff]
      %v2520 = vld [vmem:[#allocation2 + $0x40] sm:$0xff]
      %v2521 = vld [vmem:[#allocation2 + $0x48] sm:$0xff]
      %v2522 = vld [vmem:[#allocation2 + $0x60] sm:$0xff]
      %v2523 = vld [vmem:[#allocation2 + $0x68] sm:$0xff]
      %v2524 = vld [vmem:[%s1375] sm:$0x1]
      %v2526 = vlaneseq
      %v2527 = vshrl.u32 %v2526, 7
      %v2528 = vsub.s32 0, %v2527
      %v2529 = vrot.slane %v2524, %v2528
      %2530 = vrot.lane.b32.xlu0 %v2529, 120
      %v2531 = vpop.permute.xlu0 %2530
      %v2533 = vmul.f32 %v2516, %v2531
      %v2534 = vmul.f32 %v2517, %v2531
      %v2535 = vmul.f32 %v2518, %v2531
      %v2536 = vmul.f32 %v2519, %v2531
      %v2537 = vmul.f32 %v2520, %v2531
      %v2538 = vmul.f32 %v2521, %v2531
      %v2539 = vmul.f32 %v2522, %v2531
      %v2540 = vmul.f32 %v2523, %v2531
      %2549 = vrot.lane.b32.xlu0 %v2533, 8
      %v2550 = vpop.permute.xlu0 %2549
      %2551 = vrot.lane.b32.xlu0 %v2534, 8
      %v2552 = vpop.permute.xlu0 %2551
      %2553 = vrot.lane.b32.xlu0 %v2535, 8
      %v2554 = vpop.permute.xlu0 %2553
      %2555 = vrot.lane.b32.xlu0 %v2536, 8
      %v2556 = vpop.permute.xlu0 %2555
      %2557 = vrot.lane.b32.xlu0 %v2537, 8
      %v2558 = vpop.permute.xlu0 %2557
      %2559 = vrot.lane.b32.xlu0 %v2538, 8
      %v2560 = vpop.permute.xlu0 %2559
      %2561 = vrot.lane.b32.xlu0 %v2539, 8
      %v2562 = vpop.permute.xlu0 %2561
      %2563 = vrot.lane.b32.xlu0 %v2540, 8
      %v2564 = vpop.permute.xlu0 %2563
      %v2565 = vsel %vm1393, %v2550, %v2552
      %v2566 = vsel %vm1393, %v2554, %v2556
      %v2567 = vsel %vm1393, %v2558, %v2560
      %v2568 = vsel %vm1393, %v2562, %v2564
      %2573 = vst.msk [vmem:[#allocation3 + $0x40] sm:$0xff] %vm1348, %v2565
      %2574 = vst.msk [vmem:[#allocation3 + $0x50] sm:$0xff] %vm1348, %v2566
      %2575 = vst.msk [vmem:[#allocation3 + $0x60] sm:$0xff] %vm1348, %v2567
      %2576 = vst.msk [vmem:[#allocation3 + $0x70] sm:$0xff] %vm1348, %v2568
      %v2577 = vld [vmem:[#allocation2] sm:$0xff]
      %v2578 = vld [vmem:[#allocation2 + $0x8] sm:$0xff]
      %v2579 = vld [vmem:[#allocation2 + $0x20] sm:$0xff]
      %v2580 = vld [vmem:[#allocation2 + $0x28] sm:$0xff]
      %v2581 = vld [vmem:[#allocation2 + $0x40] sm:$0xff]
      %v2582 = vld [vmem:[#allocation2 + $0x48] sm:$0xff]
      %v2583 = vld [vmem:[#allocation2 + $0x60] sm:$0xff]
      %v2584 = vld [vmem:[#allocation2 + $0x68] sm:$0xff]
      %v2585 = vld [vmem:[%s1399] sm:$0x1]
      %v2587 = vlaneseq
      %v2588 = vshrl.u32 %v2587, 7
      %v2589 = vsub.s32 0, %v2588
      %v2590 = vrot.slane %v2585, %v2589
      %2591 = vrot.lane.b32.xlu0 %v2590, 121
      %v2592 = vpop.permute.xlu0 %2591
      %v2594 = vmul.f32 %v2577, %v2592
      %v2595 = vmul.f32 %v2578, %v2592
      %v2596 = vmul.f32 %v2579, %v2592
      %v2597 = vmul.f32 %v2580, %v2592
      %v2598 = vmul.f32 %v2581, %v2592
      %v2599 = vmul.f32 %v2582, %v2592
      %v2600 = vmul.f32 %v2583, %v2592
      %v2601 = vmul.f32 %v2584, %v2592
      %2610 = vrot.lane.b32.xlu0 %v2594, 7
      %v2611 = vpop.permute.xlu0 %2610
      %2612 = vrot.lane.b32.xlu0 %v2595, 7
      %v2613 = vpop.permute.xlu0 %2612
      %2614 = vrot.lane.b32.xlu0 %v2596, 7
      %v2615 = vpop.permute.xlu0 %2614
      %2616 = vrot.lane.b32.xlu0 %v2597, 7
      %v2617 = vpop.permute.xlu0 %2616
      %2618 = vrot.lane.b32.xlu0 %v2598, 7
      %v2619 = vpop.permute.xlu0 %2618
      %2620 = vrot.lane.b32.xlu0 %v2599, 7
      %v2621 = vpop.permute.xlu0 %2620
      %2622 = vrot.lane.b32.xlu0 %v2600, 7
      %v2623 = vpop.permute.xlu0 %2622
      %2624 = vrot.lane.b32.xlu0 %v2601, 7
      %v2625 = vpop.permute.xlu0 %2624
      %v2626 = vsel %vm1417, %v2611, %v2613
      %v2627 = vsel %vm1417, %v2615, %v2617
      %v2628 = vsel %vm1417, %v2619, %v2621
      %v2629 = vsel %vm1417, %v2623, %v2625
      %2634 = vst.msk [vmem:[#allocation3 + $0x80] sm:$0xff] %vm1348, %v2626
      %2635 = vst.msk [vmem:[#allocation3 + $0x90] sm:$0xff] %vm1348, %v2627
      %2636 = vst.msk [vmem:[#allocation3 + $0xa0] sm:$0xff] %vm1348, %v2628
      %2637 = vst.msk [vmem:[#allocation3 + $0xb0] sm:$0xff] %vm1348, %v2629
      %v2638 = vld [vmem:[#allocation2] sm:$0xff]
      %v2639 = vld [vmem:[#allocation2 + $0x8] sm:$0xff]
      %v2640 = vld [vmem:[#allocation2 + $0x20] sm:$0xff]
      %v2641 = vld [vmem:[#allocation2 + $0x28] sm:$0xff]
      %v2642 = vld [vmem:[#allocation2 + $0x40] sm:$0xff]
      %v2643 = vld [vmem:[#allocation2 + $0x48] sm:$0xff]
      %v2644 = vld [vmem:[#allocation2 + $0x60] sm:$0xff]
      %v2645 = vld [vmem:[#allocation2 + $0x68] sm:$0xff]
      %v2646 = vld [vmem:[%s1423] sm:$0x1]
      %v2648 = vlaneseq
      %v2649 = vshrl.u32 %v2648, 7
      %v2650 = vsub.s32 0, %v2649
      %v2651 = vrot.slane %v2646, %v2650
      %2652 = vrot.lane.b32.xlu0 %v2651, 127
      %v2653 = vpop.permute.xlu0 %2652
      %v2655 = vmul.f32 %v2638, %v2653
      %v2656 = vmul.f32 %v2639, %v2653
      %v2657 = vmul.f32 %v2640, %v2653
      %v2658 = vmul.f32 %v2641, %v2653
      %v2659 = vmul.f32 %v2642, %v2653
      %v2660 = vmul.f32 %v2643, %v2653
      %v2661 = vmul.f32 %v2644, %v2653
      %v2662 = vmul.f32 %v2645, %v2653
      %2671 = vrot.lane.b32.xlu0 %v2655, 1
      %v2672 = vpop.permute.xlu0 %2671
      %2673 = vrot.lane.b32.xlu0 %v2656, 1
      %v2674 = vpop.permute.xlu0 %2673
      %2675 = vrot.lane.b32.xlu0 %v2657, 1
      %v2676 = vpop.permute.xlu0 %2675
      %2677 = vrot.lane.b32.xlu0 %v2658, 1
      %v2678 = vpop.permute.xlu0 %2677
      %2679 = vrot.lane.b32.xlu0 %v2659, 1
      %v2680 = vpop.permute.xlu0 %2679
      %2681 = vrot.lane.b32.xlu0 %v2660, 1
      %v2682 = vpop.permute.xlu0 %2681
      %2683 = vrot.lane.b32.xlu0 %v2661, 1
      %v2684 = vpop.permute.xlu0 %2683
      %2685 = vrot.lane.b32.xlu0 %v2662, 1
      %v2686 = vpop.permute.xlu0 %2685
      %v2687 = vsel %vm906, %v2672, %v2674
      %v2688 = vsel %vm906, %v2676, %v2678
      %v2689 = vsel %vm906, %v2680, %v2682
      %v2690 = vsel %vm906, %v2684, %v2686
      %2695 = vst.msk [vmem:[#allocation3 + $0xc0] sm:$0xff] %vm1348, %v2687
      %2696 = vst.msk [vmem:[#allocation3 + $0xd0] sm:$0xff] %vm1348, %v2688
      %2697 = vst.msk [vmem:[#allocation3 + $0xe0] sm:$0xff] %vm1348, %v2689
      %2698 = vst.msk [vmem:[#allocation3 + $0xf0] sm:$0xff] %vm1348, %v2690
      %v2699 = vld [vmem:[#allocation2 + $0x8] sm:$0xff]
      %v2700 = vld [vmem:[#allocation2 + $0x28] sm:$0xff]
      %v2701 = vld [vmem:[#allocation2 + $0x48] sm:$0xff]
      %v2702 = vld [vmem:[#allocation2 + $0x68] sm:$0xff]
      %v2703 = vld [vmem:[%s1445] sm:$0x1]
      %v2705 = vlaneseq
      %v2706 = vshrl.u32 %v2705, 7
      %v2707 = vsub.s32 0, %v2706
      %v2708 = vrot.slane %v2703, %v2707
      %v2710 = vmul.f32 %v2699, %v2708
      %v2711 = vmul.f32 %v2700, %v2708
      %v2712 = vmul.f32 %v2701, %v2708
      %v2713 = vmul.f32 %v2702, %v2708
      %2714 = vst.msk [vmem:[#allocation3 + $0x100] sm:$0xff] %vm1348, %v2710
      %2715 = vst.msk [vmem:[#allocation3 + $0x110] sm:$0xff] %vm1348, %v2711
      %2716 = vst.msk [vmem:[#allocation3 + $0x120] sm:$0xff] %vm1348, %v2712
      %2717 = vst.msk [vmem:[#allocation3 + $0x130] sm:$0xff] %vm1348, %v2713
      %v2718 = vld [vmem:[#allocation2 + $0x8] sm:$0xff]
      %v2719 = vld [vmem:[#allocation2 + $0x28] sm:$0xff]
      %v2720 = vld [vmem:[#allocation2 + $0x48] sm:$0xff]
      %v2721 = vld [vmem:[#allocation2 + $0x68] sm:$0xff]
      %v2722 = vld [vmem:[%s1456] sm:$0x1]
      %v2724 = vlaneseq
      %v2725 = vshrl.u32 %v2724, 7
      %v2726 = vsub.s32 0, %v2725
      %v2727 = vrot.slane %v2722, %v2726
      %2728 = vrot.lane.b32.xlu0 %v2727, 1
      %v2729 = vpop.permute.xlu0 %2728
      %v2731 = vmul.f32 %v2718, %v2729
      %v2732 = vmul.f32 %v2719, %v2729
      %v2733 = vmul.f32 %v2720, %v2729
      %v2734 = vmul.f32 %v2721, %v2729
      %2739 = vrot.lane.b32.xlu0 %v2731, 127
      %v2740 = vpop.permute.xlu0 %2739
      %2741 = vrot.lane.b32.xlu0 %v2732, 127
      %v2742 = vpop.permute.xlu0 %2741
      %2743 = vrot.lane.b32.xlu0 %v2733, 127
      %v2744 = vpop.permute.xlu0 %2743
      %2745 = vrot.lane.b32.xlu0 %v2734, 127
      %v2746 = vpop.permute.xlu0 %2745
      %2751 = vst.msk [vmem:[#allocation3 + $0x140] sm:$0xff] %vm1348, %v2740
      %2752 = vst.msk [vmem:[#allocation3 + $0x150] sm:$0xff] %vm1348, %v2742
      %2753 = vst.msk [vmem:[#allocation3 + $0x160] sm:$0xff] %vm1348, %v2744
      %2754 = vst.msk [vmem:[#allocation3 + $0x170] sm:$0xff] %vm1348, %v2746
      %v2755 = vld [vmem:[#allocation2 + $0x8] sm:$0xff]
      %v2756 = vld [vmem:[#allocation2 + $0x28] sm:$0xff]
      %v2757 = vld [vmem:[#allocation2 + $0x48] sm:$0xff]
      %v2758 = vld [vmem:[#allocation2 + $0x68] sm:$0xff]
      %v2759 = vld [vmem:[%s1473] sm:$0x1]
      %v2761 = vlaneseq
      %v2762 = vshrl.u32 %v2761, 7
      %v2763 = vsub.s32 0, %v2762
      %v2764 = vrot.slane %v2759, %v2763
      %2765 = vrot.lane.b32.xlu0 %v2764, 7
      %v2766 = vpop.permute.xlu0 %2765
      %v2768 = vmul.f32 %v2755, %v2766
      %v2769 = vmul.f32 %v2756, %v2766
      %v2770 = vmul.f32 %v2757, %v2766
      %v2771 = vmul.f32 %v2758, %v2766
      %2776 = vrot.lane.b32.xlu0 %v2768, 121
      %v2777 = vpop.permute.xlu0 %2776
      %2778 = vrot.lane.b32.xlu0 %v2769, 121
      %v2779 = vpop.permute.xlu0 %2778
      %2780 = vrot.lane.b32.xlu0 %v2770, 121
      %v2781 = vpop.permute.xlu0 %2780
      %2782 = vrot.lane.b32.xlu0 %v2771, 121
      %v2783 = vpop.permute.xlu0 %2782
      %2788 = vst.msk [vmem:[#allocation3 + $0x180] sm:$0xff] %vm1348, %v2777
      %2789 = vst.msk [vmem:[#allocation3 + $0x190] sm:$0xff] %vm1348, %v2779
      %2790 = vst.msk [vmem:[#allocation3 + $0x1a0] sm:$0xff] %vm1348, %v2781
      %2791 = vst.msk [vmem:[#allocation3 + $0x1b0] sm:$0xff] %vm1348, %v2783
      %v2792 = vld [vmem:[#allocation2 + $0x8] sm:$0xff]
      %v2793 = vld [vmem:[#allocation2 + $0x28] sm:$0xff]
      %v2794 = vld [vmem:[#allocation2 + $0x48] sm:$0xff]
      %v2795 = vld [vmem:[#allocation2 + $0x68] sm:$0xff]
      %v2796 = vld [vmem:[%s1490] sm:$0x1]
      %v2798 = vlaneseq
      %v2799 = vshrl.u32 %v2798, 7
      %v2800 = vsub.s32 0, %v2799
      %v2801 = vrot.slane %v2796, %v2800
      %2802 = vrot.lane.b32.xlu0 %v2801, 8
      %v2803 = vpop.permute.xlu0 %2802
      %v2805 = vmul.f32 %v2792, %v2803
      %v2806 = vmul.f32 %v2793, %v2803
      %v2807 = vmul.f32 %v2794, %v2803
      %v2808 = vmul.f32 %v2795, %v2803
      %2813 = vrot.lane.b32.xlu0 %v2805, 120
      %v2814 = vpop.permute.xlu0 %2813
      %2815 = vrot.lane.b32.xlu0 %v2806, 120
      %v2816 = vpop.permute.xlu0 %2815
      %2817 = vrot.lane.b32.xlu0 %v2807, 120
      %v2818 = vpop.permute.xlu0 %2817
      %2819 = vrot.lane.b32.xlu0 %v2808, 120
      %v2820 = vpop.permute.xlu0 %2819
      %2825 = vst.msk [vmem:[#allocation3 + $0x1c0] sm:$0xff] %vm1348, %v2814
      %2826 = vst.msk [vmem:[#allocation3 + $0x1d0] sm:$0xff] %vm1348, %v2816
      %2827 = vst.msk [vmem:[#allocation3 + $0x1e0] sm:$0xff] %vm1348, %v2818
      %2828 = vst.msk [vmem:[#allocation3 + $0x1f0] sm:$0xff] %vm1348, %v2820
      %v2829 = vld [vmem:[#allocation2 + $0x8] sm:$0xff]
      %v2830 = vld [vmem:[#allocation2 + $0x28] sm:$0xff]
      %v2831 = vld [vmem:[#allocation2 + $0x48] sm:$0xff]
      %v2832 = vld [vmem:[#allocation2 + $0x68] sm:$0xff]
      %v2833 = vld [vmem:[%s1507] sm:$0x1]
      %v2835 = vlaneseq
      %v2836 = vshrl.u32 %v2835, 7
      %v2837 = vsub.s32 0, %v2836
      %v2838 = vrot.slane %v2833, %v2837
      %2839 = vrot.lane.b32.xlu0 %v2838, 9
      %v2840 = vpop.permute.xlu0 %2839
      %v2842 = vmul.f32 %v2829, %v2840
      %v2843 = vmul.f32 %v2830, %v2840
      %v2844 = vmul.f32 %v2831, %v2840
      %v2845 = vmul.f32 %v2832, %v2840
      %2850 = vrot.lane.b32.xlu0 %v2842, 119
      %v2851 = vpop.permute.xlu0 %2850
      %2852 = vrot.lane.b32.xlu0 %v2843, 119
      %v2853 = vpop.permute.xlu0 %2852
      %2854 = vrot.lane.b32.xlu0 %v2844, 119
      %v2855 = vpop.permute.xlu0 %2854
      %2856 = vrot.lane.b32.xlu0 %v2845, 119
      %v2857 = vpop.permute.xlu0 %2856
      %2862 = vst.msk [vmem:[#allocation3 + $0x200] sm:$0xff] %vm1348, %v2851
      %2863 = vst.msk [vmem:[#allocation3 + $0x210] sm:$0xff] %vm1348, %v2853
      %2864 = vst.msk [vmem:[#allocation3 + $0x220] sm:$0xff] %vm1348, %v2855
      %2865 = vst.msk [vmem:[#allocation3 + $0x230] sm:$0xff] %vm1348, %v2857
      %v2866 = vld [vmem:[%s16] sm:$0xff]
      %v2867 = vld [vmem:[%s16 + $0x8] sm:$0xff]
      %v2868 = vld [vmem:[%s16 + $0x10] sm:$0xff]
      %v2869 = vld [vmem:[%s16 + $0x18] sm:$0xff]
      %v2870 = vld [vmem:[%s16 + $0x20] sm:$0xff]
      %v2871 = vld [vmem:[%s16 + $0x28] sm:$0xff]
      %v2872 = vld [vmem:[#allocation3] sm:$0xff]
      %v2873 = vld [vmem:[#allocation3 + $0x10] sm:$0xff]
      %v2874 = vld [vmem:[#allocation3 + $0x20] sm:$0xff]
      %v2875 = vld [vmem:[#allocation3 + $0x30] sm:$0xff]
      %v2876 = vld [vmem:[#allocation3 + $0x40] sm:$0xff]
      %v2877 = vld [vmem:[#allocation3 + $0x50] sm:$0xff]
      %v2878 = vld [vmem:[#allocation3 + $0x60] sm:$0xff]
      %v2879 = vld [vmem:[#allocation3 + $0x70] sm:$0xff]
      %v2880 = vld [vmem:[#allocation3 + $0x80] sm:$0xff]
      %v2881 = vld [vmem:[#allocation3 + $0x90] sm:$0xff]
      %v2882 = vld [vmem:[#allocation3 + $0xa0] sm:$0xff]
      %v2883 = vld [vmem:[#allocation3 + $0xb0] sm:$0xff]
      %v2884 = vld [vmem:[#allocation3 + $0xc0] sm:$0xff]
      %v2885 = vld [vmem:[#allocation3 + $0xd0] sm:$0xff]
      %v2886 = vld [vmem:[#allocation3 + $0xe0] sm:$0xff]
      %v2887 = vld [vmem:[#allocation3 + $0xf0] sm:$0xff]
      %v2888 = vld [vmem:[#allocation3 + $0x100] sm:$0xff]
      %v2889 = vld [vmem:[#allocation3 + $0x110] sm:$0xff]
      %v2890 = vld [vmem:[#allocation3 + $0x120] sm:$0xff]
      %v2891 = vld [vmem:[#allocation3 + $0x130] sm:$0xff]
      %v2892 = vld [vmem:[#allocation3 + $0x140] sm:$0xff]
      %v2893 = vld [vmem:[#allocation3 + $0x150] sm:$0xff]
      %v2894 = vld [vmem:[#allocation3 + $0x160] sm:$0xff]
      %v2895 = vld [vmem:[#allocation3 + $0x170] sm:$0xff]
      %v2896 = vld [vmem:[#allocation3 + $0x180] sm:$0xff]
      %v2897 = vld [vmem:[#allocation3 + $0x190] sm:$0xff]
      %v2898 = vld [vmem:[#allocation3 + $0x1a0] sm:$0xff]
      %v2899 = vld [vmem:[#allocation3 + $0x1b0] sm:$0xff]
      %v2900 = vld [vmem:[#allocation3 + $0x1c0] sm:$0xff]
      %v2901 = vld [vmem:[#allocation3 + $0x1d0] sm:$0xff]
      %v2902 = vld [vmem:[#allocation3 + $0x1e0] sm:$0xff]
      %v2903 = vld [vmem:[#allocation3 + $0x1f0] sm:$0xff]
      %v2904 = vld [vmem:[#allocation3 + $0x200] sm:$0xff]
      %v2905 = vld [vmem:[#allocation3 + $0x210] sm:$0xff]
      %v2906 = vld [vmem:[#allocation3 + $0x220] sm:$0xff]
      %v2907 = vld [vmem:[#allocation3 + $0x230] sm:$0xff]
      %v2908 = vld [vmem:[%s17] sm:$0xff]
      %v2909 = vld [vmem:[%s17 + $0x8] sm:$0xff]
      %2911 = vset.pattern.permute.xlu0 0
      %2912 = vperm.xlu0 %2911, %v2908
      %v2913 = vpop.permute.xlu0 %2912
      %2916 = vset.pattern.permute.xlu0 0
      %2917 = vperm.xlu0 %2916, %v2909
      %v2918 = vpop.permute.xlu0 %2917
      %v2921 = vsel %vm2167, %v2868, 0
      %v2924 = vsel %vm2167, %v2871, 0
      %2926 = vmatprep.subr.mxu0 0.0
      %2927 = vmatpush1.msra.mxu0 %v2887
      %2928 = vmatprep.subr.mxu0 0.0
      %2929 = vmatpush1.msra.mxu0 %v2886
      %2930 = vmatprep.subr.mxu0 0.0
      %2931 = vmatpush1.msra.mxu0 %v2885
      %2932 = vmatprep.subr.mxu0 0.0
      %2933 = vmatpush1.msra.mxu0 %v2884
      %2934 = vmatprep.subr.mxu0 0.0
      %2935 = vmatpush1.msra.mxu0 %v2883
      %2936 = vmatprep.subr.mxu0 0.0
      %2937 = vmatpush1.msra.mxu0 %v2882
      %2938 = vmatprep.subr.mxu0 0.0
      %2939 = vmatpush1.msra.mxu0 %v2881
      %2940 = vmatprep.subr.mxu0 0.0
      %2941 = vmatpush1.msra.mxu0 %v2880
      %2942 = vmatprep.subr.mxu0 0.0
      %2943 = vmatpush1.msra.mxu0 %v2879
      %2944 = vmatprep.subr.mxu0 0.0
      %2945 = vmatpush1.msra.mxu0 %v2878
      %2946 = vmatprep.subr.mxu0 0.0
      %2947 = vmatpush1.msra.mxu0 %v2877
      %2948 = vmatprep.subr.mxu0 0.0
      %2949 = vmatpush1.msra.mxu0 %v2876
      %2950 = vmatprep.subr.mxu0 0.0
      %2951 = vmatpush1.msra.mxu0 %v2875
      %2952 = vmatprep.subr.mxu0 0.0
      %2953 = vmatpush1.msra.mxu0 %v2874
      %2954 = vmatprep.subr.mxu0 0.0
      %2955 = vmatpush1.msra.mxu0 %v2873
      %2956 = vmatprep.subr.mxu0 0.0
      %2957 = vmatpush1.msra.mxu0 %v2872
      %2958 = vmatprep.subr.mxu0 0.0
      %2959 = vmatpush2.msra.mxu0 %v2903
      %2960 = vmatprep.subr.mxu0 0.0
      %2961 = vmatpush2.msra.mxu0 %v2902
      %2962 = vmatprep.subr.mxu0 0.0
      %2963 = vmatpush2.msra.mxu0 %v2901
      %2964 = vmatprep.subr.mxu0 0.0
      %2965 = vmatpush2.msra.mxu0 %v2900
      %2966 = vmatprep.subr.mxu0 0.0
      %2967 = vmatpush2.msra.mxu0 %v2899
      %2968 = vmatprep.subr.mxu0 0.0
      %2969 = vmatpush2.msra.mxu0 %v2898
      %2970 = vmatprep.subr.mxu0 0.0
      %2971 = vmatpush2.msra.mxu0 %v2897
      %2972 = vmatprep.subr.mxu0 0.0
      %2973 = vmatpush2.msra.mxu0 %v2896
      %2974 = vmatprep.subr.mxu0 0.0
      %2975 = vmatpush2.msra.mxu0 %v2895
      %2976 = vmatprep.subr.mxu0 0.0
      %2977 = vmatpush2.msra.mxu0 %v2894
      %2978 = vmatprep.subr.mxu0 0.0
      %2979 = vmatpush2.msra.mxu0 %v2893
      %2980 = vmatprep.subr.mxu0 0.0
      %2981 = vmatpush2.msra.mxu0 %v2892
      %2982 = vmatprep.subr.mxu0 0.0
      %2983 = vmatpush2.msra.mxu0 %v2891
      %2984 = vmatprep.subr.mxu0 0.0
      %2985 = vmatpush2.msra.mxu0 %v2890
      %2986 = vmatprep.subr.mxu0 0.0
      %2987 = vmatpush2.msra.mxu0 %v2889
      %2988 = vmatprep.subr.mxu0 0.0
      %2989 = vmatpush2.msra.mxu0 %v2888
      %2990 = vmatprep.mubr.f32.mxu0 %v2867
      %2991 = vmatmul.mubr.f32.gmra.mxu0 %v2866
      %v2992 = vpop.f32.mrf.mxu0
      %v2993 = vadd.f32 %v2913, %v2992
      %v2994 = vpop.f32.mrf.mxu0
      %2995 = vmatprep.mubr.f32.mxu0 %v2870
      %2996 = vmatmul.mubr.f32.gmra.mxu0 %v2869
      %v2997 = vpop.f32.mrf.mxu0
      %v2998 = vadd.f32 %v2918, %v2997
      %v2999 = vpop.f32.mrf.mxu0
      %3000 = vdwg.mxu0
      %3001 = vmatprep.subr.mxu0 0.0
      %3002 = vmatpush1.msra.mxu0 0.0
      %3003 = vmatprep.subr.mxu0 0.0
      %3004 = vmatpush1.msra.mxu0 0.0
      %3005 = vmatprep.subr.mxu0 0.0
      %3006 = vmatpush1.msra.mxu0 0.0
      %3007 = vmatprep.subr.mxu0 0.0
      %3008 = vmatpush1.msra.mxu0 0.0
      %3009 = vmatprep.subr.mxu0 0.0
      %3010 = vmatpush1.msra.mxu0 0.0
      %3011 = vmatprep.subr.mxu0 0.0
      %3012 = vmatpush1.msra.mxu0 0.0
      %3013 = vmatprep.subr.mxu0 0.0
      %3014 = vmatpush1.msra.mxu0 0.0
      %3015 = vmatprep.subr.mxu0 0.0
      %3016 = vmatpush1.msra.mxu0 0.0
      %3017 = vmatprep.subr.mxu0 0.0
      %3018 = vmatpush1.msra.mxu0 0.0
      %3019 = vmatprep.subr.mxu0 0.0
      %3020 = vmatpush1.msra.mxu0 0.0
      %3021 = vmatprep.subr.mxu0 0.0
      %3022 = vmatpush1.msra.mxu0 0.0
      %3023 = vmatprep.subr.mxu0 0.0
      %3024 = vmatpush1.msra.mxu0 0.0
      %3025 = vmatprep.subr.mxu0 0.0
      %3026 = vmatpush1.msra.mxu0 %v2907
      %3027 = vmatprep.subr.mxu0 0.0
      %3028 = vmatpush1.msra.mxu0 %v2906
      %3029 = vmatprep.subr.mxu0 0.0
      %3030 = vmatpush1.msra.mxu0 %v2905
      %3031 = vmatprep.subr.mxu0 0.0
      %3032 = vmatpush1.msra.mxu0 %v2904
      %3033 = vmatprep.subr.mxu0 0.0
      %3034 = vmatpush2.msra.mxu0 0.0
      %3035 = vmatprep.subr.mxu0 0.0
      %3036 = vmatpush2.msra.mxu0 0.0
      %3037 = vmatprep.subr.mxu0 0.0
      %3038 = vmatpush2.msra.mxu0 0.0
      %3039 = vmatprep.subr.mxu0 0.0
      %3040 = vmatpush2.msra.mxu0 0.0
      %3041 = vmatprep.subr.mxu0 0.0
      %3042 = vmatpush2.msra.mxu0 0.0
      %3043 = vmatprep.subr.mxu0 0.0
      %3044 = vmatpush2.msra.mxu0 0.0
      %3045 = vmatprep.subr.mxu0 0.0
      %3046 = vmatpush2.msra.mxu0 0.0
      %3047 = vmatprep.subr.mxu0 0.0
      %3048 = vmatpush2.msra.mxu0 0.0
      %3049 = vmatprep.subr.mxu0 0.0
      %3050 = vmatpush2.msra.mxu0 0.0
      %3051 = vmatprep.subr.mxu0 0.0
      %3052 = vmatpush2.msra.mxu0 0.0
      %3053 = vmatprep.subr.mxu0 0.0
      %3054 = vmatpush2.msra.mxu0 0.0
      %3055 = vmatprep.subr.mxu0 0.0
      %3056 = vmatpush2.msra.mxu0 0.0
      %3057 = vmatprep.subr.mxu0 0.0
      %3058 = vmatpush2.msra.mxu0 0.0
      %3059 = vmatprep.subr.mxu0 0.0
      %3060 = vmatpush2.msra.mxu0 0.0
      %3061 = vmatprep.subr.mxu0 0.0
      %3062 = vmatpush2.msra.mxu0 0.0
      %3063 = vmatprep.subr.mxu0 0.0
      %3064 = vmatpush2.msra.mxu0 0.0
      %3065 = vmatprep.mubr.f32.mxu0 0.0
      %3066 = vmatmul.mubr.f32.gmra.mxu0 %v2921
      %v3067 = vpop.f32.mrf.mxu0
      %v3068 = vadd.f32 %v2993, %v3067
      %v3069 = vpop.f32.mrf.mxu0
      %3070 = vmatprep.mubr.f32.mxu0 0.0
      %3071 = vmatmul.mubr.f32.gmra.mxu0 %v2924
      %v3072 = vpop.f32.mrf.mxu0
      %v3073 = vadd.f32 %v2998, %v3072
      %v3074 = vpop.f32.mrf.mxu0
      %3075 = vdwg.mxu0
      %v3076 = vmax.f32 %v3068, 0.0
      %v3077 = vmax.f32 %v3073, 0.0
      %v3078 = vld [vmem:[%s18] sm:$0xff]
      %v3079 = vld [vmem:[%s18 + $0x8] sm:$0xff]
      %v3080 = vld [vmem:[%s18 + $0x10] sm:$0xff]
      %v3081 = vld [vmem:[%s18 + $0x18] sm:$0xff]
      %v3083 = vsel %vm822, %v3078, 0
      %v3086 = vsel %vm822, %v3079, 0
      %v3089 = vsel %vm822, %v3080, 0
      %v3092 = vsel %vm822, %v3081, 0
      %3094 = vmatprep.subr.mxu0 0.0
      %3095 = vmatpush1.msra.mxu0 0.0
      %3096 = vmatprep.subr.mxu0 0.0
      %3097 = vmatpush1.msra.mxu0 0.0
      %3098 = vmatprep.subr.mxu0 0.0
      %3099 = vmatpush1.msra.mxu0 0.0
      %3100 = vmatprep.subr.mxu0 0.0
      %3101 = vmatpush1.msra.mxu0 0.0
      %3102 = vmatprep.subr.mxu0 0.0
      %3103 = vmatpush1.msra.mxu0 0.0
      %3104 = vmatprep.subr.mxu0 0.0
      %3105 = vmatpush1.msra.mxu0 0.0
      %3106 = vmatprep.subr.mxu0 0.0
      %3107 = vmatpush1.msra.mxu0 0.0
      %3108 = vmatprep.subr.mxu0 0.0
      %3109 = vmatpush1.msra.mxu0 0.0
      %3110 = vmatprep.subr.mxu0 0.0
      %3111 = vmatpush1.msra.mxu0 0.0
      %3112 = vmatprep.subr.mxu0 0.0
      %3113 = vmatpush1.msra.mxu0 0.0
      %3114 = vmatprep.subr.mxu0 0.0
      %3115 = vmatpush1.msra.mxu0 0.0
      %3116 = vmatprep.subr.mxu0 0.0
      %3117 = vmatpush1.msra.mxu0 0.0
      %3118 = vmatprep.subr.mxu0 0.0
      %3119 = vmatpush1.msra.mxu0 0.0
      %3120 = vmatprep.subr.mxu0 0.0
      %3121 = vmatpush1.msra.mxu0 0.0
      %3122 = vmatprep.subr.mxu0 0.0
      %3123 = vmatpush1.msra.mxu0 %v3077
      %3124 = vmatprep.subr.mxu0 0.0
      %3125 = vmatpush1.msra.mxu0 %v3076
      %3126 = vmatprep.subr.mxu0 0.0
      %3127 = vmatpush2.msra.mxu0 0.0
      %3128 = vmatprep.subr.mxu0 0.0
      %3129 = vmatpush2.msra.mxu0 0.0
      %3130 = vmatprep.subr.mxu0 0.0
      %3131 = vmatpush2.msra.mxu0 0.0
      %3132 = vmatprep.subr.mxu0 0.0
      %3133 = vmatpush2.msra.mxu0 0.0
      %3134 = vmatprep.subr.mxu0 0.0
      %3135 = vmatpush2.msra.mxu0 0.0
      %3136 = vmatprep.subr.mxu0 0.0
      %3137 = vmatpush2.msra.mxu0 0.0
      %3138 = vmatprep.subr.mxu0 0.0
      %3139 = vmatpush2.msra.mxu0 0.0
      %3140 = vmatprep.subr.mxu0 0.0
      %3141 = vmatpush2.msra.mxu0 0.0
      %3142 = vmatprep.subr.mxu0 0.0
      %3143 = vmatpush2.msra.mxu0 0.0
      %3144 = vmatprep.subr.mxu0 0.0
      %3145 = vmatpush2.msra.mxu0 0.0
      %3146 = vmatprep.subr.mxu0 0.0
      %3147 = vmatpush2.msra.mxu0 0.0
      %3148 = vmatprep.subr.mxu0 0.0
      %3149 = vmatpush2.msra.mxu0 0.0
      %3150 = vmatprep.subr.mxu0 0.0
      %3151 = vmatpush2.msra.mxu0 0.0
      %3152 = vmatprep.subr.mxu0 0.0
      %3153 = vmatpush2.msra.mxu0 0.0
      %3154 = vmatprep.subr.mxu0 0.0
      %3155 = vmatpush2.msra.mxu0 0.0
      %3156 = vmatprep.subr.mxu0 0.0
      %3157 = vmatpush2.msra.mxu0 0.0
      %3158 = vmatprep.mubr.f32.mxu0 0.0
      %3159 = vmatmul.mubr.f32.gmra.mxu0 %v3083
      %v3160 = vpop.f32.mrf.mxu0
      %v3161 = vadd.f32 0.0, %v3160
      %v3162 = vpop.f32.mrf.mxu0
      %3163 = vmatprep.mubr.f32.mxu0 0.0
      %3164 = vmatmul.mubr.f32.gmra.mxu0 %v3086
      %v3165 = vpop.f32.mrf.mxu0
      %v3166 = vadd.f32 0.0, %v3165
      %v3167 = vpop.f32.mrf.mxu0
      %3168 = vmatprep.mubr.f32.mxu0 0.0
      %3169 = vmatmul.mubr.f32.gmra.mxu0 %v3089
      %v3170 = vpop.f32.mrf.mxu0
      %v3171 = vadd.f32 0.0, %v3170
      %v3172 = vpop.f32.mrf.mxu0
      %3173 = vmatprep.mubr.f32.mxu0 0.0
      %3174 = vmatmul.mubr.f32.gmra.mxu0 %v3092
      %v3175 = vpop.f32.mrf.mxu0
      %v3176 = vadd.f32 0.0, %v3175
      %v3177 = vpop.f32.mrf.mxu0
      %3178 = vdwg.mxu0
      %3179 = vst.msk [vmem:[#allocation4] sm:$0xff] %vm1348, %v3161
      %3181 = vrot.lane.b32.xlu0 %v3166, 64
      %v3182 = vpop.permute.xlu0 %3181
      %vm3184 = vcmask 1048064
      %3185 = vst.msk [vmem:[#allocation4] sm:$0xff] %vm3184, %v3182
      %3186 = vst.msk [vmem:[#allocation4 + $0x8] sm:$0xff] %vm1348, %v3171
      %3188 = vrot.lane.b32.xlu0 %v3176, 64
      %v3189 = vpop.permute.xlu0 %3188
      %3191 = vst.msk [vmem:[#allocation4 + $0x8] sm:$0xff] %vm3184, %v3189
      %v3192 = vld [vmem:[#allocation4] sm:$0xff]
      %v3193 = vld [vmem:[#allocation4 + $0x8] sm:$0xff]
      %v3194 = vld [vmem:[%s7] sm:$0xff]
      %v3195 = vld [vmem:[%s7 + $0x8] sm:$0xff]
      %v3196 = vld [vmem:[%s7 + $0x10] sm:$0xff]
      %v3197 = vld [vmem:[%s7 + $0x18] sm:$0xff]
      %v3198 = vld [vmem:[%s7 + $0x20] sm:$0xff]
      %v3199 = vld [vmem:[%s7 + $0x28] sm:$0xff]
      %v3200 = vld [vmem:[%s7 + $0x30] sm:$0xff]
      %v3201 = vld [vmem:[%s7 + $0x38] sm:$0xff]
      %v3202 = vld [vmem:[%s7 + $0x40] sm:$0xff]
      %v3203 = vld [vmem:[%s7 + $0x48] sm:$0xff]
      %v3204 = vld [vmem:[%s7 + $0x50] sm:$0xff]
      %v3205 = vld [vmem:[%s7 + $0x58] sm:$0xff]
      %v3206 = vld [vmem:[%s7 + $0x60] sm:$0xff]
      %v3207 = vld [vmem:[%s7 + $0x68] sm:$0xff]
      %v3208 = vld [vmem:[%s7 + $0x70] sm:$0xff]
      %v3209 = vld [vmem:[%s7 + $0x78] sm:$0xff]
      %v3210 = vld [vmem:[%s7 + $0x80] sm:$0xff]
      %v3211 = vld [vmem:[%s7 + $0x88] sm:$0xff]
      %v3212 = vld [vmem:[%s7 + $0x90] sm:$0xff]
      %v3213 = vld [vmem:[%s7 + $0x98] sm:$0xff]
      %v3214 = vld [vmem:[%s7 + $0xa0] sm:$0xff]
      %v3215 = vld [vmem:[%s7 + $0xa8] sm:$0xff]
      %v3216 = vld [vmem:[%s7 + $0xb0] sm:$0xff]
      %v3217 = vld [vmem:[%s7 + $0xb8] sm:$0xff]
      %v3218 = vld [vmem:[%s7 + $0xc0] sm:$0xff]
      %v3219 = vld [vmem:[%s7 + $0xc8] sm:$0xff]
      %v3220 = vld [vmem:[%s7 + $0xd0] sm:$0xff]
      %v3221 = vld [vmem:[%s7 + $0xd8] sm:$0xff]
      %v3222 = vld [vmem:[%s7 + $0xe0] sm:$0xff]
      %v3223 = vld [vmem:[%s7 + $0xe8] sm:$0xff]
      %v3224 = vld [vmem:[%s7 + $0xf0] sm:$0xff]
      %v3225 = vld [vmem:[%s7 + $0xf8] sm:$0xff]
      %v3226 = vld [vmem:[%s7 + $0x100] sm:$0xff]
      %v3227 = vld [vmem:[%s7 + $0x108] sm:$0xff]
      %v3228 = vld [vmem:[%s7 + $0x110] sm:$0xff]
      %v3229 = vld [vmem:[%s7 + $0x118] sm:$0xff]
      %v3230 = vld [vmem:[%s7 + $0x120] sm:$0xff]
      %v3231 = vld [vmem:[%s7 + $0x128] sm:$0xff]
      %v3232 = vld [vmem:[%s7 + $0x130] sm:$0xff]
      %v3233 = vld [vmem:[%s7 + $0x138] sm:$0xff]
      %v3234 = vld [vmem:[%s7 + $0x140] sm:$0xff]
      %v3235 = vld [vmem:[%s7 + $0x148] sm:$0xff]
      %v3236 = vld [vmem:[%s7 + $0x150] sm:$0xff]
      %v3237 = vld [vmem:[%s7 + $0x158] sm:$0xff]
      %v3238 = vld [vmem:[%s7 + $0x160] sm:$0xff]
      %v3239 = vld [vmem:[%s7 + $0x168] sm:$0xff]
      %v3240 = vld [vmem:[%s7 + $0x170] sm:$0xff]
      %v3241 = vld [vmem:[%s7 + $0x178] sm:$0xff]
      %v3242 = vld [vmem:[%s7 + $0x180] sm:$0xff]
      %v3243 = vld [vmem:[%s7 + $0x188] sm:$0xff]
      %v3244 = vld [vmem:[%s7 + $0x190] sm:$0xff]
      %v3245 = vld [vmem:[%s7 + $0x198] sm:$0xff]
      %v3246 = vld [vmem:[%s7 + $0x1a0] sm:$0xff]
      %v3247 = vld [vmem:[%s7 + $0x1a8] sm:$0xff]
      %v3248 = vld [vmem:[%s7 + $0x1b0] sm:$0xff]
      %v3249 = vld [vmem:[%s7 + $0x1b8] sm:$0xff]
      %v3250 = vld [vmem:[%s7 + $0x1c0] sm:$0xff]
      %v3251 = vld [vmem:[%s7 + $0x1c8] sm:$0xff]
      %v3252 = vld [vmem:[%s7 + $0x1d0] sm:$0xff]
      %v3253 = vld [vmem:[%s7 + $0x1d8] sm:$0xff]
      %v3254 = vld [vmem:[%s7 + $0x1e0] sm:$0xff]
      %v3255 = vld [vmem:[%s7 + $0x1e8] sm:$0xff]
      %v3256 = vld [vmem:[%s7 + $0x1f0] sm:$0xff]
      %v3257 = vld [vmem:[%s7 + $0x1f8] sm:$0xff]
      %v3258 = vld [vmem:[%s19] sm:$0xff]
      %3260 = vset.pattern.permute.xlu0 0
      %3261 = vperm.xlu0 %3260, %v3258
      %v3262 = vpop.permute.xlu0 %3261
      %3264 = vmatprep.subr.mxu0 %v3225
      %3265 = vmatpush1.msra.mxu0 %v3224
      %3266 = vmatprep.subr.mxu0 %v3223
      %3267 = vmatpush1.msra.mxu0 %v3222
      %3268 = vmatprep.subr.mxu0 %v3221
      %3269 = vmatpush1.msra.mxu0 %v3220
      %3270 = vmatprep.subr.mxu0 %v3219
      %3271 = vmatpush1.msra.mxu0 %v3218
      %3272 = vmatprep.subr.mxu0 %v3217
      %3273 = vmatpush1.msra.mxu0 %v3216
      %3274 = vmatprep.subr.mxu0 %v3215
      %3275 = vmatpush1.msra.mxu0 %v3214
      %3276 = vmatprep.subr.mxu0 %v3213
      %3277 = vmatpush1.msra.mxu0 %v3212
      %3278 = vmatprep.subr.mxu0 %v3211
      %3279 = vmatpush1.msra.mxu0 %v3210
      %3280 = vmatprep.subr.mxu0 %v3209
      %3281 = vmatpush1.msra.mxu0 %v3208
      %3282 = vmatprep.subr.mxu0 %v3207
      %3283 = vmatpush1.msra.mxu0 %v3206
      %3284 = vmatprep.subr.mxu0 %v3205
      %3285 = vmatpush1.msra.mxu0 %v3204
      %3286 = vmatprep.subr.mxu0 %v3203
      %3287 = vmatpush1.msra.mxu0 %v3202
      %3288 = vmatprep.subr.mxu0 %v3201
      %3289 = vmatpush1.msra.mxu0 %v3200
      %3290 = vmatprep.subr.mxu0 %v3199
      %3291 = vmatpush1.msra.mxu0 %v3198
      %3292 = vmatprep.subr.mxu0 %v3197
      %3293 = vmatpush1.msra.mxu0 %v3196
      %3294 = vmatprep.subr.mxu0 %v3195
      %3295 = vmatpush1.msra.mxu0 %v3194
      %3296 = vmatprep.subr.mxu0 %v3257
      %3297 = vmatpush2.msra.mxu0 %v3256
      %3298 = vmatprep.subr.mxu0 %v3255
      %3299 = vmatpush2.msra.mxu0 %v3254
      %3300 = vmatprep.subr.mxu0 %v3253
      %3301 = vmatpush2.msra.mxu0 %v3252
      %3302 = vmatprep.subr.mxu0 %v3251
      %3303 = vmatpush2.msra.mxu0 %v3250
      %3304 = vmatprep.subr.mxu0 %v3249
      %3305 = vmatpush2.msra.mxu0 %v3248
      %3306 = vmatprep.subr.mxu0 %v3247
      %3307 = vmatpush2.msra.mxu0 %v3246
      %3308 = vmatprep.subr.mxu0 %v3245
      %3309 = vmatpush2.msra.mxu0 %v3244
      %3310 = vmatprep.subr.mxu0 %v3243
      %3311 = vmatpush2.msra.mxu0 %v3242
      %3312 = vmatprep.subr.mxu0 %v3241
      %3313 = vmatpush2.msra.mxu0 %v3240
      %3314 = vmatprep.subr.mxu0 %v3239
      %3315 = vmatpush2.msra.mxu0 %v3238
      %3316 = vmatprep.subr.mxu0 %v3237
      %3317 = vmatpush2.msra.mxu0 %v3236
      %3318 = vmatprep.subr.mxu0 %v3235
      %3319 = vmatpush2.msra.mxu0 %v3234
      %3320 = vmatprep.subr.mxu0 %v3233
      %3321 = vmatpush2.msra.mxu0 %v3232
      %3322 = vmatprep.subr.mxu0 %v3231
      %3323 = vmatpush2.msra.mxu0 %v3230
      %3324 = vmatprep.subr.mxu0 %v3229
      %3325 = vmatpush2.msra.mxu0 %v3228
      %3326 = vmatprep.subr.mxu0 %v3227
      %3327 = vmatpush2.msra.mxu0 %v3226
      %3328 = vmatprep.mubr.f32.mxu0 %v3193
      %3329 = vmatmul.mubr.f32.gmra.mxu0 %v3192
      %v3330 = vpop.f32.mrf.mxu0
      %v3331 = vadd.f32 %v3262, %v3330
      %v3332 = vpop.f32.mrf.mxu0
      %v3333 = vadd.f32 %v3262, %v3332
      %3334 = vdwg.mxu0
      %3335 = vst [vmem:[#allocation2] sm:$0xff] 0.0
      %3336 = vst [vmem:[#allocation2 + $0x8] sm:$0xff] 0.0
      %3337 = vst [vmem:[#allocation2 + $0x10] sm:$0xff] 0.0
      %3338 = vst [vmem:[#allocation2 + $0x18] sm:$0xff] 0.0
      %3339 = vst [vmem:[#allocation2 + $0x20] sm:$0xff] 0.0
      %3340 = vst [vmem:[#allocation2 + $0x28] sm:$0xff] 0.0
      %3341 = vst [vmem:[#allocation2 + $0x30] sm:$0xff] 0.0
      %3342 = vst [vmem:[#allocation2 + $0x38] sm:$0xff] 0.0
      %3343 = vst [vmem:[#allocation2 + $0x8] sm:$0xff] %v1192
      %3344 = vst [vmem:[#allocation2 + $0x10] sm:$0xff] %v1193
      %3345 = vst [vmem:[#allocation2 + $0x28] sm:$0xff] %v3331
      %3346 = vst [vmem:[#allocation2 + $0x30] sm:$0xff] %v3333
      %v3347 = vld [vmem:[#allocation2] sm:$0xff]
      %v3348 = vld [vmem:[#allocation2 + $0x8] sm:$0xff]
      %v3349 = vld [vmem:[#allocation2 + $0x10] sm:$0xff]
      %v3350 = vld [vmem:[#allocation2 + $0x20] sm:$0xff]
      %v3351 = vld [vmem:[#allocation2 + $0x28] sm:$0xff]
      %v3352 = vld [vmem:[#allocation2 + $0x30] sm:$0xff]
      %v3353 = vld [vmem:[%s1] sm:$0x3]
      %v3355 = vlaneseq
      %v3356 = vshrl.u32 %v3355, 7
      %v3357 = vsub.s32 0, %v3356
      %v3358 = vrot.slane %v3353, %v3357
      %v3359 = vlaneseq
      %v3360 = vshrl.u32 %v3359, 7
      %v3361 = vsub.s32 1, %v3360
      %v3362 = vrot.slane %v3353, %v3361
      %3363 = vrot.lane.b32.xlu0 %v3358, 111
      %v3364 = vpop.permute.xlu0 %3363
      %3365 = vrot.lane.b32.xlu0 %v3362, 111
      %v3366 = vpop.permute.xlu0 %3365
      %v3367 = vsel %vm763, %v3364, %v3366
      %v3371 = vmul.f32 %v3347, %v3364
      %v3372 = vmul.f32 %v3348, %v3367
      %v3373 = vmul.f32 %v3349, %v3366
      %v3374 = vmul.f32 %v3350, %v3364
      %v3375 = vmul.f32 %v3351, %v3367
      %v3376 = vmul.f32 %v3352, %v3366
      %3383 = vrot.lane.b32.xlu0 %v3371, 17
      %v3384 = vpop.permute.xlu0 %3383
      %3385 = vrot.lane.b32.xlu0 %v3372, 17
      %v3386 = vpop.permute.xlu0 %3385
      %3387 = vrot.lane.b32.xlu0 %v3373, 17
      %v3388 = vpop.permute.xlu0 %3387
      %3389 = vrot.lane.b32.xlu0 %v3374, 17
      %v3390 = vpop.permute.xlu0 %3389
      %3391 = vrot.lane.b32.xlu0 %v3375, 17
      %v3392 = vpop.permute.xlu0 %3391
      %3393 = vrot.lane.b32.xlu0 %v3376, 17
      %v3394 = vpop.permute.xlu0 %3393
      %v3395 = vsel %vm780, %v3384, %v3386
      %v3396 = vsel %vm780, %v3386, %v3388
      %v3397 = vsel %vm780, %v3390, %v3392
      %v3398 = vsel %vm780, %v3392, %v3394
      %3403 = vst [vmem:[#allocation3] sm:$0xff] %v3395
      %3404 = vst [vmem:[#allocation3 + $0x8] sm:$0xff] %v3396
      %3405 = vst [vmem:[#allocation3 + $0x10] sm:$0xff] %v3397
      %3406 = vst [vmem:[#allocation3 + $0x18] sm:$0xff] %v3398
      %v3407 = vld [vmem:[#allocation2] sm:$0xff]
      %v3408 = vld [vmem:[#allocation2 + $0x8] sm:$0xff]
      %v3409 = vld [vmem:[#allocation2 + $0x10] sm:$0xff]
      %v3410 = vld [vmem:[#allocation2 + $0x20] sm:$0xff]
      %v3411 = vld [vmem:[#allocation2 + $0x28] sm:$0xff]
      %v3412 = vld [vmem:[#allocation2 + $0x30] sm:$0xff]
      %v3413 = vld [vmem:[%s790] sm:$0x3]
      %v3415 = vlaneseq
      %v3416 = vshrl.u32 %v3415, 7
      %v3417 = vsub.s32 0, %v3416
      %v3418 = vrot.slane %v3413, %v3417
      %v3419 = vlaneseq
      %v3420 = vshrl.u32 %v3419, 7
      %v3421 = vsub.s32 1, %v3420
      %v3422 = vrot.slane %v3413, %v3421
      %3423 = vrot.lane.b32.xlu0 %v3418, 112
      %v3424 = vpop.permute.xlu0 %3423
      %3425 = vrot.lane.b32.xlu0 %v3422, 112
      %v3426 = vpop.permute.xlu0 %3425
      %v3427 = vsel %vm805, %v3424, %v3426
      %v3431 = vmul.f32 %v3407, %v3424
      %v3432 = vmul.f32 %v3408, %v3427
      %v3433 = vmul.f32 %v3409, %v3426
      %v3434 = vmul.f32 %v3410, %v3424
      %v3435 = vmul.f32 %v3411, %v3427
      %v3436 = vmul.f32 %v3412, %v3426
      %3443 = vrot.lane.b32.xlu0 %v3431, 16
      %v3444 = vpop.permute.xlu0 %3443
      %3445 = vrot.lane.b32.xlu0 %v3432, 16
      %v3446 = vpop.permute.xlu0 %3445
      %3447 = vrot.lane.b32.xlu0 %v3433, 16
      %v3448 = vpop.permute.xlu0 %3447
      %3449 = vrot.lane.b32.xlu0 %v3434, 16
      %v3450 = vpop.permute.xlu0 %3449
      %3451 = vrot.lane.b32.xlu0 %v3435, 16
      %v3452 = vpop.permute.xlu0 %3451
      %3453 = vrot.lane.b32.xlu0 %v3436, 16
      %v3454 = vpop.permute.xlu0 %3453
      %v3455 = vsel %vm822, %v3444, %v3446
      %v3456 = vsel %vm822, %v3446, %v3448
      %v3457 = vsel %vm822, %v3450, %v3452
      %v3458 = vsel %vm822, %v3452, %v3454
      %3463 = vst [vmem:[#allocation3 + $0x20] sm:$0xff] %v3455
      %3464 = vst [vmem:[#allocation3 + $0x28] sm:$0xff] %v3456
      %3465 = vst [vmem:[#allocation3 + $0x30] sm:$0xff] %v3457
      %3466 = vst [vmem:[#allocation3 + $0x38] sm:$0xff] %v3458
      %v3467 = vld [vmem:[#allocation2] sm:$0xff]
      %v3468 = vld [vmem:[#allocation2 + $0x8] sm:$0xff]
      %v3469 = vld [vmem:[#allocation2 + $0x10] sm:$0xff]
      %v3470 = vld [vmem:[#allocation2 + $0x20] sm:$0xff]
      %v3471 = vld [vmem:[#allocation2 + $0x28] sm:$0xff]
      %v3472 = vld [vmem:[#allocation2 + $0x30] sm:$0xff]
      %v3473 = vld [vmem:[%s832] sm:$0x3]
      %v3475 = vlaneseq
      %v3476 = vshrl.u32 %v3475, 7
      %v3477 = vsub.s32 0, %v3476
      %v3478 = vrot.slane %v3473, %v3477
      %v3479 = vlaneseq
      %v3480 = vshrl.u32 %v3479, 7
      %v3481 = vsub.s32 1, %v3480
      %v3482 = vrot.slane %v3473, %v3481
      %3483 = vrot.lane.b32.xlu0 %v3478, 113
      %v3484 = vpop.permute.xlu0 %3483
      %3485 = vrot.lane.b32.xlu0 %v3482, 113
      %v3486 = vpop.permute.xlu0 %3485
      %v3487 = vsel %vm847, %v3484, %v3486
      %v3491 = vmul.f32 %v3467, %v3484
      %v3492 = vmul.f32 %v3468, %v3487
      %v3493 = vmul.f32 %v3469, %v3486
      %v3494 = vmul.f32 %v3470, %v3484
      %v3495 = vmul.f32 %v3471, %v3487
      %v3496 = vmul.f32 %v3472, %v3486
      %3503 = vrot.lane.b32.xlu0 %v3491, 15
      %v3504 = vpop.permute.xlu0 %3503
      %3505 = vrot.lane.b32.xlu0 %v3492, 15
      %v3506 = vpop.permute.xlu0 %3505
      %3507 = vrot.lane.b32.xlu0 %v3493, 15
      %v3508 = vpop.permute.xlu0 %3507
      %3509 = vrot.lane.b32.xlu0 %v3494, 15
      %v3510 = vpop.permute.xlu0 %3509
      %3511 = vrot.lane.b32.xlu0 %v3495, 15
      %v3512 = vpop.permute.xlu0 %3511
      %3513 = vrot.lane.b32.xlu0 %v3496, 15
      %v3514 = vpop.permute.xlu0 %3513
      %v3515 = vsel %vm864, %v3504, %v3506
      %v3516 = vsel %vm864, %v3506, %v3508
      %v3517 = vsel %vm864, %v3510, %v3512
      %v3518 = vsel %vm864, %v3512, %v3514
      %3523 = vst [vmem:[#allocation3 + $0x40] sm:$0xff] %v3515
      %3524 = vst [vmem:[#allocation3 + $0x48] sm:$0xff] %v3516
      %3525 = vst [vmem:[#allocation3 + $0x50] sm:$0xff] %v3517
      %3526 = vst [vmem:[#allocation3 + $0x58] sm:$0xff] %v3518
      %v3527 = vld [vmem:[#allocation2] sm:$0xff]
      %v3528 = vld [vmem:[#allocation2 + $0x8] sm:$0xff]
      %v3529 = vld [vmem:[#allocation2 + $0x10] sm:$0xff]
      %v3530 = vld [vmem:[#allocation2 + $0x20] sm:$0xff]
      %v3531 = vld [vmem:[#allocation2 + $0x28] sm:$0xff]
      %v3532 = vld [vmem:[#allocation2 + $0x30] sm:$0xff]
      %v3533 = vld [vmem:[%s874] sm:$0x3]
      %v3535 = vlaneseq
      %v3536 = vshrl.u32 %v3535, 7
      %v3537 = vsub.s32 0, %v3536
      %v3538 = vrot.slane %v3533, %v3537
      %v3539 = vlaneseq
      %v3540 = vshrl.u32 %v3539, 7
      %v3541 = vsub.s32 1, %v3540
      %v3542 = vrot.slane %v3533, %v3541
      %3543 = vrot.lane.b32.xlu0 %v3538, 127
      %v3544 = vpop.permute.xlu0 %3543
      %3545 = vrot.lane.b32.xlu0 %v3542, 127
      %v3546 = vpop.permute.xlu0 %3545
      %v3547 = vsel %vm889, %v3544, %v3546
      %v3551 = vmul.f32 %v3527, %v3544
      %v3552 = vmul.f32 %v3528, %v3547
      %v3553 = vmul.f32 %v3529, %v3546
      %v3554 = vmul.f32 %v3530, %v3544
      %v3555 = vmul.f32 %v3531, %v3547
      %v3556 = vmul.f32 %v3532, %v3546
      %3563 = vrot.lane.b32.xlu0 %v3551, 1
      %v3564 = vpop.permute.xlu0 %3563
      %3565 = vrot.lane.b32.xlu0 %v3552, 1
      %v3566 = vpop.permute.xlu0 %3565
      %3567 = vrot.lane.b32.xlu0 %v3553, 1
      %v3568 = vpop.permute.xlu0 %3567
      %3569 = vrot.lane.b32.xlu0 %v3554, 1
      %v3570 = vpop.permute.xlu0 %3569
      %3571 = vrot.lane.b32.xlu0 %v3555, 1
      %v3572 = vpop.permute.xlu0 %3571
      %3573 = vrot.lane.b32.xlu0 %v3556, 1
      %v3574 = vpop.permute.xlu0 %3573
      %v3575 = vsel %vm906, %v3564, %v3566
      %v3576 = vsel %vm906, %v3566, %v3568
      %v3577 = vsel %vm906, %v3570, %v3572
      %v3578 = vsel %vm906, %v3572, %v3574
      %3583 = vst [vmem:[#allocation3 + $0x60] sm:$0xff] %v3575
      %3584 = vst [vmem:[#allocation3 + $0x68] sm:$0xff] %v3576
      %3585 = vst [vmem:[#allocation3 + $0x70] sm:$0xff] %v3577
      %3586 = vst [vmem:[#allocation3 + $0x78] sm:$0xff] %v3578
      %v3587 = vld [vmem:[#allocation2 + $0x8] sm:$0xff]
      %v3588 = vld [vmem:[#allocation2 + $0x10] sm:$0xff]
      %v3589 = vld [vmem:[#allocation2 + $0x28] sm:$0xff]
      %v3590 = vld [vmem:[#allocation2 + $0x30] sm:$0xff]
      %v3591 = vld [vmem:[%s915] sm:$0x3]
      %v3593 = vlaneseq
      %v3594 = vshrl.u32 %v3593, 7
      %v3595 = vsub.s32 0, %v3594
      %v3596 = vrot.slane %v3591, %v3595
      %v3597 = vlaneseq
      %v3598 = vshrl.u32 %v3597, 7
      %v3599 = vsub.s32 1, %v3598
      %v3600 = vrot.slane %v3591, %v3599
      %v3603 = vmul.f32 %v3587, %v3596
      %v3604 = vmul.f32 %v3588, %v3600
      %v3605 = vmul.f32 %v3589, %v3596
      %v3606 = vmul.f32 %v3590, %v3600
      %3607 = vst [vmem:[#allocation3 + $0x80] sm:$0xff] %v3603
      %3608 = vst [vmem:[#allocation3 + $0x88] sm:$0xff] %v3604
      %3609 = vst [vmem:[#allocation3 + $0x90] sm:$0xff] %v3605
      %3610 = vst [vmem:[#allocation3 + $0x98] sm:$0xff] %v3606
      %v3611 = vld [vmem:[#allocation2 + $0x8] sm:$0xff]
      %v3612 = vld [vmem:[#allocation2 + $0x10] sm:$0xff]
      %v3613 = vld [vmem:[#allocation2 + $0x18] sm:$0xff]
      %v3614 = vld [vmem:[#allocation2 + $0x28] sm:$0xff]
      %v3615 = vld [vmem:[#allocation2 + $0x30] sm:$0xff]
      %v3616 = vld [vmem:[#allocation2 + $0x38] sm:$0xff]
      %v3617 = vld [vmem:[%s935] sm:$0x3]
      %v3619 = vlaneseq
      %v3620 = vshrl.u32 %v3619, 7
      %v3621 = vsub.s32 0, %v3620
      %v3622 = vrot.slane %v3617, %v3621
      %v3623 = vlaneseq
      %v3624 = vshrl.u32 %v3623, 7
      %v3625 = vsub.s32 1, %v3624
      %v3626 = vrot.slane %v3617, %v3625
      %3627 = vrot.lane.b32.xlu0 %v3622, 1
      %v3628 = vpop.permute.xlu0 %3627
      %3629 = vrot.lane.b32.xlu0 %v3626, 1
      %v3630 = vpop.permute.xlu0 %3629
      %v3631 = vsel %vm906, %v3628, %v3630
      %v3635 = vmul.f32 %v3611, %v3628
      %v3636 = vmul.f32 %v3612, %v3631
      %v3637 = vmul.f32 %v3613, %v3630
      %v3638 = vmul.f32 %v3614, %v3628
      %v3639 = vmul.f32 %v3615, %v3631
      %v3640 = vmul.f32 %v3616, %v3630
      %3647 = vrot.lane.b32.xlu0 %v3635, 127
      %v3648 = vpop.permute.xlu0 %3647
      %3649 = vrot.lane.b32.xlu0 %v3636, 127
      %v3650 = vpop.permute.xlu0 %3649
      %3651 = vrot.lane.b32.xlu0 %v3637, 127
      %v3652 = vpop.permute.xlu0 %3651
      %3653 = vrot.lane.b32.xlu0 %v3638, 127
      %v3654 = vpop.permute.xlu0 %3653
      %3655 = vrot.lane.b32.xlu0 %v3639, 127
      %v3656 = vpop.permute.xlu0 %3655
      %3657 = vrot.lane.b32.xlu0 %v3640, 127
      %v3658 = vpop.permute.xlu0 %3657
      %v3659 = vsel %vm889, %v3648, %v3650
      %v3660 = vsel %vm889, %v3650, %v3652
      %v3661 = vsel %vm889, %v3654, %v3656
      %v3662 = vsel %vm889, %v3656, %v3658
      %3667 = vst [vmem:[#allocation3 + $0xa0] sm:$0xff] %v3659
      %3668 = vst [vmem:[#allocation3 + $0xa8] sm:$0xff] %v3660
      %3669 = vst [vmem:[#allocation3 + $0xb0] sm:$0xff] %v3661
      %3670 = vst [vmem:[#allocation3 + $0xb8] sm:$0xff] %v3662
      %v3671 = vld [vmem:[#allocation2 + $0x8] sm:$0xff]
      %v3672 = vld [vmem:[#allocation2 + $0x10] sm:$0xff]
      %v3673 = vld [vmem:[#allocation2 + $0x18] sm:$0xff]
      %v3674 = vld [vmem:[#allocation2 + $0x28] sm:$0xff]
      %v3675 = vld [vmem:[#allocation2 + $0x30] sm:$0xff]
      %v3676 = vld [vmem:[#allocation2 + $0x38] sm:$0xff]
      %v3677 = vld [vmem:[%s975] sm:$0x3]
      %v3679 = vlaneseq
      %v3680 = vshrl.u32 %v3679, 7
      %v3681 = vsub.s32 0, %v3680
      %v3682 = vrot.slane %v3677, %v3681
      %v3683 = vlaneseq
      %v3684 = vshrl.u32 %v3683, 7
      %v3685 = vsub.s32 1, %v3684
      %v3686 = vrot.slane %v3677, %v3685
      %3687 = vrot.lane.b32.xlu0 %v3682, 15
      %v3688 = vpop.permute.xlu0 %3687
      %3689 = vrot.lane.b32.xlu0 %v3686, 15
      %v3690 = vpop.permute.xlu0 %3689
      %v3691 = vsel %vm864, %v3688, %v3690
      %v3695 = vmul.f32 %v3671, %v3688
      %v3696 = vmul.f32 %v3672, %v3691
      %v3697 = vmul.f32 %v3673, %v3690
      %v3698 = vmul.f32 %v3674, %v3688
      %v3699 = vmul.f32 %v3675, %v3691
      %v3700 = vmul.f32 %v3676, %v3690
      %3707 = vrot.lane.b32.xlu0 %v3695, 113
      %v3708 = vpop.permute.xlu0 %3707
      %3709 = vrot.lane.b32.xlu0 %v3696, 113
      %v3710 = vpop.permute.xlu0 %3709
      %3711 = vrot.lane.b32.xlu0 %v3697, 113
      %v3712 = vpop.permute.xlu0 %3711
      %3713 = vrot.lane.b32.xlu0 %v3698, 113
      %v3714 = vpop.permute.xlu0 %3713
      %3715 = vrot.lane.b32.xlu0 %v3699, 113
      %v3716 = vpop.permute.xlu0 %3715
      %3717 = vrot.lane.b32.xlu0 %v3700, 113
      %v3718 = vpop.permute.xlu0 %3717
      %v3719 = vsel %vm847, %v3708, %v3710
      %v3720 = vsel %vm847, %v3710, %v3712
      %v3721 = vsel %vm847, %v3714, %v3716
      %v3722 = vsel %vm847, %v3716, %v3718
      %3727 = vst [vmem:[#allocation3 + $0xc0] sm:$0xff] %v3719
      %3728 = vst [vmem:[#allocation3 + $0xc8] sm:$0xff] %v3720
      %3729 = vst [vmem:[#allocation3 + $0xd0] sm:$0xff] %v3721
      %3730 = vst [vmem:[#allocation3 + $0xd8] sm:$0xff] %v3722
      %v3731 = vld [vmem:[#allocation2 + $0x8] sm:$0xff]
      %v3732 = vld [vmem:[#allocation2 + $0x10] sm:$0xff]
      %v3733 = vld [vmem:[#allocation2 + $0x18] sm:$0xff]
      %v3734 = vld [vmem:[#allocation2 + $0x28] sm:$0xff]
      %v3735 = vld [vmem:[#allocation2 + $0x30] sm:$0xff]
      %v3736 = vld [vmem:[#allocation2 + $0x38] sm:$0xff]
      %v3737 = vld [vmem:[%s1015] sm:$0x3]
      %v3739 = vlaneseq
      %v3740 = vshrl.u32 %v3739, 7
      %v3741 = vsub.s32 0, %v3740
      %v3742 = vrot.slane %v3737, %v3741
      %v3743 = vlaneseq
      %v3744 = vshrl.u32 %v3743, 7
      %v3745 = vsub.s32 1, %v3744
      %v3746 = vrot.slane %v3737, %v3745
      %3747 = vrot.lane.b32.xlu0 %v3742, 16
      %v3748 = vpop.permute.xlu0 %3747
      %3749 = vrot.lane.b32.xlu0 %v3746, 16
      %v3750 = vpop.permute.xlu0 %3749
      %v3751 = vsel %vm822, %v3748, %v3750
      %v3755 = vmul.f32 %v3731, %v3748
      %v3756 = vmul.f32 %v3732, %v3751
      %v3757 = vmul.f32 %v3733, %v3750
      %v3758 = vmul.f32 %v3734, %v3748
      %v3759 = vmul.f32 %v3735, %v3751
      %v3760 = vmul.f32 %v3736, %v3750
      %3767 = vrot.lane.b32.xlu0 %v3755, 112
      %v3768 = vpop.permute.xlu0 %3767
      %3769 = vrot.lane.b32.xlu0 %v3756, 112
      %v3770 = vpop.permute.xlu0 %3769
      %3771 = vrot.lane.b32.xlu0 %v3757, 112
      %v3772 = vpop.permute.xlu0 %3771
      %3773 = vrot.lane.b32.xlu0 %v3758, 112
      %v3774 = vpop.permute.xlu0 %3773
      %3775 = vrot.lane.b32.xlu0 %v3759, 112
      %v3776 = vpop.permute.xlu0 %3775
      %3777 = vrot.lane.b32.xlu0 %v3760, 112
      %v3778 = vpop.permute.xlu0 %3777
      %v3779 = vsel %vm805, %v3768, %v3770
      %v3780 = vsel %vm805, %v3770, %v3772
      %v3781 = vsel %vm805, %v3774, %v3776
      %v3782 = vsel %vm805, %v3776, %v3778
      %3787 = vst [vmem:[#allocation3 + $0xe0] sm:$0xff] %v3779
      %3788 = vst [vmem:[#allocation3 + $0xe8] sm:$0xff] %v3780
      %3789 = vst [vmem:[#allocation3 + $0xf0] sm:$0xff] %v3781
      %3790 = vst [vmem:[#allocation3 + $0xf8] sm:$0xff] %v3782
      %v3791 = vld [vmem:[#allocation2 + $0x8] sm:$0xff]
      %v3792 = vld [vmem:[#allocation2 + $0x10] sm:$0xff]
      %v3793 = vld [vmem:[#allocation2 + $0x18] sm:$0xff]
      %v3794 = vld [vmem:[#allocation2 + $0x28] sm:$0xff]
      %v3795 = vld [vmem:[#allocation2 + $0x30] sm:$0xff]
      %v3796 = vld [vmem:[#allocation2 + $0x38] sm:$0xff]
      %v3797 = vld [vmem:[%s1055] sm:$0x3]
      %v3799 = vlaneseq
      %v3800 = vshrl.u32 %v3799, 7
      %v3801 = vsub.s32 0, %v3800
      %v3802 = vrot.slane %v3797, %v3801
      %v3803 = vlaneseq
      %v3804 = vshrl.u32 %v3803, 7
      %v3805 = vsub.s32 1, %v3804
      %v3806 = vrot.slane %v3797, %v3805
      %3807 = vrot.lane.b32.xlu0 %v3802, 17
      %v3808 = vpop.permute.xlu0 %3807
      %3809 = vrot.lane.b32.xlu0 %v3806, 17
      %v3810 = vpop.permute.xlu0 %3809
      %v3811 = vsel %vm780, %v3808, %v3810
      %v3815 = vmul.f32 %v3791, %v3808
      %v3816 = vmul.f32 %v3792, %v3811
      %v3817 = vmul.f32 %v3793, %v3810
      %v3818 = vmul.f32 %v3794, %v3808
      %v3819 = vmul.f32 %v3795, %v3811
      %v3820 = vmul.f32 %v3796, %v3810
      %3827 = vrot.lane.b32.xlu0 %v3815, 111
      %v3828 = vpop.permute.xlu0 %3827
      %3829 = vrot.lane.b32.xlu0 %v3816, 111
      %v3830 = vpop.permute.xlu0 %3829
      %3831 = vrot.lane.b32.xlu0 %v3817, 111
      %v3832 = vpop.permute.xlu0 %3831
      %3833 = vrot.lane.b32.xlu0 %v3818, 111
      %v3834 = vpop.permute.xlu0 %3833
      %3835 = vrot.lane.b32.xlu0 %v3819, 111
      %v3836 = vpop.permute.xlu0 %3835
      %3837 = vrot.lane.b32.xlu0 %v3820, 111
      %v3838 = vpop.permute.xlu0 %3837
      %v3839 = vsel %vm763, %v3828, %v3830
      %v3840 = vsel %vm763, %v3830, %v3832
      %v3841 = vsel %vm763, %v3834, %v3836
      %v3842 = vsel %vm763, %v3836, %v3838
      %3847 = vst [vmem:[#allocation3 + $0x100] sm:$0xff] %v3839
      %3848 = vst [vmem:[#allocation3 + $0x108] sm:$0xff] %v3840
      %3849 = vst [vmem:[#allocation3 + $0x110] sm:$0xff] %v3841
      %3850 = vst [vmem:[#allocation3 + $0x118] sm:$0xff] %v3842
      %v3851 = vld [vmem:[%s20] sm:$0xff]
      %v3852 = vld [vmem:[%s20 + $0x8] sm:$0xff]
      %v3853 = vld [vmem:[#allocation3] sm:$0xff]
      %v3854 = vld [vmem:[#allocation3 + $0x8] sm:$0xff]
      %v3855 = vld [vmem:[#allocation3 + $0x10] sm:$0xff]
      %v3856 = vld [vmem:[#allocation3 + $0x18] sm:$0xff]
      %v3857 = vld [vmem:[#allocation3 + $0x20] sm:$0xff]
      %v3858 = vld [vmem:[#allocation3 + $0x28] sm:$0xff]
      %v3859 = vld [vmem:[#allocation3 + $0x30] sm:$0xff]
      %v3860 = vld [vmem:[#allocation3 + $0x38] sm:$0xff]
      %v3861 = vld [vmem:[#allocation3 + $0x40] sm:$0xff]
      %v3862 = vld [vmem:[#allocation3 + $0x48] sm:$0xff]
      %v3863 = vld [vmem:[#allocation3 + $0x50] sm:$0xff]
      %v3864 = vld [vmem:[#allocation3 + $0x58] sm:$0xff]
      %v3865 = vld [vmem:[#allocation3 + $0x60] sm:$0xff]
      %v3866 = vld [vmem:[#allocation3 + $0x68] sm:$0xff]
      %v3867 = vld [vmem:[#allocation3 + $0x70] sm:$0xff]
      %v3868 = vld [vmem:[#allocation3 + $0x78] sm:$0xff]
      %v3869 = vld [vmem:[#allocation3 + $0x80] sm:$0xff]
      %v3870 = vld [vmem:[#allocation3 + $0x88] sm:$0xff]
      %v3871 = vld [vmem:[#allocation3 + $0x90] sm:$0xff]
      %v3872 = vld [vmem:[#allocation3 + $0x98] sm:$0xff]
      %v3873 = vld [vmem:[#allocation3 + $0xa0] sm:$0xff]
      %v3874 = vld [vmem:[#allocation3 + $0xa8] sm:$0xff]
      %v3875 = vld [vmem:[#allocation3 + $0xb0] sm:$0xff]
      %v3876 = vld [vmem:[#allocation3 + $0xb8] sm:$0xff]
      %v3877 = vld [vmem:[#allocation3 + $0xc0] sm:$0xff]
      %v3878 = vld [vmem:[#allocation3 + $0xc8] sm:$0xff]
      %v3879 = vld [vmem:[#allocation3 + $0xd0] sm:$0xff]
      %v3880 = vld [vmem:[#allocation3 + $0xd8] sm:$0xff]
      %v3881 = vld [vmem:[#allocation3 + $0xe0] sm:$0xff]
      %v3882 = vld [vmem:[#allocation3 + $0xe8] sm:$0xff]
      %v3883 = vld [vmem:[#allocation3 + $0xf0] sm:$0xff]
      %v3884 = vld [vmem:[#allocation3 + $0xf8] sm:$0xff]
      %v3885 = vld [vmem:[#allocation3 + $0x100] sm:$0xff]
      %v3886 = vld [vmem:[#allocation3 + $0x108] sm:$0xff]
      %v3887 = vld [vmem:[#allocation3 + $0x110] sm:$0xff]
      %v3888 = vld [vmem:[#allocation3 + $0x118] sm:$0xff]
      %v3889 = vld [vmem:[%s21] sm:$0xff]
      %3891 = vset.pattern.permute.xlu0 0
      %3892 = vperm.xlu0 %3891, %v3889
      %v3893 = vpop.permute.xlu0 %3892
      %v3896 = vsel %vm822, %v3852, 0
      %3898 = vmatprep.subr.mxu0 %v3884
      %3899 = vmatpush1.msra.mxu0 %v3883
      %3900 = vmatprep.subr.mxu0 %v3882
      %3901 = vmatpush1.msra.mxu0 %v3881
      %3902 = vmatprep.subr.mxu0 %v3880
      %3903 = vmatpush1.msra.mxu0 %v3879
      %3904 = vmatprep.subr.mxu0 %v3878
      %3905 = vmatpush1.msra.mxu0 %v3877
      %3906 = vmatprep.subr.mxu0 %v3876
      %3907 = vmatpush1.msra.mxu0 %v3875
      %3908 = vmatprep.subr.mxu0 %v3874
      %3909 = vmatpush1.msra.mxu0 %v3873
      %3910 = vmatprep.subr.mxu0 %v3872
      %3911 = vmatpush1.msra.mxu0 %v3871
      %3912 = vmatprep.subr.mxu0 %v3870
      %3913 = vmatpush1.msra.mxu0 %v3869
      %3914 = vmatprep.subr.mxu0 %v3868
      %3915 = vmatpush1.msra.mxu0 %v3867
      %3916 = vmatprep.subr.mxu0 %v3866
      %3917 = vmatpush1.msra.mxu0 %v3865
      %3918 = vmatprep.subr.mxu0 %v3864
      %3919 = vmatpush1.msra.mxu0 %v3863
      %3920 = vmatprep.subr.mxu0 %v3862
      %3921 = vmatpush1.msra.mxu0 %v3861
      %3922 = vmatprep.subr.mxu0 %v3860
      %3923 = vmatpush1.msra.mxu0 %v3859
      %3924 = vmatprep.subr.mxu0 %v3858
      %3925 = vmatpush1.msra.mxu0 %v3857
      %3926 = vmatprep.subr.mxu0 %v3856
      %3927 = vmatpush1.msra.mxu0 %v3855
      %3928 = vmatprep.subr.mxu0 %v3854
      %3929 = vmatpush1.msra.mxu0 %v3853
      %3930 = vmatprep.subr.mxu0 0.0
      %3931 = vmatpush2.msra.mxu0 0.0
      %3932 = vmatprep.subr.mxu0 0.0
      %3933 = vmatpush2.msra.mxu0 0.0
      %3934 = vmatprep.subr.mxu0 0.0
      %3935 = vmatpush2.msra.mxu0 0.0
      %3936 = vmatprep.subr.mxu0 0.0
      %3937 = vmatpush2.msra.mxu0 0.0
      %3938 = vmatprep.subr.mxu0 0.0
      %3939 = vmatpush2.msra.mxu0 0.0
      %3940 = vmatprep.subr.mxu0 0.0
      %3941 = vmatpush2.msra.mxu0 0.0
      %3942 = vmatprep.subr.mxu0 0.0
      %3943 = vmatpush2.msra.mxu0 0.0
      %3944 = vmatprep.subr.mxu0 0.0
      %3945 = vmatpush2.msra.mxu0 0.0
      %3946 = vmatprep.subr.mxu0 0.0
      %3947 = vmatpush2.msra.mxu0 0.0
      %3948 = vmatprep.subr.mxu0 0.0
      %3949 = vmatpush2.msra.mxu0 0.0
      %3950 = vmatprep.subr.mxu0 0.0
      %3951 = vmatpush2.msra.mxu0 0.0
      %3952 = vmatprep.subr.mxu0 0.0
      %3953 = vmatpush2.msra.mxu0 0.0
      %3954 = vmatprep.subr.mxu0 0.0
      %3955 = vmatpush2.msra.mxu0 0.0
      %3956 = vmatprep.subr.mxu0 0.0
      %3957 = vmatpush2.msra.mxu0 0.0
      %3958 = vmatprep.subr.mxu0 %v3888
      %3959 = vmatpush2.msra.mxu0 %v3887
      %3960 = vmatprep.subr.mxu0 %v3886
      %3961 = vmatpush2.msra.mxu0 %v3885
      %3962 = vmatprep.mubr.f32.mxu0 %v3896
      %3963 = vmatmul.mubr.f32.gmra.mxu0 %v3851
      %v3964 = vpop.f32.mrf.mxu0
      %v3965 = vadd.f32 %v3893, %v3964
      %v3966 = vpop.f32.mrf.mxu0
      %v3967 = vadd.f32 %v3893, %v3966
      %3968 = vdwg.mxu0
      %v3969 = vmax.f32 %v3965, 0.0
      %v3970 = vmax.f32 %v3967, 0.0
      %v3971 = vld [vmem:[%s22] sm:$0xff]
      %v3972 = vld [vmem:[%s23] sm:$0xff]
      %3974 = vset.pattern.permute.xlu0 0
      %3975 = vperm.xlu0 %3974, %v3972
      %v3976 = vpop.permute.xlu0 %3975
      %v3979 = vsel %vm1393, %v3971, 0
      %3981 = vmatprep.subr.mxu0 0.0
      %3982 = vmatpush1.msra.mxu0 0.0
      %3983 = vmatprep.subr.mxu0 0.0
      %3984 = vmatpush1.msra.mxu0 0.0
      %3985 = vmatprep.subr.mxu0 0.0
      %3986 = vmatpush1.msra.mxu0 0.0
      %3987 = vmatprep.subr.mxu0 0.0
      %3988 = vmatpush1.msra.mxu0 0.0
      %3989 = vmatprep.subr.mxu0 0.0
      %3990 = vmatpush1.msra.mxu0 0.0
      %3991 = vmatprep.subr.mxu0 0.0
      %3992 = vmatpush1.msra.mxu0 0.0
      %3993 = vmatprep.subr.mxu0 0.0
      %3994 = vmatpush1.msra.mxu0 0.0
      %3995 = vmatprep.subr.mxu0 0.0
      %3996 = vmatpush1.msra.mxu0 0.0
      %3997 = vmatprep.subr.mxu0 0.0
      %3998 = vmatpush1.msra.mxu0 0.0
      %3999 = vmatprep.subr.mxu0 0.0
      %4000 = vmatpush1.msra.mxu0 0.0
      %4001 = vmatprep.subr.mxu0 0.0
      %4002 = vmatpush1.msra.mxu0 0.0
      %4003 = vmatprep.subr.mxu0 0.0
      %4004 = vmatpush1.msra.mxu0 0.0
      %4005 = vmatprep.subr.mxu0 0.0
      %4006 = vmatpush1.msra.mxu0 0.0
      %4007 = vmatprep.subr.mxu0 0.0
      %4008 = vmatpush1.msra.mxu0 0.0
      %4009 = vmatprep.subr.mxu0 0.0
      %4010 = vmatpush1.msra.mxu0 0.0
      %4011 = vmatprep.subr.mxu0 %v3970
      %4012 = vmatpush1.msra.mxu0 %v3969
      %4013 = vmatprep.subr.mxu0 0.0
      %4014 = vmatpush2.msra.mxu0 0.0
      %4015 = vmatprep.subr.mxu0 0.0
      %4016 = vmatpush2.msra.mxu0 0.0
      %4017 = vmatprep.subr.mxu0 0.0
      %4018 = vmatpush2.msra.mxu0 0.0
      %4019 = vmatprep.subr.mxu0 0.0
      %4020 = vmatpush2.msra.mxu0 0.0
      %4021 = vmatprep.subr.mxu0 0.0
      %4022 = vmatpush2.msra.mxu0 0.0
      %4023 = vmatprep.subr.mxu0 0.0
      %4024 = vmatpush2.msra.mxu0 0.0
      %4025 = vmatprep.subr.mxu0 0.0
      %4026 = vmatpush2.msra.mxu0 0.0
      %4027 = vmatprep.subr.mxu0 0.0
      %4028 = vmatpush2.msra.mxu0 0.0
      %4029 = vmatprep.subr.mxu0 0.0
      %4030 = vmatpush2.msra.mxu0 0.0
      %4031 = vmatprep.subr.mxu0 0.0
      %4032 = vmatpush2.msra.mxu0 0.0
      %4033 = vmatprep.subr.mxu0 0.0
      %4034 = vmatpush2.msra.mxu0 0.0
      %4035 = vmatprep.subr.mxu0 0.0
      %4036 = vmatpush2.msra.mxu0 0.0
      %4037 = vmatprep.subr.mxu0 0.0
      %4038 = vmatpush2.msra.mxu0 0.0
      %4039 = vmatprep.subr.mxu0 0.0
      %4040 = vmatpush2.msra.mxu0 0.0
      %4041 = vmatprep.subr.mxu0 0.0
      %4042 = vmatpush2.msra.mxu0 0.0
      %4043 = vmatprep.subr.mxu0 0.0
      %4044 = vmatpush2.msra.mxu0 0.0
      %4045 = vmatprep.mubr.f32.mxu0 0.0
      %4046 = vmatmul.mubr.f32.gmra.mxu0 %v3979
      %v4047 = vpop.f32.mrf.mxu0
      %v4048 = vadd.f32 %v3976, %v4047
      %v4049 = vpop.f32.mrf.mxu0
      %v4050 = vadd.f32 %v3976, %v4049
      %4051 = vdwg.mxu0
      %4052 = vst [vmem:[%s737] sm:$0xff] %v4048
      %4053 = vst [vmem:[%s737 + $0x8] sm:$0xff] %v4050
      %p4054 = scmp.lt.s32.totalorder %s35, 1
      %s4055 = scalar_select %p4054, %s35, 1
      %s4056 = smul.addr %s4055, 2
      %s4057 = smul.addr %s4056, 8
      %s4058 = scalar_lea.vmem %s24, %s4057
      // Predicated region
      $region117: #{parametric_unet_forward.1} parent=115 // pred_check
        %p4059 = pneg %p562
      $region118: #{parametric_unet_forward.1} parent=115 // pred_check_branch
        %4061 = sbr.rel (%p4059) target = $region120
      $region119: #{parametric_unet_forward.1} parent=115 // pred_region
        _
      $region120: #{parametric_unet_forward.1} parent=115 // pred_fallthru
        _
    $region116: #{parametric_unet_forward.1} parent=5 // pred_fallthru
      _
    %p4062 = scmp.le.s32.totalorder 2, %s30
    // Predicated region
    $region121: #{parametric_unet_forward.1} parent=5 // pred_check
      %p4063 = pneg %p4062
    $region122: #{parametric_unet_forward.1} parent=5 // pred_check_branch
      %4065 = sbr.rel (%p4063) target = $region124
    $region123: #{parametric_unet_forward.1} parent=5 // pred_region
      %s4066 = ssub.s32 %s30, 2
      // Predicated region
      $region125: #{parametric_unet_forward.1} parent=123 // pred_check
        %p4067 = pneg %p568
      $region126: #{parametric_unet_forward.1} parent=123 // pred_check_branch
        %4069 = sbr.rel (%p4067) target = $region128
      $region127: #{parametric_unet_forward.1} parent=123 // pred_region
        %p4070 = scmp.lt.s32.totalorder %s36, 1
        %s4071 = scalar_select %p4070, %s36, 1
        %s4072 = smul.addr %s4071, 2
        %s4073 = smul.addr %s4072, 8
        %s4074 = scalar_lea.vmem %s24, %s4073
      $region128: #{parametric_unet_forward.1} parent=123 // pred_fallthru
        _
    $region124: #{parametric_unet_forward.1} parent=5 // pred_fallthru
      _
  $region6: #{parametric_unet_forward.1} parent=0 // loop_footer
    %s34 = sadd.s32 1, %s30
  $region7: #{parametric_unet_forward.1} parent=0 // loop_footer_branch
    %29 = sbr.rel target = $region3
  $region8: #{parametric_unet_forward.1} parent=0 // loop_exit
    _

</llo_original>
